<compile_context>
chip_gen: v7x
topology: tpu7x:2x2x1
jax: 0.10.0
libtpu: 0.0.40
codegen_flags: <defaults>
</compile_context>

<pallas_src>
import functools

import jax
import jax.numpy as jnp
from jax.experimental import pallas as pl
from jax.experimental.pallas import tpu as pltpu


# ---------------------------------------------------------------------------
# Pallas kernels
# ---------------------------------------------------------------------------
def _conv_pool_kernel(p_ref, w_ref, b_ref, o_ref, *, num_taps):
    """conv(as matmul) + bias + ReLU + 2x2/stride-2 maxpool.

    p_ref: (T, M, K) bf16 im2col patches, one slice per pool tap (M = N*Hp*Wp)
    w_ref: (K, Cout) bf16,  b_ref: (1, Cout) f32,  o_ref: (M, Cout)
    relu(max_t(p_t @ w) + b) == MaxPool2d(2,2)(relu(conv(x)))  — bias/ReLU are
    hoisted out of the tap loop (monotone), so only the raw tap-max is looped.
    """
    w = w_ref[...]
    acc = jnp.dot(p_ref[0], w, preferred_element_type=jnp.float32)
    for t in range(1, num_taps):                      # static unroll (4 taps)
        acc = jnp.maximum(
            acc, jnp.dot(p_ref[t], w, preferred_element_type=jnp.float32))
    o_ref[...] = jnp.maximum(acc + b_ref[...], 0.0).astype(o_ref.dtype)


def _tail_kernel(p2_ref, w2_ref, b2_ref, w3_ref, b3_ref, wf1_ref, bf1_ref,
                 wc_ref, bc_ref, o_ref, *, num_taps, n_batch, n_pos):
    """Fused: conv2+bias+ReLU+pool -> conv3+ReLU -> fc1+ReLU -> collapsed affine.

    p2_ref : (T, n_pos*n_batch, 400) bf16 conv2 patches; rows ordered
             (spatial position, image) so conv3 consumes contiguous row blocks
             and the (50,32)->(N,800) reshape is never materialized.
    w3_ref : (n_pos, 32, 64) bf16 conv3 weight split per spatial tap.
    wc_ref : (128, 128) bf16 — offline-collapsed
             fc128^8·fc2·fc256^16·fc5·fc128·fc12810, zero-padded from (128,10)
             for a lane-dense store.  bc_ref: (1, 128) f32 folded bias.
    """
    # conv2 + bias + ReLU + 2x2 maxpool (tap-max)
    w2 = w2_ref[...]
    acc = jnp.dot(p2_ref[0], w2, preferred_element_type=jnp.float32)
    for t in range(1, num_taps):
        acc = jnp.maximum(
            acc, jnp.dot(p2_ref[t], w2, preferred_element_type=jnp.float32))
    a2 = jnp.maximum(acc + b2_ref[...], 0.0).astype(jnp.bfloat16)  # (n_pos*NB, 32)

    # conv3: 5x5 kernel on a 5x5 input -> one output position; accumulate the
    # contribution of each spatial tap with a small matmul on a contiguous
    # row block of a2 (rows are (spatial, image)-ordered).
    acc3 = jnp.dot(a2[0:n_batch, :], w3_ref[0],
                   preferred_element_type=jnp.float32)
    for s in range(1, n_pos):                         # static unroll (25)
        acc3 = acc3 + jnp.dot(a2[s * n_batch:(s + 1) * n_batch, :], w3_ref[s],
                              preferred_element_type=jnp.float32)
    a3 = jnp.maximum(acc3 + b3_ref[...], 0.0).astype(jnp.bfloat16)  # (NB, 64)

    # fc1 + ReLU
    h = jnp.dot(a3, wf1_ref[...], preferred_element_type=jnp.float32)
    h = jnp.maximum(h + bf1_ref[...], 0.0).astype(jnp.bfloat16)     # (NB, 128)

    # collapsed affine trunk -> logits, stored lane-dense (128 wide)
    out = jnp.dot(h, wc_ref[...], preferred_element_type=jnp.float32)
    o_ref[...] = (out + bc_ref[...]).astype(o_ref.dtype)


# ---------------------------------------------------------------------------
# XLA-side glue: pool-tap-grouped im2col (cheap at these sizes)
# ---------------------------------------------------------------------------
def _im2col_pool_taps(x, ksize, order):
    """x: (N,H,W,C) -> (4, M, k*k*C) patches grouped by 2x2-pool tap.

    order='nhw': rows ordered (image, p, q); order='hwn': rows ordered (p, q, image).
    """
    n, h, w, c = x.shape
    hp, wp = (h - ksize + 1) // 2, (w - ksize + 1) // 2
    kk = ksize * ksize * c
    cols = [x[:, i:i + 2 * hp, j:j + 2 * wp, :]
            for i in range(ksize) for j in range(ksize)]      # 25 slices
    p = jnp.stack(cols, axis=3)                               # (N,2hp,2wp,k*k,C)
    p = p.reshape(n, hp, 2, wp, 2, kk)
    if order == "nhw":
        p = p.transpose(2, 4, 0, 1, 3, 5)                     # (di,dj,N,hp,wp,K)
    else:
        p = p.transpose(2, 4, 1, 3, 0, 5)                     # (di,dj,hp,wp,N,K)
    return p.reshape(4, n * hp * wp, kk)


# ---------------------------------------------------------------------------
# Kernel call wrappers
# ---------------------------------------------------------------------------
def conv1_pool(x_nhwc, w1, b1):
    """MaxPool2d(2,2)(relu(conv1(x))) as (N, 14, 14, 16) bf16."""
    n, h, _, _ = x_nhwc.shape
    hp = (h - 5 + 1) // 2
    patches = _im2col_pool_taps(x_nhwc, 5, "nhw")             # (4, N*hp*hp, 75)
    _, m, k = patches.shape
    cout = w1.shape[1]
    # NOTE: output is only 16 lanes wide (not lane-dense) but is 12.5 KiB of
    # bf16 — negligible store traffic; conv2 onward never touches HBM again.
    out = pl.pallas_call(
        functools.partial(_conv_pool_kernel, num_taps=4),
        out_shape=jax.ShapeDtypeStruct((m, cout), jnp.bfloat16),
        grid=(1,),
        in_specs=[
            pl.BlockSpec((4, m, k), lambda i: (0, 0, 0)),
            pl.BlockSpec((k, cout), lambda i: (0, 0)),
            pl.BlockSpec((1, cout), lambda i: (0, 0)),
        ],
        out_specs=pl.BlockSpec((m, cout), lambda i: (0, 0)),
        compiler_params=pltpu.CompilerParams(dimension_semantics=("arbitrary",)),
    )(patches, w1, b1)
    return out.reshape(n, hp, hp, cout)


def conv2_to_logits(a1_nhwc, prep):
    """Fused conv2(+pool) / conv3 / fc1 / collapsed-affine head -> (N, 10)."""
    n = a1_nhwc.shape[0]
    patches2 = _im2col_pool_taps(a1_nhwc, 5, "hwn")           # (4, 25*N, 400)
    _, m2, k2 = patches2.shape
    n_pos = m2 // n
    out = pl.pallas_call(
        functools.partial(_tail_kernel, num_taps=4, n_batch=n, n_pos=n_pos),
        out_shape=jax.ShapeDtypeStruct((n, 128), jnp.float32),
        grid=(1,),
        in_specs=[
            pl.BlockSpec((4, m2, k2), lambda i: (0, 0, 0)),   # conv2 patches
            pl.BlockSpec((k2, 32), lambda i: (0, 0)),         # w2
            pl.BlockSpec((1, 32), lambda i: (0, 0)),          # b2
            pl.BlockSpec((n_pos, 32, 64), lambda i: (0, 0, 0)),  # w3 (per tap)
            pl.BlockSpec((1, 64), lambda i: (0, 0)),          # b3
            pl.BlockSpec((64, 128), lambda i: (0, 0)),        # fc1 W
            pl.BlockSpec((1, 128), lambda i: (0, 0)),         # fc1 b
            pl.BlockSpec((128, 128), lambda i: (0, 0)),       # collapsed W (padded)
            pl.BlockSpec((1, 128), lambda i: (0, 0)),         # collapsed b (padded)
        ],
        out_specs=pl.BlockSpec((n, 128), lambda i: (0, 0)),
        compiler_params=pltpu.CompilerParams(dimension_semantics=("arbitrary",)),
    )(patches2, prep["w2"], prep["b2"], prep["w3"], prep["b3"],
      prep["wf1"], prep["bf1"], prep["wc"], prep["bc"])
    return out[:, :10]                                        # lane-dense store; slice outside


# ---------------------------------------------------------------------------
# Parameter init (deterministic, PyTorch-default-style uniform bounds)
# ---------------------------------------------------------------------------
def _init_linear(key, fan_in, fan_out):
    k1, k2 = jax.random.split(key)
    bound = 1.0 / (fan_in ** 0.5)
    w = jax.random.uniform(k1, (fan_in, fan_out), jnp.float32, -bound, bound)
    b = jax.random.uniform(k2, (fan_out,), jnp.float32, -bound, bound)
    return w, b


def _init_conv(key, cin, cout, k):
    k1, k2 = jax.random.split(key)
    fan_in = cin * k * k
    bound = 1.0 / (fan_in ** 0.5)
    w = jax.random.uniform(k1, (cout, cin, k, k), jnp.float32, -bound, bound)
    b = jax.random.uniform(k2, (cout,), jnp.float32, -bound, bound)
    return w, b


def init_params(key):
    keys = jax.random.split(key, 9)
    return {
        "conv1": _init_conv(keys[0], 3, 16, 5),
        "conv2": _init_conv(keys[1], 16, 32, 5),
        "conv3": _init_conv(keys[2], 32, 64, 5),
        "fc1": _init_linear(keys[3], 64, 128),
        "fc2": _init_linear(keys[4], 128, 256),
        "fc5": _init_linear(keys[5], 256, 128),
        "fc128": _init_linear(keys[6], 128, 128),
        "fc256": _init_linear(keys[7], 256, 256),
        "fc12810": _init_linear(keys[8], 128, 10),
    }


def prepare_params(params):
    """One-time repack into the kernel-friendly layout (done once, outside jit)."""
    def conv_mat(w, b):
        cout, cin, kh, kw = w.shape
        # im2col flat column order is (kh, kw, cin) -> transpose (2,3,1,0)
        w_mat = jnp.transpose(w, (2, 3, 1, 0)).reshape(kh * kw * cin, cout)
        return w_mat, b.reshape(1, cout)

    w1, b1 = conv_mat(*params["conv1"])               # (75, 16)
    w2, b2 = conv_mat(*params["conv2"])               # (400, 32)
    w3, b3 = conv_mat(*params["conv3"])               # (800, 64)
    w3_stack = w3.reshape(25, 32, 64)                 # per-spatial-tap (cin, cout)

    w_fc1, b_fc1 = params["fc1"]                      # (64, 128), (128,)

    # Collapse the purely-affine trunk (everything after relu(fc1)) in fp32:
    # fc128 x8 ; fc2 ; fc256 x16 ; fc5 ; fc128 ; fc12810  ->  (128, 10) + (10,)
    seq = ([params["fc128"]] * 8 + [params["fc2"]] + [params["fc256"]] * 16
           + [params["fc5"]] + [params["fc128"]] + [params["fc12810"]])
    Wc, bc = seq[0]
    for (Wl, bl) in seq[1:]:
        bc = bc @ Wl + bl
        Wc = Wc @ Wl
    # zero-pad to 128 output lanes for a lane-dense store (sliced to 10 outside)
    Wc_p = jnp.zeros((128, 128), jnp.float32).at[:, :10].set(Wc)
    bc_p = jnp.zeros((1, 128), jnp.float32).at[0, :10].set(bc)

    bf = jnp.bfloat16
    return {
        "w1": w1.astype(bf), "b1": b1,
        "w2": w2.astype(bf), "b2": b2,
        "w3": w3_stack.astype(bf), "b3": b3,
        "wf1": w_fc1.astype(bf), "bf1": b_fc1.reshape(1, 128),
        "wc": Wc_p.astype(bf), "bc": bc_p,
    }


# ---------------------------------------------------------------------------
# Net.forward
# ---------------------------------------------------------------------------
def net_forward(prepared, x_nchw):
    # TODO(synk): nn.Dropout(p=0.01) sites are identity (eval-mode semantics);
    # training-mode stochastic dropout would use pltpu.prng_random_bits in-kernel.
    x = jnp.transpose(x_nchw, (0, 2, 3, 1)).astype(jnp.bfloat16)   # NCHW -> NHWC
    a1 = conv1_pool(x, prepared["w1"], prepared["b1"])             # (N,14,14,16)
    return conv2_to_logits(a1, prepared)                           # (N, 10)


if __name__ == "__main__":
    key = jax.random.PRNGKey(0)
    pkey, xkey = jax.random.split(key)
    params = init_params(pkey)
    prepared = prepare_params(params)
    # 32x32 spatial input so conv3's output is 1x1 and view(-1, 64) is clean
    x = jax.random.normal(xkey, (2, 3, 32, 32), jnp.float32)

    out = jax.jit(net_forward)(prepared, x)
    out = jax.block_until_ready(out)
    assert out.shape == (2, 10) and out.dtype == jnp.float32
    print("KERNEL_OK")
</pallas_src>

<mosaic_0001>
module attributes {stable_mosaic.version = 11 : i64} {
  func.func @_conv_pool_kernel(%arg0: i32, %arg1: memref<4x392x75xbf16, #tpu.memory_space<vmem>>, %arg2: memref<75x16xbf16, #tpu.memory_space<vmem>>, %arg3: memref<1x16xf32, #tpu.memory_space<vmem>>, %arg4: memref<392x16xbf16, #tpu.memory_space<vmem>>) attributes {dimension_semantics = [#tpu.dimension_semantics<arbitrary>], iteration_bounds = array<i64: 1>, scalar_prefetch = 0 : i64, scratch_operands = 0 : i64, tpu.core_type = #tpu.core_type<tc>, window_params = [{pipeline_mode = #tpu.pipeline_mode<synchronous>, transform_indices = @transform_0, window_bounds = array<i64: 4, 392, 75>}, {pipeline_mode = #tpu.pipeline_mode<synchronous>, transform_indices = @transform_1, window_bounds = array<i64: 75, 16>}, {pipeline_mode = #tpu.pipeline_mode<synchronous>, transform_indices = @transform_2, window_bounds = array<i64: 1, 16>}, {pipeline_mode = #tpu.pipeline_mode<synchronous>, transform_indices = @transform_3, window_bounds = array<i64: 392, 16>}]} {
    %c0 = arith.constant 0 : index
    %c0_0 = arith.constant 0 : index
    %0 = vector.load %arg2[%c0, %c0_0] : memref<75x16xbf16, #tpu.memory_space<vmem>>, vector<75x16xbf16>
    %c0_1 = arith.constant 0 : index
    %c0_2 = arith.constant 0 : index
    %c0_3 = arith.constant 0 : index
    %1 = vector.load %arg1[%c0_1, %c0_2, %c0_3] : memref<4x392x75xbf16, #tpu.memory_space<vmem>>, vector<1x392x75xbf16>
    %2 = vector.shape_cast %1 : vector<1x392x75xbf16> to vector<392x75xbf16>
    %cst = arith.constant dense<0.000000e+00> : vector<392x16xf32>
    %3 = tpu.matmul %2, %0, %cst {dimension_numbers = #tpu.dot_dimension_numbers<[1], [0], [0], [1], [0, 0, 1, 1], [], []>} : vector<392x75xbf16>, vector<75x16xbf16>, vector<392x16xf32> -> vector<392x16xf32>
    %c1 = arith.constant 1 : index
    %c0_4 = arith.constant 0 : index
    %c0_5 = arith.constant 0 : index
    %4 = vector.load %arg1[%c1, %c0_4, %c0_5] : memref<4x392x75xbf16, #tpu.memory_space<vmem>>, vector<1x392x75xbf16>
    %5 = vector.shape_cast %4 : vector<1x392x75xbf16> to vector<392x75xbf16>
    %cst_6 = arith.constant dense<0.000000e+00> : vector<392x16xf32>
    %6 = tpu.matmul %5, %0, %cst_6 {dimension_numbers = #tpu.dot_dimension_numbers<[1], [0], [0], [1], [0, 0, 1, 1], [], []>} : vector<392x75xbf16>, vector<75x16xbf16>, vector<392x16xf32> -> vector<392x16xf32>
    %7 = arith.maximumf %3, %6 : vector<392x16xf32>
    %c2 = arith.constant 2 : index
    %c0_7 = arith.constant 0 : index
    %c0_8 = arith.constant 0 : index
    %8 = vector.load %arg1[%c2, %c0_7, %c0_8] : memref<4x392x75xbf16, #tpu.memory_space<vmem>>, vector<1x392x75xbf16>
    %9 = vector.shape_cast %8 : vector<1x392x75xbf16> to vector<392x75xbf16>
    %cst_9 = arith.constant dense<0.000000e+00> : vector<392x16xf32>
    %10 = tpu.matmul %9, %0, %cst_9 {dimension_numbers = #tpu.dot_dimension_numbers<[1], [0], [0], [1], [0, 0, 1, 1], [], []>} : vector<392x75xbf16>, vector<75x16xbf16>, vector<392x16xf32> -> vector<392x16xf32>
    %11 = arith.maximumf %7, %10 : vector<392x16xf32>
    %c3 = arith.constant 3 : index
    %c0_10 = arith.constant 0 : index
    %c0_11 = arith.constant 0 : index
    %12 = vector.load %arg1[%c3, %c0_10, %c0_11] : memref<4x392x75xbf16, #tpu.memory_space<vmem>>, vector<1x392x75xbf16>
    %13 = vector.shape_cast %12 : vector<1x392x75xbf16> to vector<392x75xbf16>
    %cst_12 = arith.constant dense<0.000000e+00> : vector<392x16xf32>
    %14 = tpu.matmul %13, %0, %cst_12 {dimension_numbers = #tpu.dot_dimension_numbers<[1], [0], [0], [1], [0, 0, 1, 1], [], []>} : vector<392x75xbf16>, vector<75x16xbf16>, vector<392x16xf32> -> vector<392x16xf32>
    %15 = arith.maximumf %11, %14 : vector<392x16xf32>
    %c0_13 = arith.constant 0 : index
    %c0_14 = arith.constant 0 : index
    %16 = vector.load %arg3[%c0_13, %c0_14] : memref<1x16xf32, #tpu.memory_space<vmem>>, vector<1x16xf32>
    %17 = vector.broadcast %16 : vector<1x16xf32> to vector<392x16xf32>
    %18 = arith.addf %15, %17 : vector<392x16xf32>
    %cst_15 = arith.constant 0.000000e+00 : f32
    %19 = vector.broadcast %cst_15 : f32 to vector<392x16xf32>
    %20 = arith.maximumf %18, %19 : vector<392x16xf32>
    %21 = arith.truncf %20 : vector<392x16xf32> to vector<392x16xbf16>
    %c0_16 = arith.constant 0 : index
    %c0_17 = arith.constant 0 : index
    %22 = vector.load %arg4[%c0_16, %c0_17] : memref<392x16xbf16, #tpu.memory_space<vmem>>, vector<392x16xbf16>
    tpu.vector_store %arg4[%c0_16, %c0_17], %21 {strides = array<i32>} : memref<392x16xbf16, #tpu.memory_space<vmem>>, vector<392x16xbf16>,
    return
  }
  func.func @transform_0(%arg0: i32) -> (i32, i32, i32) {
    %c0_i32 = arith.constant 0 : i32
    %c0_i32_0 = arith.constant 0 : i32
    %c0_i32_1 = arith.constant 0 : i32
    %c0_i32_2 = arith.constant 0 : i32
    return %c0_i32, %c0_i32_0, %c0_i32_1 : i32, i32, i32
  }
  func.func @transform_1(%arg0: i32) -> (i32, i32) {
    %c0_i32 = arith.constant 0 : i32
    %c0_i32_0 = arith.constant 0 : i32
    %c0_i32_1 = arith.constant 0 : i32
    return %c0_i32, %c0_i32_0 : i32, i32
  }
  func.func @transform_2(%arg0: i32) -> (i32, i32) {
    %c0_i32 = arith.constant 0 : i32
    %c0_i32_0 = arith.constant 0 : i32
    %c0_i32_1 = arith.constant 0 : i32
    return %c0_i32, %c0_i32_0 : i32, i32
  }
  func.func @transform_3(%arg0: i32) -> (i32, i32) {
    %c0_i32 = arith.constant 0 : i32
    %c0_i32_0 = arith.constant 0 : i32
    %c0_i32_1 = arith.constant 0 : i32
    return %c0_i32, %c0_i32_0 : i32, i32
  }
}

module attributes {stable_mosaic.version = 11 : i64} {
  func.func @_tail_kernel(%arg0: i32, %arg1: memref<4x50x400xbf16, #tpu.memory_space<vmem>>, %arg2: memref<400x32xbf16, #tpu.memory_space<vmem>>, %arg3: memref<1x32xf32, #tpu.memory_space<vmem>>, %arg4: memref<25x32x64xbf16, #tpu.memory_space<vmem>>, %arg5: memref<1x64xf32, #tpu.memory_space<vmem>>, %arg6: memref<64x128xbf16, #tpu.memory_space<vmem>>, %arg7: memref<1x128xf32, #tpu.memory_space<vmem>>, %arg8: memref<128x128xbf16, #tpu.memory_space<vmem>>, %arg9: memref<1x128xf32, #tpu.memory_space<vmem>>, %arg10: memref<2x128xf32, #tpu.memory_space<vmem>>) attributes {dimension_semantics = [#tpu.dimension_semantics<arbitrary>], iteration_bounds = array<i64: 1>, scalar_prefetch = 0 : i64, scratch_operands = 0 : i64, tpu.core_type = #tpu.core_type<tc>, window_params = [{pipeline_mode = #tpu.pipeline_mode<synchronous>, transform_indices = @transform_0, window_bounds = array<i64: 4, 50, 400>}, {pipeline_mode = #tpu.pipeline_mode<synchronous>, transform_indices = @transform_1, window_bounds = array<i64: 400, 32>}, {pipeline_mode = #tpu.pipeline_mode<synchronous>, transform_indices = @transform_2, window_bounds = array<i64: 1, 32>}, {pipeline_mode = #tpu.pipeline_mode<synchronous>, transform_indices = @transform_3, window_bounds = array<i64: 25, 32, 64>}, {pipeline_mode = #tpu.pipeline_mode<synchronous>, transform_indices = @transform_4, window_bounds = array<i64: 1, 64>}, {pipeline_mode = #tpu.pipeline_mode<synchronous>, transform_indices = @transform_5, window_bounds = array<i64: 64, 128>}, {pipeline_mode = #tpu.pipeline_mode<synchronous>, transform_indices = @transform_6, window_bounds = array<i64: 1, 128>}, {pipeline_mode = #tpu.pipeline_mode<synchronous>, transform_indices = @transform_7, window_bounds = array<i64: 128, 128>}, {pipeline_mode = #tpu.pipeline_mode<synchronous>, transform_indices = @transform_8, window_bounds = array<i64: 1, 128>}, {pipeline_mode = #tpu.pipeline_mode<synchronous>, transform_indices = @transform_9, window_bounds = array<i64: 2, 128>}]} {
    %c0 = arith.constant 0 : index
    %c0_0 = arith.constant 0 : index
    %0 = vector.load %arg2[%c0, %c0_0] : memref<400x32xbf16, #tpu.memory_space<vmem>>, vector<400x32xbf16>
    %c0_1 = arith.constant 0 : index
    %c0_2 = arith.constant 0 : index
    %c0_3 = arith.constant 0 : index
    %1 = vector.load %arg1[%c0_1, %c0_2, %c0_3] : memref<4x50x400xbf16, #tpu.memory_space<vmem>>, vector<1x50x400xbf16>
    %2 = vector.shape_cast %1 : vector<1x50x400xbf16> to vector<50x400xbf16>
    %cst = arith.constant dense<0.000000e+00> : vector<50x32xf32>
    %3 = tpu.matmul %2, %0, %cst {dimension_numbers = #tpu.dot_dimension_numbers<[1], [0], [0], [1], [0, 0, 1, 1], [], []>} : vector<50x400xbf16>, vector<400x32xbf16>, vector<50x32xf32> -> vector<50x32xf32>
    %c1 = arith.constant 1 : index
    %c0_4 = arith.constant 0 : index
    %c0_5 = arith.constant 0 : index
    %4 = vector.load %arg1[%c1, %c0_4, %c0_5] : memref<4x50x400xbf16, #tpu.memory_space<vmem>>, vector<1x50x400xbf16>
    %5 = vector.shape_cast %4 : vector<1x50x400xbf16> to vector<50x400xbf16>
    %cst_6 = arith.constant dense<0.000000e+00> : vector<50x32xf32>
    %6 = tpu.matmul %5, %0, %cst_6 {dimension_numbers = #tpu.dot_dimension_numbers<[1], [0], [0], [1], [0, 0, 1, 1], [], []>} : vector<50x400xbf16>, vector<400x32xbf16>, vector<50x32xf32> -> vector<50x32xf32>
    %7 = arith.maximumf %3, %6 : vector<50x32xf32>
    %c2 = arith.constant 2 : index
    %c0_7 = arith.constant 0 : index
    %c0_8 = arith.constant 0 : index
    %8 = vector.load %arg1[%c2, %c0_7, %c0_8] : memref<4x50x400xbf16, #tpu.memory_space<vmem>>, vector<1x50x400xbf16>
    %9 = vector.shape_cast %8 : vector<1x50x400xbf16> to vector<50x400xbf16>
    %cst_9 = arith.constant dense<0.000000e+00> : vector<50x32xf32>
    %10 = tpu.matmul %9, %0, %cst_9 {dimension_numbers = #tpu.dot_dimension_numbers<[1], [0], [0], [1], [0, 0, 1, 1], [], []>} : vector<50x400xbf16>, vector<400x32xbf16>, vector<50x32xf32> -> vector<50x32xf32>
    %11 = arith.maximumf %7, %10 : vector<50x32xf32>
    %c3 = arith.constant 3 : index
    %c0_10 = arith.constant 0 : index
    %c0_11 = arith.constant 0 : index
    %12 = vector.load %arg1[%c3, %c0_10, %c0_11] : memref<4x50x400xbf16, #tpu.memory_space<vmem>>, vector<1x50x400xbf16>
    %13 = vector.shape_cast %12 : vector<1x50x400xbf16> to vector<50x400xbf16>
    %cst_12 = arith.constant dense<0.000000e+00> : vector<50x32xf32>
    %14 = tpu.matmul %13, %0, %cst_12 {dimension_numbers = #tpu.dot_dimension_numbers<[1], [0], [0], [1], [0, 0, 1, 1], [], []>} : vector<50x400xbf16>, vector<400x32xbf16>, vector<50x32xf32> -> vector<50x32xf32>
    %15 = arith.maximumf %11, %14 : vector<50x32xf32>
    %c0_13 = arith.constant 0 : index
    %c0_14 = arith.constant 0 : index
    %16 = vector.load %arg3[%c0_13, %c0_14] : memref<1x32xf32, #tpu.memory_space<vmem>>, vector<1x32xf32>
    %17 = vector.broadcast %16 : vector<1x32xf32> to vector<50x32xf32>
    %18 = arith.addf %15, %17 : vector<50x32xf32>
    %cst_15 = arith.constant 0.000000e+00 : f32
    %19 = vector.broadcast %cst_15 : f32 to vector<50x32xf32>
    %20 = arith.maximumf %18, %19 : vector<50x32xf32>
    %21 = arith.truncf %20 : vector<50x32xf32> to vector<50x32xbf16>
    %22 = vector.extract_strided_slice %21 {offsets = [0, 0], sizes = [2, 32], strides = [1, 1]} : vector<50x32xbf16> to vector<2x32xbf16>
    %c0_16 = arith.constant 0 : index
    %c0_17 = arith.constant 0 : index
    %c0_18 = arith.constant 0 : index
    %23 = vector.load %arg4[%c0_16, %c0_17, %c0_18] : memref<25x32x64xbf16, #tpu.memory_space<vmem>>, vector<1x32x64xbf16>
    %24 = vector.shape_cast %23 : vector<1x32x64xbf16> to vector<32x64xbf16>
    %cst_19 = arith.constant dense<0.000000e+00> : vector<2x64xf32>
    %25 = tpu.matmul %22, %24, %cst_19 {dimension_numbers = #tpu.dot_dimension_numbers<[1], [0], [0], [1], [0, 0, 1, 1], [], []>} : vector<2x32xbf16>, vector<32x64xbf16>, vector<2x64xf32> -> vector<2x64xf32>
    %26 = vector.extract_strided_slice %21 {offsets = [2, 0], sizes = [2, 32], strides = [1, 1]} : vector<50x32xbf16> to vector<2x32xbf16>
    %c1_20 = arith.constant 1 : index
    %c0_21 = arith.constant 0 : index
    %c0_22 = arith.constant 0 : index
    %27 = vector.load %arg4[%c1_20, %c0_21, %c0_22] : memref<25x32x64xbf16, #tpu.memory_space<vmem>>, vector<1x32x64xbf16>
    %28 = vector.shape_cast %27 : vector<1x32x64xbf16> to vector<32x64xbf16>
    %cst_23 = arith.constant dense<0.000000e+00> : vector<2x64xf32>
    %29 = tpu.matmul %26, %28, %cst_23 {dimension_numbers = #tpu.dot_dimension_numbers<[1], [0], [0], [1], [0, 0, 1, 1], [], []>} : vector<2x32xbf16>, vector<32x64xbf16>, vector<2x64xf32> -> vector<2x64xf32>
    %30 = arith.addf %25, %29 : vector<2x64xf32>
    %31 = vector.extract_strided_slice %21 {offsets = [4, 0], sizes = [2, 32], strides = [1, 1]} : vector<50x32xbf16> to vector<2x32xbf16>
    %c2_24 = arith.constant 2 : index
    %c0_25 = arith.constant 0 : index
    %c0_26 = arith.constant 0 : index
    %32 = vector.load %arg4[%c2_24, %c0_25, %c0_26] : memref<25x32x64xbf16, #tpu.memory_space<vmem>>, vector<1x32x64xbf16>
    %33 = vector.shape_cast %32 : vector<1x32x64xbf16> to vector<32x64xbf16>
    %cst_27 = arith.constant dense<0.000000e+00> : vector<2x64xf32>
    %34 = tpu.matmul %31, %33, %cst_27 {dimension_numbers = #tpu.dot_dimension_numbers<[1], [0], [0], [1], [0, 0, 1, 1], [], []>} : vector<2x32xbf16>, vector<32x64xbf16>, vector<2x64xf32> -> vector<2x64xf32>
    %35 = arith.addf %30, %34 : vector<2x64xf32>
    %36 = vector.extract_strided_slice %21 {offsets = [6, 0], sizes = [2, 32], strides = [1, 1]} : vector<50x32xbf16> to vector<2x32xbf16>
    %c3_28 = arith.constant 3 : index
    %c0_29 = arith.constant 0 : index
    %c0_30 = arith.constant 0 : index
    %37 = vector.load %arg4[%c3_28, %c0_29, %c0_30] : memref<25x32x64xbf16, #tpu.memory_space<vmem>>, vector<1x32x64xbf16>
    %38 = vector.shape_cast %37 : vector<1x32x64xbf16> to vector<32x64xbf16>
    %cst_31 = arith.constant dense<0.000000e+00> : vector<2x64xf32>
    %39 = tpu.matmul %36, %38, %cst_31 {dimension_numbers = #tpu.dot_dimension_numbers<[1], [0], [0], [1], [0, 0, 1, 1], [], []>} : vector<2x32xbf16>, vector<32x64xbf16>, vector<2x64xf32> -> vector<2x64xf32>
    %40 = arith.addf %35, %39 : vector<2x64xf32>
    %41 = vector.extract_strided_slice %21 {offsets = [8, 0], sizes = [2, 32], strides = [1, 1]} : vector<50x32xbf16> to vector<2x32xbf16>
    %c4 = arith.constant 4 : index
    %c0_32 = arith.constant 0 : index
    %c0_33 = arith.constant 0 : index
    %42 = vector.load %arg4[%c4, %c0_32, %c0_33] : memref<25x32x64xbf16, #tpu.memory_space<vmem>>, vector<1x32x64xbf16>
    %43 = vector.shape_cast %42 : vector<1x32x64xbf16> to vector<32x64xbf16>
    %cst_34 = arith.constant dense<0.000000e+00> : vector<2x64xf32>
    %44 = tpu.matmul %41, %43, %cst_34 {dimension_numbers = #tpu.dot_dimension_numbers<[1], [0], [0], [1], [0, 0, 1, 1], [], []>} : vector<2x32xbf16>, vector<32x64xbf16>, vector<2x64xf32> -> vector<2x64xf32>
    %45 = arith.addf %40, %44 : vector<2x64xf32>
    %46 = vector.extract_strided_slice %21 {offsets = [10, 0], sizes = [2, 32], strides = [1, 1]} : vector<50x32xbf16> to vector<2x32xbf16>
    %c5 = arith.constant 5 : index
    %c0_35 = arith.constant 0 : index
    %c0_36 = arith.constant 0 : index
    %47 = vector.load %arg4[%c5, %c0_35, %c0_36] : memref<25x32x64xbf16, #tpu.memory_space<vmem>>, vector<1x32x64xbf16>
    %48 = vector.shape_cast %47 : vector<1x32x64xbf16> to vector<32x64xbf16>
    %cst_37 = arith.constant dense<0.000000e+00> : vector<2x64xf32>
    %49 = tpu.matmul %46, %48, %cst_37 {dimension_numbers = #tpu.dot_dimension_numbers<[1], [0], [0], [1], [0, 0, 1, 1], [], []>} : vector<2x32xbf16>, vector<32x64xbf16>, vector<2x64xf32> -> vector<2x64xf32>
    %50 = arith.addf %45, %49 : vector<2x64xf32>
    %51 = vector.extract_strided_slice %21 {offsets = [12, 0], sizes = [2, 32], strides = [1, 1]} : vector<50x32xbf16> to vector<2x32xbf16>
    %c6 = arith.constant 6 : index
    %c0_38 = arith.constant 0 : index
    %c0_39 = arith.constant 0 : index
    %52 = vector.load %arg4[%c6, %c0_38, %c0_39] : memref<25x32x64xbf16, #tpu.memory_space<vmem>>, vector<1x32x64xbf16>
    %53 = vector.shape_cast %52 : vector<1x32x64xbf16> to vector<32x64xbf16>
    %cst_40 = arith.constant dense<0.000000e+00> : vector<2x64xf32>
    %54 = tpu.matmul %51, %53, %cst_40 {dimension_numbers = #tpu.dot_dimension_numbers<[1], [0], [0], [1], [0, 0, 1, 1], [], []>} : vector<2x32xbf16>, vector<32x64xbf16>, vector<2x64xf32> -> vector<2x64xf32>
    %55 = arith.addf %50, %54 : vector<2x64xf32>
    %56 = vector.extract_strided_slice %21 {offsets = [14, 0], sizes = [2, 32], strides = [1, 1]} : vector<50x32xbf16> to vector<2x32xbf16>
    %c7 = arith.constant 7 : index
    %c0_41 = arith.constant 0 : index
    %c0_42 = arith.constant 0 : index
    %57 = vector.load %arg4[%c7, %c0_41, %c0_42] : memref<25x32x64xbf16, #tpu.memory_space<vmem>>, vector<1x32x64xbf16>
    %58 = vector.shape_cast %57 : vector<1x32x64xbf16> to vector<32x64xbf16>
    %cst_43 = arith.constant dense<0.000000e+00> : vector<2x64xf32>
    %59 = tpu.matmul %56, %58, %cst_43 {dimension_numbers = #tpu.dot_dimension_numbers<[1], [0], [0], [1], [0, 0, 1, 1], [], []>} : vector<2x32xbf16>, vector<32x64xbf16>, vector<2x64xf32> -> vector<2x64xf32>
    %60 = arith.addf %55, %59 : vector<2x64xf32>
    %61 = vector.extract_strided_slice %21 {offsets = [16, 0], sizes = [2, 32], strides = [1, 1]} : vector<50x32xbf16> to vector<2x32xbf16>
    %c8 = arith.constant 8 : index
    %c0_44 = arith.constant 0 : index
    %c0_45 = arith.constant 0 : index
    %62 = vector.load %arg4[%c8, %c0_44, %c0_45] : memref<25x32x64xbf16, #tpu.memory_space<vmem>>, vector<1x32x64xbf16>
    %63 = vector.shape_cast %62 : vector<1x32x64xbf16> to vector<32x64xbf16>
    %cst_46 = arith.constant dense<0.000000e+00> : vector<2x64xf32>
    %64 = tpu.matmul %61, %63, %cst_46 {dimension_numbers = #tpu.dot_dimension_numbers<[1], [0], [0], [1], [0, 0, 1, 1], [], []>} : vector<2x32xbf16>, vector<32x64xbf16>, vector<2x64xf32> -> vector<2x64xf32>
    %65 = arith.addf %60, %64 : vector<2x64xf32>
    %66 = vector.extract_strided_slice %21 {offsets = [18, 0], sizes = [2, 32], strides = [1, 1]} : vector<50x32xbf16> to vector<2x32xbf16>
    %c9 = arith.constant 9 : index
    %c0_47 = arith.constant 0 : index
    %c0_48 = arith.constant 0 : index
    %67 = vector.load %arg4[%c9, %c0_47, %c0_48] : memref<25x32x64xbf16, #tpu.memory_space<vmem>>, vector<1x32x64xbf16>
    %68 = vector.shape_cast %67 : vector<1x32x64xbf16> to vector<32x64xbf16>
    %cst_49 = arith.constant dense<0.000000e+00> : vector<2x64xf32>
    %69 = tpu.matmul %66, %68, %cst_49 {dimension_numbers = #tpu.dot_dimension_numbers<[1], [0], [0], [1], [0, 0, 1, 1], [], []>} : vector<2x32xbf16>, vector<32x64xbf16>, vector<2x64xf32> -> vector<2x64xf32>
    %70 = arith.addf %65, %69 : vector<2x64xf32>
    %71 = vector.extract_strided_slice %21 {offsets = [20, 0], sizes = [2, 32], strides = [1, 1]} : vector<50x32xbf16> to vector<2x32xbf16>
    %c10 = arith.constant 10 : index
    %c0_50 = arith.constant 0 : index
    %c0_51 = arith.constant 0 : index
    %72 = vector.load %arg4[%c10, %c0_50, %c0_51] : memref<25x32x64xbf16, #tpu.memory_space<vmem>>, vector<1x32x64xbf16>
    %73 = vector.shape_cast %72 : vector<1x32x64xbf16> to vector<32x64xbf16>
    %cst_52 = arith.constant dense<0.000000e+00> : vector<2x64xf32>
    %74 = tpu.matmul %71, %73, %cst_52 {dimension_numbers = #tpu.dot_dimension_numbers<[1], [0], [0], [1], [0, 0, 1, 1], [], []>} : vector<2x32xbf16>, vector<32x64xbf16>, vector<2x64xf32> -> vector<2x64xf32>
    %75 = arith.addf %70, %74 : vector<2x64xf32>
    %76 = vector.extract_strided_slice %21 {offsets = [22, 0], sizes = [2, 32], strides = [1, 1]} : vector<50x32xbf16> to vector<2x32xbf16>
    %c11 = arith.constant 11 : index
    %c0_53 = arith.constant 0 : index
    %c0_54 = arith.constant 0 : index
    %77 = vector.load %arg4[%c11, %c0_53, %c0_54] : memref<25x32x64xbf16, #tpu.memory_space<vmem>>, vector<1x32x64xbf16>
    %78 = vector.shape_cast %77 : vector<1x32x64xbf16> to vector<32x64xbf16>
    %cst_55 = arith.constant dense<0.000000e+00> : vector<2x64xf32>
    %79 = tpu.matmul %76, %78, %cst_55 {dimension_numbers = #tpu.dot_dimension_numbers<[1], [0], [0], [1], [0, 0, 1, 1], [], []>} : vector<2x32xbf16>, vector<32x64xbf16>, vector<2x64xf32> -> vector<2x64xf32>
    %80 = arith.addf %75, %79 : vector<2x64xf32>
    %81 = vector.extract_strided_slice %21 {offsets = [24, 0], sizes = [2, 32], strides = [1, 1]} : vector<50x32xbf16> to vector<2x32xbf16>
    %c12 = arith.constant 12 : index
    %c0_56 = arith.constant 0 : index
    %c0_57 = arith.constant 0 : index
    %82 = vector.load %arg4[%c12, %c0_56, %c0_57] : memref<25x32x64xbf16, #tpu.memory_space<vmem>>, vector<1x32x64xbf16>
    %83 = vector.shape_cast %82 : vector<1x32x64xbf16> to vector<32x64xbf16>
    %cst_58 = arith.constant dense<0.000000e+00> : vector<2x64xf32>
    %84 = tpu.matmul %81, %83, %cst_58 {dimension_numbers = #tpu.dot_dimension_numbers<[1], [0], [0], [1], [0, 0, 1, 1], [], []>} : vector<2x32xbf16>, vector<32x64xbf16>, vector<2x64xf32> -> vector<2x64xf32>
    %85 = arith.addf %80, %84 : vector<2x64xf32>
    %86 = vector.extract_strided_slice %21 {offsets = [26, 0], sizes = [2, 32], strides = [1, 1]} : vector<50x32xbf16> to vector<2x32xbf16>
    %c13 = arith.constant 13 : index
    %c0_59 = arith.constant 0 : index
    %c0_60 = arith.constant 0 : index
    %87 = vector.load %arg4[%c13, %c0_59, %c0_60] : memref<25x32x64xbf16, #tpu.memory_space<vmem>>, vector<1x32x64xbf16>
    %88 = vector.shape_cast %87 : vector<1x32x64xbf16> to vector<32x64xbf16>
    %cst_61 = arith.constant dense<0.000000e+00> : vector<2x64xf32>
    %89 = tpu.matmul %86, %88, %cst_61 {dimension_numbers = #tpu.dot_dimension_numbers<[1], [0], [0], [1], [0, 0, 1, 1], [], []>} : vector<2x32xbf16>, vector<32x64xbf16>, vector<2x64xf32> -> vector<2x64xf32>
    %90 = arith.addf %85, %89 : vector<2x64xf32>
    %91 = vector.extract_strided_slice %21 {offsets = [28, 0], sizes = [2, 32], strides = [1, 1]} : vector<50x32xbf16> to vector<2x32xbf16>
    %c14 = arith.constant 14 : index
    %c0_62 = arith.constant 0 : index
    %c0_63 = arith.constant 0 : index
    %92 = vector.load %arg4[%c14, %c0_62, %c0_63] : memref<25x32x64xbf16, #tpu.memory_space<vmem>>, vector<1x32x64xbf16>
    %93 = vector.shape_cast %92 : vector<1x32x64xbf16> to vector<32x64xbf16>
    %cst_64 = arith.constant dense<0.000000e+00> : vector<2x64xf32>
    %94 = tpu.matmul %91, %93, %cst_64 {dimension_numbers = #tpu.dot_dimension_numbers<[1], [0], [0], [1], [0, 0, 1, 1], [], []>} : vector<2x32xbf16>, vector<32x64xbf16>, vector<2x64xf32> -> vector<2x64xf32>
    %95 = arith.addf %90, %94 : vector<2x64xf32>
    %96 = vector.extract_strided_slice %21 {offsets = [30, 0], sizes = [2, 32], strides = [1, 1]} : vector<50x32xbf16> to vector<2x32xbf16>
    %c15 = arith.constant 15 : index
    %c0_65 = arith.constant 0 : index
    %c0_66 = arith.constant 0 : index
    %97 = vector.load %arg4[%c15, %c0_65, %c0_66] : memref<25x32x64xbf16, #tpu.memory_space<vmem>>, vector<1x32x64xbf16>
    %98 = vector.shape_cast %97 : vector<1x32x64xbf16> to vector<32x64xbf16>
    %cst_67 = arith.constant dense<0.000000e+00> : vector<2x64xf32>
    %99 = tpu.matmul %96, %98, %cst_67 {dimension_numbers = #tpu.dot_dimension_numbers<[1], [0], [0], [1], [0, 0, 1, 1], [], []>} : vector<2x32xbf16>, vector<32x64xbf16>, vector<2x64xf32> -> vector<2x64xf32>
    %100 = arith.addf %95, %99 : vector<2x64xf32>
    %101 = vector.extract_strided_slice %21 {offsets = [32, 0], sizes = [2, 32], strides = [1, 1]} : vector<50x32xbf16> to vector<2x32xbf16>
    %c16 = arith.constant 16 : index
    %c0_68 = arith.constant 0 : index
    %c0_69 = arith.constant 0 : index
    %102 = vector.load %arg4[%c16, %c0_68, %c0_69] : memref<25x32x64xbf16, #tpu.memory_space<vmem>>, vector<1x32x64xbf16>
    %103 = vector.shape_cast %102 : vector<1x32x64xbf16> to vector<32x64xbf16>
    %cst_70 = arith.constant dense<0.000000e+00> : vector<2x64xf32>
    %104 = tpu.matmul %101, %103, %cst_70 {dimension_numbers = #tpu.dot_dimension_numbers<[1], [0], [0], [1], [0, 0, 1, 1], [], []>} : vector<2x32xbf16>, vector<32x64xbf16>, vector<2x64xf32> -> vector<2x64xf32>
    %105 = arith.addf %100, %104 : vector<2x64xf32>
    %106 = vector.extract_strided_slice %21 {offsets = [34, 0], sizes = [2, 32], strides = [1, 1]} : vector<50x32xbf16> to vector<2x32xbf16>
    %c17 = arith.constant 17 : index
    %c0_71 = arith.constant 0 : index
    %c0_72 = arith.constant 0 : index
    %107 = vector.load %arg4[%c17, %c0_71, %c0_72] : memref<25x32x64xbf16, #tpu.memory_space<vmem>>, vector<1x32x64xbf16>
    %108 = vector.shape_cast %107 : vector<1x32x64xbf16> to vector<32x64xbf16>
    %cst_73 = arith.constant dense<0.000000e+00> : vector<2x64xf32>
    %109 = tpu.matmul %106, %108, %cst_73 {dimension_numbers = #tpu.dot_dimension_numbers<[1], [0], [0], [1], [0, 0, 1, 1], [], []>} : vector<2x32xbf16>, vector<32x64xbf16>, vector<2x64xf32> -> vector<2x64xf32>
    %110 = arith.addf %105, %109 : vector<2x64xf32>
    %111 = vector.extract_strided_slice %21 {offsets = [36, 0], sizes = [2, 32], strides = [1, 1]} : vector<50x32xbf16> to vector<2x32xbf16>
    %c18 = arith.constant 18 : index
    %c0_74 = arith.constant 0 : index
    %c0_75 = arith.constant 0 : index
    %112 = vector.load %arg4[%c18, %c0_74, %c0_75] : memref<25x32x64xbf16, #tpu.memory_space<vmem>>, vector<1x32x64xbf16>
    %113 = vector.shape_cast %112 : vector<1x32x64xbf16> to vector<32x64xbf16>
    %cst_76 = arith.constant dense<0.000000e+00> : vector<2x64xf32>
    %114 = tpu.matmul %111, %113, %cst_76 {dimension_numbers = #tpu.dot_dimension_numbers<[1], [0], [0], [1], [0, 0, 1, 1], [], []>} : vector<2x32xbf16>, vector<32x64xbf16>, vector<2x64xf32> -> vector<2x64xf32>
    %115 = arith.addf %110, %114 : vector<2x64xf32>
    %116 = vector.extract_strided_slice %21 {offsets = [38, 0], sizes = [2, 32], strides = [1, 1]} : vector<50x32xbf16> to vector<2x32xbf16>
    %c19 = arith.constant 19 : index
    %c0_77 = arith.constant 0 : index
    %c0_78 = arith.constant 0 : index
    %117 = vector.load %arg4[%c19, %c0_77, %c0_78] : memref<25x32x64xbf16, #tpu.memory_space<vmem>>, vector<1x32x64xbf16>
    %118 = vector.shape_cast %117 : vector<1x32x64xbf16> to vector<32x64xbf16>
    %cst_79 = arith.constant dense<0.000000e+00> : vector<2x64xf32>
    %119 = tpu.matmul %116, %118, %cst_79 {dimension_numbers = #tpu.dot_dimension_numbers<[1], [0], [0], [1], [0, 0, 1, 1], [], []>} : vector<2x32xbf16>, vector<32x64xbf16>, vector<2x64xf32> -> vector<2x64xf32>
    %120 = arith.addf %115, %119 : vector<2x64xf32>
    %121 = vector.extract_strided_slice %21 {offsets = [40, 0], sizes = [2, 32], strides = [1, 1]} : vector<50x32xbf16> to vector<2x32xbf16>
    %c20 = arith.constant 20 : index
    %c0_80 = arith.constant 0 : index
    %c0_81 = arith.constant 0 : index
    %122 = vector.load %arg4[%c20, %c0_80, %c0_81] : memref<25x32x64xbf16, #tpu.memory_space<vmem>>, vector<1x32x64xbf16>
    %123 = vector.shape_cast %122 : vector<1x32x64xbf16> to vector<32x64xbf16>
    %cst_82 = arith.constant dense<0.000000e+00> : vector<2x64xf32>
    %124 = tpu.matmul %121, %123, %cst_82 {dimension_numbers = #tpu.dot_dimension_numbers<[1], [0], [0], [1], [0, 0, 1, 1], [], []>} : vector<2x32xbf16>, vector<32x64xbf16>, vector<2x64xf32> -> vector<2x64xf32>
    %125 = arith.addf %120, %124 : vector<2x64xf32>
    %126 = vector.extract_strided_slice %21 {offsets = [42, 0], sizes = [2, 32], strides = [1, 1]} : vector<50x32xbf16> to vector<2x32xbf16>
    %c21 = arith.constant 21 : index
    %c0_83 = arith.constant 0 : index
    %c0_84 = arith.constant 0 : index
    %127 = vector.load %arg4[%c21, %c0_83, %c0_84] : memref<25x32x64xbf16, #tpu.memory_space<vmem>>, vector<1x32x64xbf16>
    %128 = vector.shape_cast %127 : vector<1x32x64xbf16> to vector<32x64xbf16>
    %cst_85 = arith.constant dense<0.000000e+00> : vector<2x64xf32>
    %129 = tpu.matmul %126, %128, %cst_85 {dimension_numbers = #tpu.dot_dimension_numbers<[1], [0], [0], [1], [0, 0, 1, 1], [], []>} : vector<2x32xbf16>, vector<32x64xbf16>, vector<2x64xf32> -> vector<2x64xf32>
    %130 = arith.addf %125, %129 : vector<2x64xf32>
    %131 = vector.extract_strided_slice %21 {offsets = [44, 0], sizes = [2, 32], strides = [1, 1]} : vector<50x32xbf16> to vector<2x32xbf16>
    %c22 = arith.constant 22 : index
    %c0_86 = arith.constant 0 : index
    %c0_87 = arith.constant 0 : index
    %132 = vector.load %arg4[%c22, %c0_86, %c0_87] : memref<25x32x64xbf16, #tpu.memory_space<vmem>>, vector<1x32x64xbf16>
    %133 = vector.shape_cast %132 : vector<1x32x64xbf16> to vector<32x64xbf16>
    %cst_88 = arith.constant dense<0.000000e+00> : vector<2x64xf32>
    %134 = tpu.matmul %131, %133, %cst_88 {dimension_numbers = #tpu.dot_dimension_numbers<[1], [0], [0], [1], [0, 0, 1, 1], [], []>} : vector<2x32xbf16>, vector<32x64xbf16>, vector<2x64xf32> -> vector<2x64xf32>
    %135 = arith.addf %130, %134 : vector<2x64xf32>
    %136 = vector.extract_strided_slice %21 {offsets = [46, 0], sizes = [2, 32], strides = [1, 1]} : vector<50x32xbf16> to vector<2x32xbf16>
    %c23 = arith.constant 23 : index
    %c0_89 = arith.constant 0 : index
    %c0_90 = arith.constant 0 : index
    %137 = vector.load %arg4[%c23, %c0_89, %c0_90] : memref<25x32x64xbf16, #tpu.memory_space<vmem>>, vector<1x32x64xbf16>
    %138 = vector.shape_cast %137 : vector<1x32x64xbf16> to vector<32x64xbf16>
    %cst_91 = arith.constant dense<0.000000e+00> : vector<2x64xf32>
    %139 = tpu.matmul %136, %138, %cst_91 {dimension_numbers = #tpu.dot_dimension_numbers<[1], [0], [0], [1], [0, 0, 1, 1], [], []>} : vector<2x32xbf16>, vector<32x64xbf16>, vector<2x64xf32> -> vector<2x64xf32>
    %140 = arith.addf %135, %139 : vector<2x64xf32>
    %141 = vector.extract_strided_slice %21 {offsets = [48, 0], sizes = [2, 32], strides = [1, 1]} : vector<50x32xbf16> to vector<2x32xbf16>
    %c24 = arith.constant 24 : index
    %c0_92 = arith.constant 0 : index
    %c0_93 = arith.constant 0 : index
    %142 = vector.load %arg4[%c24, %c0_92, %c0_93] : memref<25x32x64xbf16, #tpu.memory_space<vmem>>, vector<1x32x64xbf16>
    %143 = vector.shape_cast %142 : vector<1x32x64xbf16> to vector<32x64xbf16>
    %cst_94 = arith.constant dense<0.000000e+00> : vector<2x64xf32>
    %144 = tpu.matmul %141, %143, %cst_94 {dimension_numbers = #tpu.dot_dimension_numbers<[1], [0], [0], [1], [0, 0, 1, 1], [], []>} : vector<2x32xbf16>, vector<32x64xbf16>, vector<2x64xf32> -> vector<2x64xf32>
    %145 = arith.addf %140, %144 : vector<2x64xf32>
    %c0_95 = arith.constant 0 : index
    %c0_96 = arith.constant 0 : index
    %146 = vector.load %arg5[%c0_95, %c0_96] : memref<1x64xf32, #tpu.memory_space<vmem>>, vector<1x64xf32>
    %147 = vector.broadcast %146 : vector<1x64xf32> to vector<2x64xf32>
    %148 = arith.addf %145, %147 : vector<2x64xf32>
    %cst_97 = arith.constant 0.000000e+00 : f32
    %149 = vector.broadcast %cst_97 : f32 to vector<2x64xf32>
    %150 = arith.maximumf %148, %149 : vector<2x64xf32>
    %151 = arith.truncf %150 : vector<2x64xf32> to vector<2x64xbf16>
    %c0_98 = arith.constant 0 : index
    %c0_99 = arith.constant 0 : index
    %152 = vector.load %arg6[%c0_98, %c0_99] : memref<64x128xbf16, #tpu.memory_space<vmem>>, vector<64x128xbf16>
    %cst_100 = arith.constant dense<0.000000e+00> : vector<2x128xf32>
    %153 = tpu.matmul %151, %152, %cst_100 {dimension_numbers = #tpu.dot_dimension_numbers<[1], [0], [0], [1], [0, 0, 1, 1], [], []>} : vector<2x64xbf16>, vector<64x128xbf16>, vector<2x128xf32> -> vector<2x128xf32>
    %c0_101 = arith.constant 0 : index
    %c0_102 = arith.constant 0 : index
    %154 = vector.load %arg7[%c0_101, %c0_102] : memref<1x128xf32, #tpu.memory_space<vmem>>, vector<1x128xf32>
    %155 = vector.broadcast %154 : vector<1x128xf32> to vector<2x128xf32>
    %156 = arith.addf %153, %155 : vector<2x128xf32>
    %cst_103 = arith.constant 0.000000e+00 : f32
    %157 = vector.broadcast %cst_103 : f32 to vector<2x128xf32>
    %158 = arith.maximumf %156, %157 : vector<2x128xf32>
    %159 = arith.truncf %158 : vector<2x128xf32> to vector<2x128xbf16>
    %c0_104 = arith.constant 0 : index
    %c0_105 = arith.constant 0 : index
    %160 = vector.load %arg8[%c0_104, %c0_105] : memref<128x128xbf16, #tpu.memory_space<vmem>>, vector<128x128xbf16>
    %cst_106 = arith.constant dense<0.000000e+00> : vector<2x128xf32>
    %161 = tpu.matmul %159, %160, %cst_106 {dimension_numbers = #tpu.dot_dimension_numbers<[1], [0], [0], [1], [0, 0, 1, 1], [], []>} : vector<2x128xbf16>, vector<128x128xbf16>, vector<2x128xf32> -> vector<2x128xf32>
    %c0_107 = arith.constant 0 : index
    %c0_108 = arith.constant 0 : index
    %162 = vector.load %arg9[%c0_107, %c0_108] : memref<1x128xf32, #tpu.memory_space<vmem>>, vector<1x128xf32>
    %163 = vector.broadcast %162 : vector<1x128xf32> to vector<2x128xf32>
    %164 = arith.addf %161, %163 : vector<2x128xf32>
    %c0_109 = arith.constant 0 : index
    %c0_110 = arith.constant 0 : index
    %165 = vector.load %arg10[%c0_109, %c0_110] : memref<2x128xf32, #tpu.memory_space<vmem>>, vector<2x128xf32>
    tpu.vector_store %arg10[%c0_109, %c0_110], %164 {strides = array<i32>} : memref<2x128xf32, #tpu.memory_space<vmem>>, vector<2x128xf32>,
    return
  }
  func.func @transform_0(%arg0: i32) -> (i32, i32, i32) {
    %c0_i32 = arith.constant 0 : i32
    %c0_i32_0 = arith.constant 0 : i32
    %c0_i32_1 = arith.constant 0 : i32
    %c0_i32_2 = arith.constant 0 : i32
    return %c0_i32, %c0_i32_0, %c0_i32_1 : i32, i32, i32
  }
  func.func @transform_1(%arg0: i32) -> (i32, i32) {
    %c0_i32 = arith.constant 0 : i32
    %c0_i32_0 = arith.constant 0 : i32
    %c0_i32_1 = arith.constant 0 : i32
    return %c0_i32, %c0_i32_0 : i32, i32
  }
  func.func @transform_2(%arg0: i32) -> (i32, i32) {
    %c0_i32 = arith.constant 0 : i32
    %c0_i32_0 = arith.constant 0 : i32
    %c0_i32_1 = arith.constant 0 : i32
    return %c0_i32, %c0_i32_0 : i32, i32
  }
  func.func @transform_3(%arg0: i32) -> (i32, i32, i32) {
    %c0_i32 = arith.constant 0 : i32
    %c0_i32_0 = arith.constant 0 : i32
    %c0_i32_1 = arith.constant 0 : i32
    %c0_i32_2 = arith.constant 0 : i32
    return %c0_i32, %c0_i32_0, %c0_i32_1 : i32, i32, i32
  }
  func.func @transform_4(%arg0: i32) -> (i32, i32) {
    %c0_i32 = arith.constant 0 : i32
    %c0_i32_0 = arith.constant 0 : i32
    %c0_i32_1 = arith.constant 0 : i32
    return %c0_i32, %c0_i32_0 : i32, i32
  }
  func.func @transform_5(%arg0: i32) -> (i32, i32) {
    %c0_i32 = arith.constant 0 : i32
    %c0_i32_0 = arith.constant 0 : i32
    %c0_i32_1 = arith.constant 0 : i32
    return %c0_i32, %c0_i32_0 : i32, i32
  }
  func.func @transform_6(%arg0: i32) -> (i32, i32) {
    %c0_i32 = arith.constant 0 : i32
    %c0_i32_0 = arith.constant 0 : i32
    %c0_i32_1 = arith.constant 0 : i32
    return %c0_i32, %c0_i32_0 : i32, i32
  }
  func.func @transform_7(%arg0: i32) -> (i32, i32) {
    %c0_i32 = arith.constant 0 : i32
    %c0_i32_0 = arith.constant 0 : i32
    %c0_i32_1 = arith.constant 0 : i32
    return %c0_i32, %c0_i32_0 : i32, i32
  }
  func.func @transform_8(%arg0: i32) -> (i32, i32) {
    %c0_i32 = arith.constant 0 : i32
    %c0_i32_0 = arith.constant 0 : i32
    %c0_i32_1 = arith.constant 0 : i32
    return %c0_i32, %c0_i32_0 : i32, i32
  }
  func.func @transform_9(%arg0: i32) -> (i32, i32) {
    %c0_i32 = arith.constant 0 : i32
    %c0_i32_0 = arith.constant 0 : i32
    %c0_i32_1 = arith.constant 0 : i32
    return %c0_i32, %c0_i32_0 : i32, i32
  }
}

</mosaic_0001>

<llo_original>
// kernel: net_forward.2
$region0: #{net_forward.2}
  #allocation0 [shape = 'u32[]', space=smem, size = 0x4, offset = 0x4, fixed_abs, tag = 'smem constant byte address 0x4 - core index']
  #allocation1 [shape = 'u32[144,128]{1,0:T(1,128)}', space=vmem, size = 0x12000, scoped, tag = 'internal scratch']
  %s0 = inlined_call_operand.vmem [shape: bf16[4,392,75], index: 0, kind: input, shape index: {}]
  %s1 = inlined_call_operand.vmem [shape: bf16[75,16], index: 1, kind: input, shape index: {}]
  %s2 = inlined_call_operand.vmem [shape: f32[1,16], index: 2, kind: input, shape index: {}]
  %s3 = inlined_call_operand.vmem [shape: bf16[392,16], index: 3, kind: output, shape index: {}]
  %s4 = sld [smem:[#allocation0]]
  $region22: #{net_forward.2} parent=0
    _
  %s6 = ssub.s32 1, %s4
  %s7 = scalar_select 0, %s6, %s4
  // Predicated region
  $region2: #{net_forward.2} parent=0 // pred_check
    _
  $region3: #{net_forward.2} parent=0 // pred_check_branch
    %9 = sbr.rel (0) target = $region5
  $region4: #{net_forward.2} parent=0 // pred_region
    _
  $region5: #{net_forward.2} parent=0 // pred_fallthru
    _
  // Predicated region
  $region6: #{net_forward.2} parent=0 // pred_check
    _
  $region7: #{net_forward.2} parent=0 // pred_check_branch
    %11 = sbr.rel (0) target = $region9
  $region8: #{net_forward.2} parent=0 // pred_region
    _
  $region9: #{net_forward.2} parent=0 // pred_fallthru
    _
  // Predicated region
  $region10: #{net_forward.2} parent=0 // pred_check
    _
  $region11: #{net_forward.2} parent=0 // pred_check_branch
    %13 = sbr.rel (0) target = $region13
  $region12: #{net_forward.2} parent=0 // pred_region
    _
  $region13: #{net_forward.2} parent=0 // pred_fallthru
    _
  %v15 = vld [vmem:[%s1] sm:$0xf]
  %v16 = vld [vmem:[%s1 + $0x4] sm:$0xf]
  %v17 = vld [vmem:[%s1 + $0x8] sm:$0xf]
  %v18 = vld [vmem:[%s1 + $0xc] sm:$0xf]
  %v19 = vld [vmem:[%s1 + $0x10] sm:$0xf]
  %v20 = vld [vmem:[%s1 + $0x14] sm:$0xf]
  %v21 = vld [vmem:[%s1 + $0x18] sm:$0xf]
  %v22 = vld [vmem:[%s1 + $0x1c] sm:$0xf]
  %v23 = vld [vmem:[%s1 + $0x20] sm:$0xf]
  %v24 = vld [vmem:[%s1 + $0x24] sm:$0x3]
  %v25 = vld [vmem:[%s0] sm:$0xf]
  %v26 = vld [vmem:[%s0 + $0x4] sm:$0xf]
  %v27 = vld [vmem:[%s0 + $0x8] sm:$0xf]
  %v28 = vld [vmem:[%s0 + $0xc] sm:$0xf]
  %v29 = vld [vmem:[%s0 + $0x10] sm:$0xf]
  %v30 = vld [vmem:[%s0 + $0x14] sm:$0xf]
  %v31 = vld [vmem:[%s0 + $0x18] sm:$0xf]
  %v32 = vld [vmem:[%s0 + $0x1c] sm:$0xf]
  %v33 = vld [vmem:[%s0 + $0x20] sm:$0xf]
  %v34 = vld [vmem:[%s0 + $0x24] sm:$0xf]
  %v35 = vld [vmem:[%s0 + $0x28] sm:$0xf]
  %v36 = vld [vmem:[%s0 + $0x2c] sm:$0xf]
  %v37 = vld [vmem:[%s0 + $0x30] sm:$0xf]
  %v38 = vld [vmem:[%s0 + $0x34] sm:$0xf]
  %v39 = vld [vmem:[%s0 + $0x38] sm:$0xf]
  %v40 = vld [vmem:[%s0 + $0x3c] sm:$0xf]
  %v41 = vld [vmem:[%s0 + $0x40] sm:$0xf]
  %v42 = vld [vmem:[%s0 + $0x44] sm:$0xf]
  %v43 = vld [vmem:[%s0 + $0x48] sm:$0xf]
  %v44 = vld [vmem:[%s0 + $0x4c] sm:$0xf]
  %v45 = vld [vmem:[%s0 + $0x50] sm:$0xf]
  %v46 = vld [vmem:[%s0 + $0x54] sm:$0xf]
  %v47 = vld [vmem:[%s0 + $0x58] sm:$0xf]
  %v48 = vld [vmem:[%s0 + $0x5c] sm:$0xf]
  %v49 = vld [vmem:[%s0 + $0x60] sm:$0xf]
  %v50 = vld [vmem:[%s0 + $0x64] sm:$0xf]
  %v51 = vld [vmem:[%s0 + $0x68] sm:$0xf]
  %v52 = vld [vmem:[%s0 + $0x6c] sm:$0xf]
  %v53 = vld [vmem:[%s0 + $0x70] sm:$0xf]
  %v54 = vld [vmem:[%s0 + $0x74] sm:$0xf]
  %v55 = vld [vmem:[%s0 + $0x78] sm:$0xf]
  %v56 = vld [vmem:[%s0 + $0x7c] sm:$0xf]
  %v57 = vld [vmem:[%s0 + $0x80] sm:$0xf]
  %v58 = vld [vmem:[%s0 + $0x84] sm:$0xf]
  %v59 = vld [vmem:[%s0 + $0x88] sm:$0xf]
  %v60 = vld [vmem:[%s0 + $0x8c] sm:$0xf]
  %v61 = vld [vmem:[%s0 + $0x90] sm:$0xf]
  %v62 = vld [vmem:[%s0 + $0x94] sm:$0xf]
  %v63 = vld [vmem:[%s0 + $0x98] sm:$0xf]
  %v64 = vld [vmem:[%s0 + $0x9c] sm:$0xf]
  %v65 = vld [vmem:[%s0 + $0xa0] sm:$0xf]
  %v66 = vld [vmem:[%s0 + $0xa4] sm:$0xf]
  %v67 = vld [vmem:[%s0 + $0xa8] sm:$0xf]
  %v68 = vld [vmem:[%s0 + $0xac] sm:$0xf]
  %v69 = vld [vmem:[%s0 + $0xb0] sm:$0xf]
  %v70 = vld [vmem:[%s0 + $0xb4] sm:$0xf]
  %v71 = vld [vmem:[%s0 + $0xb8] sm:$0xf]
  %v72 = vld [vmem:[%s0 + $0xbc] sm:$0xf]
  %v73 = vld [vmem:[%s0 + $0xc0] sm:$0xf]
  %v123 = vunpack.c.l.b16 %v25
  %v124 = vunpack.c.l.b16 %v26
  %v125 = vunpack.c.l.b16 %v27
  %v126 = vunpack.c.l.b16 %v28
  %v127 = vunpack.c.l.b16 %v29
  %v128 = vunpack.c.l.b16 %v30
  %v129 = vunpack.c.l.b16 %v31
  %v130 = vunpack.c.l.b16 %v32
  %v131 = vunpack.c.l.b16 %v33
  %v132 = vunpack.c.l.b16 %v34
  %v133 = vunpack.c.l.b16 %v35
  %v134 = vunpack.c.l.b16 %v36
  %v135 = vunpack.c.l.b16 %v37
  %v136 = vunpack.c.l.b16 %v38
  %v137 = vunpack.c.l.b16 %v39
  %v138 = vunpack.c.l.b16 %v40
  %v139 = vunpack.c.l.b16 %v41
  %v140 = vunpack.c.l.b16 %v42
  %v141 = vunpack.c.l.b16 %v43
  %v142 = vunpack.c.l.b16 %v44
  %v143 = vunpack.c.l.b16 %v45
  %v144 = vunpack.c.l.b16 %v46
  %v145 = vunpack.c.l.b16 %v47
  %v146 = vunpack.c.l.b16 %v48
  %v147 = vunpack.c.l.b16 %v49
  %v148 = vunpack.c.l.b16 %v50
  %v149 = vunpack.c.l.b16 %v51
  %v150 = vunpack.c.l.b16 %v52
  %v151 = vunpack.c.l.b16 %v53
  %v152 = vunpack.c.l.b16 %v54
  %v153 = vunpack.c.l.b16 %v55
  %v154 = vunpack.c.l.b16 %v56
  %v155 = vunpack.c.l.b16 %v57
  %v156 = vunpack.c.l.b16 %v58
  %v157 = vunpack.c.l.b16 %v59
  %v158 = vunpack.c.l.b16 %v60
  %v159 = vunpack.c.l.b16 %v61
  %v160 = vunpack.c.l.b16 %v62
  %v161 = vunpack.c.l.b16 %v63
  %v162 = vunpack.c.l.b16 %v64
  %v163 = vunpack.c.l.b16 %v65
  %v164 = vunpack.c.l.b16 %v66
  %v165 = vunpack.c.l.b16 %v67
  %v166 = vunpack.c.l.b16 %v68
  %v167 = vunpack.c.l.b16 %v69
  %v168 = vunpack.c.l.b16 %v70
  %v169 = vunpack.c.l.b16 %v71
  %v170 = vunpack.c.l.b16 %v72
  %v171 = vunpack.c.l.b16 %v73
  %v172 = vpack.c.b16 %v124, %v123
  %v173 = vpack.c.b16 %v126, %v125
  %v174 = vpack.c.b16 %v128, %v127
  %v175 = vpack.c.b16 %v130, %v129
  %v176 = vpack.c.b16 %v132, %v131
  %v177 = vpack.c.b16 %v134, %v133
  %v178 = vpack.c.b16 %v136, %v135
  %v179 = vpack.c.b16 %v138, %v137
  %v180 = vpack.c.b16 %v140, %v139
  %v181 = vpack.c.b16 %v142, %v141
  %v182 = vpack.c.b16 %v144, %v143
  %v183 = vpack.c.b16 %v146, %v145
  %v184 = vpack.c.b16 %v148, %v147
  %v185 = vpack.c.b16 %v150, %v149
  %v186 = vpack.c.b16 %v152, %v151
  %v187 = vpack.c.b16 %v154, %v153
  %v188 = vpack.c.b16 %v156, %v155
  %v189 = vpack.c.b16 %v158, %v157
  %v190 = vpack.c.b16 %v160, %v159
  %v191 = vpack.c.b16 %v162, %v161
  %v192 = vpack.c.b16 %v164, %v163
  %v193 = vpack.c.b16 %v166, %v165
  %v194 = vpack.c.b16 %v168, %v167
  %v195 = vpack.c.b16 %v170, %v169
  %v196 = vpack.c.b16 %v171, %v171
  %v207 = vunpack.c.l.b16 %v15
  %v208 = vunpack.c.l.b16 %v16
  %v209 = vunpack.c.l.b16 %v17
  %v210 = vunpack.c.l.b16 %v18
  %v211 = vunpack.c.l.b16 %v19
  %v212 = vunpack.c.l.b16 %v20
  %v213 = vunpack.c.l.b16 %v21
  %v214 = vunpack.c.l.b16 %v22
  %v215 = vunpack.c.l.b16 %v23
  %v216 = vunpack.c.l.b16 %v24
  %v217 = vpack.c.b16 %v208, %v207
  %v218 = vpack.c.b16 %v210, %v209
  %v219 = vpack.c.b16 %v212, %v211
  %v220 = vpack.c.b16 %v214, %v213
  %v221 = vpack.c.b16 %v216, %v215
  %vm226 = vcmask 613376
  %v228 = vsel %vm226, %v172, 0
  %v231 = vsel %vm226, %v173, 0
  %v234 = vsel %vm226, %v174, 0
  %v237 = vsel %vm226, %v175, 0
  %v240 = vsel %vm226, %v176, 0
  %v243 = vsel %vm226, %v177, 0
  %v246 = vsel %vm226, %v178, 0
  %v249 = vsel %vm226, %v179, 0
  %v252 = vsel %vm226, %v180, 0
  %v255 = vsel %vm226, %v181, 0
  %v258 = vsel %vm226, %v182, 0
  %v261 = vsel %vm226, %v183, 0
  %v264 = vsel %vm226, %v184, 0
  %v267 = vsel %vm226, %v185, 0
  %v270 = vsel %vm226, %v186, 0
  %v273 = vsel %vm226, %v187, 0
  %v276 = vsel %vm226, %v188, 0
  %v279 = vsel %vm226, %v189, 0
  %v282 = vsel %vm226, %v190, 0
  %v285 = vsel %vm226, %v191, 0
  %v288 = vsel %vm226, %v192, 0
  %v291 = vsel %vm226, %v193, 0
  %v294 = vsel %vm226, %v194, 0
  %v297 = vsel %vm226, %v195, 0
  %v300 = vsel %vm226, %v196, 0
  %vm302 = vcmask 1044480
  %vm303 = vcmask 1045504
  %v304 = vsel %vm302, 4294967295, 65535
  %v305 = vsel %vm303, %v304, 0
  %v307 = vand.u32 %v221, %v305
  %309 = vmatprep.subr.bf16.mxu0 0
  %310 = vmatpush1.bf16.msra.mxu0 %v217
  %311 = vmatprep.subr.bf16.mxu0 0
  %312 = vmatpush1.bf16.msra.mxu0 %v218
  %313 = vmatprep.subr.bf16.mxu0 0
  %314 = vmatpush1.bf16.msra.mxu0 %v219
  %315 = vmatprep.subr.bf16.mxu0 0
  %316 = vmatpush1.bf16.msra.mxu0 %v220
  %317 = vmatprep.subr.bf16.mxu0 0
  %318 = vmatpush1.bf16.msra.mxu0 %v307
  %319 = vmatprep.subr.bf16.mxu0 0
  %320 = vmatpush1.bf16.msra.mxu0 0
  %321 = vmatprep.subr.bf16.mxu0 0
  %322 = vmatpush1.bf16.msra.mxu0 0
  %323 = vmatprep.subr.bf16.mxu0 0
  %324 = vmatpush1.bf16.msra.mxu0 0
  %325 = vmatprep.subr.bf16.mxu0 0
  %326 = vmatpush1.bf16.msra.mxu0 0
  %327 = vmatprep.subr.bf16.mxu0 0
  %328 = vmatpush1.bf16.msra.mxu0 0
  %329 = vmatprep.subr.bf16.mxu0 0
  %330 = vmatpush1.bf16.msra.mxu0 0
  %331 = vmatprep.subr.bf16.mxu0 0
  %332 = vmatpush1.bf16.msra.mxu0 0
  %333 = vmatprep.subr.bf16.mxu0 0
  %334 = vmatpush1.bf16.msra.mxu0 0
  %335 = vmatprep.subr.bf16.mxu0 0
  %336 = vmatpush1.bf16.msra.mxu0 0
  %337 = vmatprep.subr.bf16.mxu0 0
  %338 = vmatpush1.bf16.msra.mxu0 0
  %339 = vmatprep.subr.bf16.mxu0 0
  %340 = vmatpush1.bf16.msra.mxu0 0
  %341 = vmatprep.mubr.bf16.mxu0 0
  %342 = vmatmul.mubr.bf16.gmra.mrb[0].mxu0 %v228
  %v343 = vpop.f32.mrb[0].mxu0
  %v344 = vadd.f32 0.0, %v343
  %v345 = vpop.f32.mrb[0].mxu0
  %v346 = vpop.f32.mrb[0].mxu0
  %v347 = vadd.f32 0.0, %v346
  %v348 = vpop.f32.mrb[0].mxu0
  %349 = vmatprep.mubr.bf16.mxu0 0
  %350 = vmatmul.mubr.bf16.gmra.mrb[0].mxu0 %v231
  %v351 = vpop.f32.mrb[0].mxu0
  %v352 = vadd.f32 0.0, %v351
  %v353 = vpop.f32.mrb[0].mxu0
  %v354 = vpop.f32.mrb[0].mxu0
  %v355 = vadd.f32 0.0, %v354
  %v356 = vpop.f32.mrb[0].mxu0
  %357 = vmatprep.mubr.bf16.mxu0 0
  %358 = vmatmul.mubr.bf16.gmra.mrb[0].mxu0 %v234
  %v359 = vpop.f32.mrb[0].mxu0
  %v360 = vadd.f32 0.0, %v359
  %v361 = vpop.f32.mrb[0].mxu0
  %v362 = vpop.f32.mrb[0].mxu0
  %v363 = vadd.f32 0.0, %v362
  %v364 = vpop.f32.mrb[0].mxu0
  %365 = vmatprep.mubr.bf16.mxu0 0
  %366 = vmatmul.mubr.bf16.gmra.mrb[0].mxu0 %v237
  %v367 = vpop.f32.mrb[0].mxu0
  %v368 = vadd.f32 0.0, %v367
  %v369 = vpop.f32.mrb[0].mxu0
  %v370 = vpop.f32.mrb[0].mxu0
  %v371 = vadd.f32 0.0, %v370
  %v372 = vpop.f32.mrb[0].mxu0
  %373 = vmatprep.mubr.bf16.mxu0 0
  %374 = vmatmul.mubr.bf16.gmra.mrb[0].mxu0 %v240
  %v375 = vpop.f32.mrb[0].mxu0
  %v376 = vadd.f32 0.0, %v375
  %v377 = vpop.f32.mrb[0].mxu0
  %v378 = vpop.f32.mrb[0].mxu0
  %v379 = vadd.f32 0.0, %v378
  %v380 = vpop.f32.mrb[0].mxu0
  %381 = vmatprep.mubr.bf16.mxu0 0
  %382 = vmatmul.mubr.bf16.gmra.mrb[0].mxu0 %v243
  %v383 = vpop.f32.mrb[0].mxu0
  %v384 = vadd.f32 0.0, %v383
  %v385 = vpop.f32.mrb[0].mxu0
  %v386 = vpop.f32.mrb[0].mxu0
  %v387 = vadd.f32 0.0, %v386
  %v388 = vpop.f32.mrb[0].mxu0
  %389 = vmatprep.mubr.bf16.mxu0 0
  %390 = vmatmul.mubr.bf16.gmra.mrb[0].mxu0 %v246
  %v391 = vpop.f32.mrb[0].mxu0
  %v392 = vadd.f32 0.0, %v391
  %v393 = vpop.f32.mrb[0].mxu0
  %v394 = vpop.f32.mrb[0].mxu0
  %v395 = vadd.f32 0.0, %v394
  %v396 = vpop.f32.mrb[0].mxu0
  %397 = vmatprep.mubr.bf16.mxu0 0
  %398 = vmatmul.mubr.bf16.gmra.mrb[0].mxu0 %v249
  %v399 = vpop.f32.mrb[0].mxu0
  %v400 = vadd.f32 0.0, %v399
  %v401 = vpop.f32.mrb[0].mxu0
  %v402 = vpop.f32.mrb[0].mxu0
  %v403 = vadd.f32 0.0, %v402
  %v404 = vpop.f32.mrb[0].mxu0
  %405 = vmatprep.mubr.bf16.mxu0 0
  %406 = vmatmul.mubr.bf16.gmra.mrb[0].mxu0 %v252
  %v407 = vpop.f32.mrb[0].mxu0
  %v408 = vadd.f32 0.0, %v407
  %v409 = vpop.f32.mrb[0].mxu0
  %v410 = vpop.f32.mrb[0].mxu0
  %v411 = vadd.f32 0.0, %v410
  %v412 = vpop.f32.mrb[0].mxu0
  %413 = vmatprep.mubr.bf16.mxu0 0
  %414 = vmatmul.mubr.bf16.gmra.mrb[0].mxu0 %v255
  %v415 = vpop.f32.mrb[0].mxu0
  %v416 = vadd.f32 0.0, %v415
  %v417 = vpop.f32.mrb[0].mxu0
  %v418 = vpop.f32.mrb[0].mxu0
  %v419 = vadd.f32 0.0, %v418
  %v420 = vpop.f32.mrb[0].mxu0
  %421 = vmatprep.mubr.bf16.mxu0 0
  %422 = vmatmul.mubr.bf16.gmra.mrb[0].mxu0 %v258
  %v423 = vpop.f32.mrb[0].mxu0
  %v424 = vadd.f32 0.0, %v423
  %v425 = vpop.f32.mrb[0].mxu0
  %v426 = vpop.f32.mrb[0].mxu0
  %v427 = vadd.f32 0.0, %v426
  %v428 = vpop.f32.mrb[0].mxu0
  %429 = vmatprep.mubr.bf16.mxu0 0
  %430 = vmatmul.mubr.bf16.gmra.mrb[0].mxu0 %v261
  %v431 = vpop.f32.mrb[0].mxu0
  %v432 = vadd.f32 0.0, %v431
  %v433 = vpop.f32.mrb[0].mxu0
  %v434 = vpop.f32.mrb[0].mxu0
  %v435 = vadd.f32 0.0, %v434
  %v436 = vpop.f32.mrb[0].mxu0
  %437 = vmatprep.mubr.bf16.mxu0 0
  %438 = vmatmul.mubr.bf16.gmra.mrb[0].mxu0 %v264
  %v439 = vpop.f32.mrb[0].mxu0
  %v440 = vadd.f32 0.0, %v439
  %v441 = vpop.f32.mrb[0].mxu0
  %v442 = vpop.f32.mrb[0].mxu0
  %v443 = vadd.f32 0.0, %v442
  %v444 = vpop.f32.mrb[0].mxu0
  %445 = vmatprep.mubr.bf16.mxu0 0
  %446 = vmatmul.mubr.bf16.gmra.mrb[0].mxu0 %v267
  %v447 = vpop.f32.mrb[0].mxu0
  %v448 = vadd.f32 0.0, %v447
  %v449 = vpop.f32.mrb[0].mxu0
  %v450 = vpop.f32.mrb[0].mxu0
  %v451 = vadd.f32 0.0, %v450
  %v452 = vpop.f32.mrb[0].mxu0
  %453 = vmatprep.mubr.bf16.mxu0 0
  %454 = vmatmul.mubr.bf16.gmra.mrb[0].mxu0 %v270
  %v455 = vpop.f32.mrb[0].mxu0
  %v456 = vadd.f32 0.0, %v455
  %v457 = vpop.f32.mrb[0].mxu0
  %v458 = vpop.f32.mrb[0].mxu0
  %v459 = vadd.f32 0.0, %v458
  %v460 = vpop.f32.mrb[0].mxu0
  %461 = vmatprep.mubr.bf16.mxu0 0
  %462 = vmatmul.mubr.bf16.gmra.mrb[0].mxu0 %v273
  %v463 = vpop.f32.mrb[0].mxu0
  %v464 = vadd.f32 0.0, %v463
  %v465 = vpop.f32.mrb[0].mxu0
  %v466 = vpop.f32.mrb[0].mxu0
  %v467 = vadd.f32 0.0, %v466
  %v468 = vpop.f32.mrb[0].mxu0
  %469 = vmatprep.mubr.bf16.mxu0 0
  %470 = vmatmul.mubr.bf16.gmra.mrb[0].mxu0 %v276
  %v471 = vpop.f32.mrb[0].mxu0
  %v472 = vadd.f32 0.0, %v471
  %v473 = vpop.f32.mrb[0].mxu0
  %v474 = vpop.f32.mrb[0].mxu0
  %v475 = vadd.f32 0.0, %v474
  %v476 = vpop.f32.mrb[0].mxu0
  %477 = vmatprep.mubr.bf16.mxu0 0
  %478 = vmatmul.mubr.bf16.gmra.mrb[0].mxu0 %v279
  %v479 = vpop.f32.mrb[0].mxu0
  %v480 = vadd.f32 0.0, %v479
  %v481 = vpop.f32.mrb[0].mxu0
  %v482 = vpop.f32.mrb[0].mxu0
  %v483 = vadd.f32 0.0, %v482
  %v484 = vpop.f32.mrb[0].mxu0
  %485 = vmatprep.mubr.bf16.mxu0 0
  %486 = vmatmul.mubr.bf16.gmra.mrb[0].mxu0 %v282
  %v487 = vpop.f32.mrb[0].mxu0
  %v488 = vadd.f32 0.0, %v487
  %v489 = vpop.f32.mrb[0].mxu0
  %v490 = vpop.f32.mrb[0].mxu0
  %v491 = vadd.f32 0.0, %v490
  %v492 = vpop.f32.mrb[0].mxu0
  %493 = vmatprep.mubr.bf16.mxu0 0
  %494 = vmatmul.mubr.bf16.gmra.mrb[0].mxu0 %v285
  %v495 = vpop.f32.mrb[0].mxu0
  %v496 = vadd.f32 0.0, %v495
  %v497 = vpop.f32.mrb[0].mxu0
  %v498 = vpop.f32.mrb[0].mxu0
  %v499 = vadd.f32 0.0, %v498
  %v500 = vpop.f32.mrb[0].mxu0
  %501 = vmatprep.mubr.bf16.mxu0 0
  %502 = vmatmul.mubr.bf16.gmra.mrb[0].mxu0 %v288
  %v503 = vpop.f32.mrb[0].mxu0
  %v504 = vadd.f32 0.0, %v503
  %v505 = vpop.f32.mrb[0].mxu0
  %v506 = vpop.f32.mrb[0].mxu0
  %v507 = vadd.f32 0.0, %v506
  %v508 = vpop.f32.mrb[0].mxu0
  %509 = vmatprep.mubr.bf16.mxu0 0
  %510 = vmatmul.mubr.bf16.gmra.mrb[0].mxu0 %v291
  %v511 = vpop.f32.mrb[0].mxu0
  %v512 = vadd.f32 0.0, %v511
  %v513 = vpop.f32.mrb[0].mxu0
  %v514 = vpop.f32.mrb[0].mxu0
  %v515 = vadd.f32 0.0, %v514
  %v516 = vpop.f32.mrb[0].mxu0
  %517 = vmatprep.mubr.bf16.mxu0 0
  %518 = vmatmul.mubr.bf16.gmra.mrb[0].mxu0 %v294
  %v519 = vpop.f32.mrb[0].mxu0
  %v520 = vadd.f32 0.0, %v519
  %v521 = vpop.f32.mrb[0].mxu0
  %v522 = vpop.f32.mrb[0].mxu0
  %v523 = vadd.f32 0.0, %v522
  %v524 = vpop.f32.mrb[0].mxu0
  %525 = vmatprep.mubr.bf16.mxu0 0
  %526 = vmatmul.mubr.bf16.gmra.mrb[0].mxu0 %v297
  %v527 = vpop.f32.mrb[0].mxu0
  %v528 = vadd.f32 0.0, %v527
  %v529 = vpop.f32.mrb[0].mxu0
  %v530 = vpop.f32.mrb[0].mxu0
  %v531 = vadd.f32 0.0, %v530
  %v532 = vpop.f32.mrb[0].mxu0
  %533 = vmatprep.mubr.bf16.mxu0 0
  %534 = vmatmul.mubr.bf16.gmra.mrb[0].mxu0 %v300
  %v535 = vpop.f32.mrb[0].mxu0
  %v536 = vadd.f32 0.0, %v535
  %v537 = vpop.f32.mrb[0].mxu0
  %v538 = vpop.f32.mrb[0].mxu0
  %v539 = vpop.f32.mrb[0].mxu0
  %540 = vdwg.mxu0
  %s541 = scalar_lea.vmem %s0, 196
  %v542 = vld [vmem:[%s541] sm:$0xf]
  %v543 = vld [vmem:[%s541 + $0x4] sm:$0xf]
  %v544 = vld [vmem:[%s541 + $0x8] sm:$0xf]
  %v545 = vld [vmem:[%s541 + $0xc] sm:$0xf]
  %v546 = vld [vmem:[%s541 + $0x10] sm:$0xf]
  %v547 = vld [vmem:[%s541 + $0x14] sm:$0xf]
  %v548 = vld [vmem:[%s541 + $0x18] sm:$0xf]
  %v549 = vld [vmem:[%s541 + $0x1c] sm:$0xf]
  %v550 = vld [vmem:[%s541 + $0x20] sm:$0xf]
  %v551 = vld [vmem:[%s541 + $0x24] sm:$0xf]
  %v552 = vld [vmem:[%s541 + $0x28] sm:$0xf]
  %v553 = vld [vmem:[%s541 + $0x2c] sm:$0xf]
  %v554 = vld [vmem:[%s541 + $0x30] sm:$0xf]
  %v555 = vld [vmem:[%s541 + $0x34] sm:$0xf]
  %v556 = vld [vmem:[%s541 + $0x38] sm:$0xf]
  %v557 = vld [vmem:[%s541 + $0x3c] sm:$0xf]
  %v558 = vld [vmem:[%s541 + $0x40] sm:$0xf]
  %v559 = vld [vmem:[%s541 + $0x44] sm:$0xf]
  %v560 = vld [vmem:[%s541 + $0x48] sm:$0xf]
  %v561 = vld [vmem:[%s541 + $0x4c] sm:$0xf]
  %v562 = vld [vmem:[%s541 + $0x50] sm:$0xf]
  %v563 = vld [vmem:[%s541 + $0x54] sm:$0xf]
  %v564 = vld [vmem:[%s541 + $0x58] sm:$0xf]
  %v565 = vld [vmem:[%s541 + $0x5c] sm:$0xf]
  %v566 = vld [vmem:[%s541 + $0x60] sm:$0xf]
  %v567 = vld [vmem:[%s541 + $0x64] sm:$0xf]
  %v568 = vld [vmem:[%s541 + $0x68] sm:$0xf]
  %v569 = vld [vmem:[%s541 + $0x6c] sm:$0xf]
  %v570 = vld [vmem:[%s541 + $0x70] sm:$0xf]
  %v571 = vld [vmem:[%s541 + $0x74] sm:$0xf]
  %v572 = vld [vmem:[%s541 + $0x78] sm:$0xf]
  %v573 = vld [vmem:[%s541 + $0x7c] sm:$0xf]
  %v574 = vld [vmem:[%s541 + $0x80] sm:$0xf]
  %v575 = vld [vmem:[%s541 + $0x84] sm:$0xf]
  %v576 = vld [vmem:[%s541 + $0x88] sm:$0xf]
  %v577 = vld [vmem:[%s541 + $0x8c] sm:$0xf]
  %v578 = vld [vmem:[%s541 + $0x90] sm:$0xf]
  %v579 = vld [vmem:[%s541 + $0x94] sm:$0xf]
  %v580 = vld [vmem:[%s541 + $0x98] sm:$0xf]
  %v581 = vld [vmem:[%s541 + $0x9c] sm:$0xf]
  %v582 = vld [vmem:[%s541 + $0xa0] sm:$0xf]
  %v583 = vld [vmem:[%s541 + $0xa4] sm:$0xf]
  %v584 = vld [vmem:[%s541 + $0xa8] sm:$0xf]
  %v585 = vld [vmem:[%s541 + $0xac] sm:$0xf]
  %v586 = vld [vmem:[%s541 + $0xb0] sm:$0xf]
  %v587 = vld [vmem:[%s541 + $0xb4] sm:$0xf]
  %v588 = vld [vmem:[%s541 + $0xb8] sm:$0xf]
  %v589 = vld [vmem:[%s541 + $0xbc] sm:$0xf]
  %v590 = vld [vmem:[%s541 + $0xc0] sm:$0xf]
  %v640 = vunpack.c.l.b16 %v542
  %v641 = vunpack.c.l.b16 %v543
  %v642 = vunpack.c.l.b16 %v544
  %v643 = vunpack.c.l.b16 %v545
  %v644 = vunpack.c.l.b16 %v546
  %v645 = vunpack.c.l.b16 %v547
  %v646 = vunpack.c.l.b16 %v548
  %v647 = vunpack.c.l.b16 %v549
  %v648 = vunpack.c.l.b16 %v550
  %v649 = vunpack.c.l.b16 %v551
  %v650 = vunpack.c.l.b16 %v552
  %v651 = vunpack.c.l.b16 %v553
  %v652 = vunpack.c.l.b16 %v554
  %v653 = vunpack.c.l.b16 %v555
  %v654 = vunpack.c.l.b16 %v556
  %v655 = vunpack.c.l.b16 %v557
  %v656 = vunpack.c.l.b16 %v558
  %v657 = vunpack.c.l.b16 %v559
  %v658 = vunpack.c.l.b16 %v560
  %v659 = vunpack.c.l.b16 %v561
  %v660 = vunpack.c.l.b16 %v562
  %v661 = vunpack.c.l.b16 %v563
  %v662 = vunpack.c.l.b16 %v564
  %v663 = vunpack.c.l.b16 %v565
  %v664 = vunpack.c.l.b16 %v566
  %v665 = vunpack.c.l.b16 %v567
  %v666 = vunpack.c.l.b16 %v568
  %v667 = vunpack.c.l.b16 %v569
  %v668 = vunpack.c.l.b16 %v570
  %v669 = vunpack.c.l.b16 %v571
  %v670 = vunpack.c.l.b16 %v572
  %v671 = vunpack.c.l.b16 %v573
  %v672 = vunpack.c.l.b16 %v574
  %v673 = vunpack.c.l.b16 %v575
  %v674 = vunpack.c.l.b16 %v576
  %v675 = vunpack.c.l.b16 %v577
  %v676 = vunpack.c.l.b16 %v578
  %v677 = vunpack.c.l.b16 %v579
  %v678 = vunpack.c.l.b16 %v580
  %v679 = vunpack.c.l.b16 %v581
  %v680 = vunpack.c.l.b16 %v582
  %v681 = vunpack.c.l.b16 %v583
  %v682 = vunpack.c.l.b16 %v584
  %v683 = vunpack.c.l.b16 %v585
  %v684 = vunpack.c.l.b16 %v586
  %v685 = vunpack.c.l.b16 %v587
  %v686 = vunpack.c.l.b16 %v588
  %v687 = vunpack.c.l.b16 %v589
  %v688 = vunpack.c.l.b16 %v590
  %v689 = vpack.c.b16 %v641, %v640
  %v690 = vpack.c.b16 %v643, %v642
  %v691 = vpack.c.b16 %v645, %v644
  %v692 = vpack.c.b16 %v647, %v646
  %v693 = vpack.c.b16 %v649, %v648
  %v694 = vpack.c.b16 %v651, %v650
  %v695 = vpack.c.b16 %v653, %v652
  %v696 = vpack.c.b16 %v655, %v654
  %v697 = vpack.c.b16 %v657, %v656
  %v698 = vpack.c.b16 %v659, %v658
  %v699 = vpack.c.b16 %v661, %v660
  %v700 = vpack.c.b16 %v663, %v662
  %v701 = vpack.c.b16 %v665, %v664
  %v702 = vpack.c.b16 %v667, %v666
  %v703 = vpack.c.b16 %v669, %v668
  %v704 = vpack.c.b16 %v671, %v670
  %v705 = vpack.c.b16 %v673, %v672
  %v706 = vpack.c.b16 %v675, %v674
  %v707 = vpack.c.b16 %v677, %v676
  %v708 = vpack.c.b16 %v679, %v678
  %v709 = vpack.c.b16 %v681, %v680
  %v710 = vpack.c.b16 %v683, %v682
  %v711 = vpack.c.b16 %v685, %v684
  %v712 = vpack.c.b16 %v687, %v686
  %v713 = vpack.c.b16 %v688, %v688
  %v715 = vsel %vm226, %v689, 0
  %v718 = vsel %vm226, %v690, 0
  %v721 = vsel %vm226, %v691, 0
  %v724 = vsel %vm226, %v692, 0
  %v727 = vsel %vm226, %v693, 0
  %v730 = vsel %vm226, %v694, 0
  %v733 = vsel %vm226, %v695, 0
  %v736 = vsel %vm226, %v696, 0
  %v739 = vsel %vm226, %v697, 0
  %v742 = vsel %vm226, %v698, 0
  %v745 = vsel %vm226, %v699, 0
  %v748 = vsel %vm226, %v700, 0
  %v751 = vsel %vm226, %v701, 0
  %v754 = vsel %vm226, %v702, 0
  %v757 = vsel %vm226, %v703, 0
  %v760 = vsel %vm226, %v704, 0
  %v763 = vsel %vm226, %v705, 0
  %v766 = vsel %vm226, %v706, 0
  %v769 = vsel %vm226, %v707, 0
  %v772 = vsel %vm226, %v708, 0
  %v775 = vsel %vm226, %v709, 0
  %v778 = vsel %vm226, %v710, 0
  %v781 = vsel %vm226, %v711, 0
  %v784 = vsel %vm226, %v712, 0
  %v787 = vsel %vm226, %v713, 0
  %789 = vmatprep.subr.bf16.mxu0 0
  %790 = vmatpush1.bf16.msra.mxu0 %v217
  %791 = vmatprep.subr.bf16.mxu0 0
  %792 = vmatpush1.bf16.msra.mxu0 %v218
  %793 = vmatprep.subr.bf16.mxu0 0
  %794 = vmatpush1.bf16.msra.mxu0 %v219
  %795 = vmatprep.subr.bf16.mxu0 0
  %796 = vmatpush1.bf16.msra.mxu0 %v220
  %797 = vmatprep.subr.bf16.mxu0 0
  %798 = vmatpush1.bf16.msra.mxu0 %v307
  %799 = vmatprep.subr.bf16.mxu0 0
  %800 = vmatpush1.bf16.msra.mxu0 0
  %801 = vmatprep.subr.bf16.mxu0 0
  %802 = vmatpush1.bf16.msra.mxu0 0
  %803 = vmatprep.subr.bf16.mxu0 0
  %804 = vmatpush1.bf16.msra.mxu0 0
  %805 = vmatprep.subr.bf16.mxu0 0
  %806 = vmatpush1.bf16.msra.mxu0 0
  %807 = vmatprep.subr.bf16.mxu0 0
  %808 = vmatpush1.bf16.msra.mxu0 0
  %809 = vmatprep.subr.bf16.mxu0 0
  %810 = vmatpush1.bf16.msra.mxu0 0
  %811 = vmatprep.subr.bf16.mxu0 0
  %812 = vmatpush1.bf16.msra.mxu0 0
  %813 = vmatprep.subr.bf16.mxu0 0
  %814 = vmatpush1.bf16.msra.mxu0 0
  %815 = vmatprep.subr.bf16.mxu0 0
  %816 = vmatpush1.bf16.msra.mxu0 0
  %817 = vmatprep.subr.bf16.mxu0 0
  %818 = vmatpush1.bf16.msra.mxu0 0
  %819 = vmatprep.subr.bf16.mxu0 0
  %820 = vmatpush1.bf16.msra.mxu0 0
  %821 = vmatprep.mubr.bf16.mxu0 0
  %822 = vmatmul.mubr.bf16.gmra.mrb[0].mxu0 %v715
  %v823 = vpop.f32.mrb[0].mxu0
  %v824 = vadd.f32 0.0, %v823
  %v825 = vpop.f32.mrb[0].mxu0
  %v826 = vpop.f32.mrb[0].mxu0
  %v827 = vadd.f32 0.0, %v826
  %v828 = vpop.f32.mrb[0].mxu0
  %829 = vmatprep.mubr.bf16.mxu0 0
  %830 = vmatmul.mubr.bf16.gmra.mrb[0].mxu0 %v718
  %v831 = vpop.f32.mrb[0].mxu0
  %v832 = vadd.f32 0.0, %v831
  %v833 = vpop.f32.mrb[0].mxu0
  %v834 = vpop.f32.mrb[0].mxu0
  %v835 = vadd.f32 0.0, %v834
  %v836 = vpop.f32.mrb[0].mxu0
  %837 = vmatprep.mubr.bf16.mxu0 0
  %838 = vmatmul.mubr.bf16.gmra.mrb[0].mxu0 %v721
  %v839 = vpop.f32.mrb[0].mxu0
  %v840 = vadd.f32 0.0, %v839
  %v841 = vpop.f32.mrb[0].mxu0
  %v842 = vpop.f32.mrb[0].mxu0
  %v843 = vadd.f32 0.0, %v842
  %v844 = vpop.f32.mrb[0].mxu0
  %845 = vmatprep.mubr.bf16.mxu0 0
  %846 = vmatmul.mubr.bf16.gmra.mrb[0].mxu0 %v724
  %v847 = vpop.f32.mrb[0].mxu0
  %v848 = vadd.f32 0.0, %v847
  %v849 = vpop.f32.mrb[0].mxu0
  %v850 = vpop.f32.mrb[0].mxu0
  %v851 = vadd.f32 0.0, %v850
  %v852 = vpop.f32.mrb[0].mxu0
  %853 = vmatprep.mubr.bf16.mxu0 0
  %854 = vmatmul.mubr.bf16.gmra.mrb[0].mxu0 %v727
  %v855 = vpop.f32.mrb[0].mxu0
  %v856 = vadd.f32 0.0, %v855
  %v857 = vpop.f32.mrb[0].mxu0
  %v858 = vpop.f32.mrb[0].mxu0
  %v859 = vadd.f32 0.0, %v858
  %v860 = vpop.f32.mrb[0].mxu0
  %861 = vmatprep.mubr.bf16.mxu0 0
  %862 = vmatmul.mubr.bf16.gmra.mrb[0].mxu0 %v730
  %v863 = vpop.f32.mrb[0].mxu0
  %v864 = vadd.f32 0.0, %v863
  %v865 = vpop.f32.mrb[0].mxu0
  %v866 = vpop.f32.mrb[0].mxu0
  %v867 = vadd.f32 0.0, %v866
  %v868 = vpop.f32.mrb[0].mxu0
  %869 = vmatprep.mubr.bf16.mxu0 0
  %870 = vmatmul.mubr.bf16.gmra.mrb[0].mxu0 %v733
  %v871 = vpop.f32.mrb[0].mxu0
  %v872 = vadd.f32 0.0, %v871
  %v873 = vpop.f32.mrb[0].mxu0
  %v874 = vpop.f32.mrb[0].mxu0
  %v875 = vadd.f32 0.0, %v874
  %v876 = vpop.f32.mrb[0].mxu0
  %877 = vmatprep.mubr.bf16.mxu0 0
  %878 = vmatmul.mubr.bf16.gmra.mrb[0].mxu0 %v736
  %v879 = vpop.f32.mrb[0].mxu0
  %v880 = vadd.f32 0.0, %v879
  %v881 = vpop.f32.mrb[0].mxu0
  %v882 = vpop.f32.mrb[0].mxu0
  %v883 = vadd.f32 0.0, %v882
  %v884 = vpop.f32.mrb[0].mxu0
  %885 = vmatprep.mubr.bf16.mxu0 0
  %886 = vmatmul.mubr.bf16.gmra.mrb[0].mxu0 %v739
  %v887 = vpop.f32.mrb[0].mxu0
  %v888 = vadd.f32 0.0, %v887
  %v889 = vpop.f32.mrb[0].mxu0
  %v890 = vpop.f32.mrb[0].mxu0
  %v891 = vadd.f32 0.0, %v890
  %v892 = vpop.f32.mrb[0].mxu0
  %893 = vmatprep.mubr.bf16.mxu0 0
  %894 = vmatmul.mubr.bf16.gmra.mrb[0].mxu0 %v742
  %v895 = vpop.f32.mrb[0].mxu0
  %v896 = vadd.f32 0.0, %v895
  %v897 = vpop.f32.mrb[0].mxu0
  %v898 = vpop.f32.mrb[0].mxu0
  %v899 = vadd.f32 0.0, %v898
  %v900 = vpop.f32.mrb[0].mxu0
  %901 = vmatprep.mubr.bf16.mxu0 0
  %902 = vmatmul.mubr.bf16.gmra.mrb[0].mxu0 %v745
  %v903 = vpop.f32.mrb[0].mxu0
  %v904 = vadd.f32 0.0, %v903
  %v905 = vpop.f32.mrb[0].mxu0
  %v906 = vpop.f32.mrb[0].mxu0
  %v907 = vadd.f32 0.0, %v906
  %v908 = vpop.f32.mrb[0].mxu0
  %909 = vmatprep.mubr.bf16.mxu0 0
  %910 = vmatmul.mubr.bf16.gmra.mrb[0].mxu0 %v748
  %v911 = vpop.f32.mrb[0].mxu0
  %v912 = vadd.f32 0.0, %v911
  %v913 = vpop.f32.mrb[0].mxu0
  %v914 = vpop.f32.mrb[0].mxu0
  %v915 = vadd.f32 0.0, %v914
  %v916 = vpop.f32.mrb[0].mxu0
  %917 = vmatprep.mubr.bf16.mxu0 0
  %918 = vmatmul.mubr.bf16.gmra.mrb[0].mxu0 %v751
  %v919 = vpop.f32.mrb[0].mxu0
  %v920 = vadd.f32 0.0, %v919
  %v921 = vpop.f32.mrb[0].mxu0
  %v922 = vpop.f32.mrb[0].mxu0
  %v923 = vadd.f32 0.0, %v922
  %v924 = vpop.f32.mrb[0].mxu0
  %925 = vmatprep.mubr.bf16.mxu0 0
  %926 = vmatmul.mubr.bf16.gmra.mrb[0].mxu0 %v754
  %v927 = vpop.f32.mrb[0].mxu0
  %v928 = vadd.f32 0.0, %v927
  %v929 = vpop.f32.mrb[0].mxu0
  %v930 = vpop.f32.mrb[0].mxu0
  %v931 = vadd.f32 0.0, %v930
  %v932 = vpop.f32.mrb[0].mxu0
  %933 = vmatprep.mubr.bf16.mxu0 0
  %934 = vmatmul.mubr.bf16.gmra.mrb[0].mxu0 %v757
  %v935 = vpop.f32.mrb[0].mxu0
  %v936 = vadd.f32 0.0, %v935
  %v937 = vpop.f32.mrb[0].mxu0
  %v938 = vpop.f32.mrb[0].mxu0
  %v939 = vadd.f32 0.0, %v938
  %v940 = vpop.f32.mrb[0].mxu0
  %941 = vmatprep.mubr.bf16.mxu0 0
  %942 = vmatmul.mubr.bf16.gmra.mrb[0].mxu0 %v760
  %v943 = vpop.f32.mrb[0].mxu0
  %v944 = vadd.f32 0.0, %v943
  %v945 = vpop.f32.mrb[0].mxu0
  %v946 = vpop.f32.mrb[0].mxu0
  %v947 = vadd.f32 0.0, %v946
  %v948 = vpop.f32.mrb[0].mxu0
  %949 = vmatprep.mubr.bf16.mxu0 0
  %950 = vmatmul.mubr.bf16.gmra.mrb[0].mxu0 %v763
  %v951 = vpop.f32.mrb[0].mxu0
  %v952 = vadd.f32 0.0, %v951
  %v953 = vpop.f32.mrb[0].mxu0
  %v954 = vpop.f32.mrb[0].mxu0
  %v955 = vadd.f32 0.0, %v954
  %v956 = vpop.f32.mrb[0].mxu0
  %957 = vmatprep.mubr.bf16.mxu0 0
  %958 = vmatmul.mubr.bf16.gmra.mrb[0].mxu0 %v766
  %v959 = vpop.f32.mrb[0].mxu0
  %v960 = vadd.f32 0.0, %v959
  %v961 = vpop.f32.mrb[0].mxu0
  %v962 = vpop.f32.mrb[0].mxu0
  %v963 = vadd.f32 0.0, %v962
  %v964 = vpop.f32.mrb[0].mxu0
  %965 = vmatprep.mubr.bf16.mxu0 0
  %966 = vmatmul.mubr.bf16.gmra.mrb[0].mxu0 %v769
  %v967 = vpop.f32.mrb[0].mxu0
  %v968 = vadd.f32 0.0, %v967
  %v969 = vpop.f32.mrb[0].mxu0
  %v970 = vpop.f32.mrb[0].mxu0
  %v971 = vadd.f32 0.0, %v970
  %v972 = vpop.f32.mrb[0].mxu0
  %973 = vmatprep.mubr.bf16.mxu0 0
  %974 = vmatmul.mubr.bf16.gmra.mrb[0].mxu0 %v772
  %v975 = vpop.f32.mrb[0].mxu0
  %v976 = vadd.f32 0.0, %v975
  %v977 = vpop.f32.mrb[0].mxu0
  %v978 = vpop.f32.mrb[0].mxu0
  %v979 = vadd.f32 0.0, %v978
  %v980 = vpop.f32.mrb[0].mxu0
  %981 = vmatprep.mubr.bf16.mxu0 0
  %982 = vmatmul.mubr.bf16.gmra.mrb[0].mxu0 %v775
  %v983 = vpop.f32.mrb[0].mxu0
  %v984 = vadd.f32 0.0, %v983
  %v985 = vpop.f32.mrb[0].mxu0
  %v986 = vpop.f32.mrb[0].mxu0
  %v987 = vadd.f32 0.0, %v986
  %v988 = vpop.f32.mrb[0].mxu0
  %989 = vmatprep.mubr.bf16.mxu0 0
  %990 = vmatmul.mubr.bf16.gmra.mrb[0].mxu0 %v778
  %v991 = vpop.f32.mrb[0].mxu0
  %v992 = vadd.f32 0.0, %v991
  %v993 = vpop.f32.mrb[0].mxu0
  %v994 = vpop.f32.mrb[0].mxu0
  %v995 = vadd.f32 0.0, %v994
  %v996 = vpop.f32.mrb[0].mxu0
  %997 = vmatprep.mubr.bf16.mxu0 0
  %998 = vmatmul.mubr.bf16.gmra.mrb[0].mxu0 %v781
  %v999 = vpop.f32.mrb[0].mxu0
  %v1000 = vadd.f32 0.0, %v999
  %v1001 = vpop.f32.mrb[0].mxu0
  %v1002 = vpop.f32.mrb[0].mxu0
  %v1003 = vadd.f32 0.0, %v1002
  %v1004 = vpop.f32.mrb[0].mxu0
  %1005 = vmatprep.mubr.bf16.mxu0 0
  %1006 = vmatmul.mubr.bf16.gmra.mrb[0].mxu0 %v784
  %v1007 = vpop.f32.mrb[0].mxu0
  %v1008 = vadd.f32 0.0, %v1007
  %v1009 = vpop.f32.mrb[0].mxu0
  %v1010 = vpop.f32.mrb[0].mxu0
  %v1011 = vadd.f32 0.0, %v1010
  %v1012 = vpop.f32.mrb[0].mxu0
  %1013 = vmatprep.mubr.bf16.mxu0 0
  %1014 = vmatmul.mubr.bf16.gmra.mrb[0].mxu0 %v787
  %v1015 = vpop.f32.mrb[0].mxu0
  %v1016 = vadd.f32 0.0, %v1015
  %v1017 = vpop.f32.mrb[0].mxu0
  %v1018 = vpop.f32.mrb[0].mxu0
  %v1019 = vpop.f32.mrb[0].mxu0
  %1020 = vdwg.mxu0
  %v1021 = vmax.f32 %v344, %v824
  %v1022 = vmax.f32 %v347, %v827
  %v1023 = vmax.f32 %v352, %v832
  %v1024 = vmax.f32 %v355, %v835
  %v1025 = vmax.f32 %v360, %v840
  %v1026 = vmax.f32 %v363, %v843
  %v1027 = vmax.f32 %v368, %v848
  %v1028 = vmax.f32 %v371, %v851
  %v1029 = vmax.f32 %v376, %v856
  %v1030 = vmax.f32 %v379, %v859
  %v1031 = vmax.f32 %v384, %v864
  %v1032 = vmax.f32 %v387, %v867
  %v1033 = vmax.f32 %v392, %v872
  %v1034 = vmax.f32 %v395, %v875
  %v1035 = vmax.f32 %v400, %v880
  %v1036 = vmax.f32 %v403, %v883
  %v1037 = vmax.f32 %v408, %v888
  %v1038 = vmax.f32 %v411, %v891
  %v1039 = vmax.f32 %v416, %v896
  %v1040 = vmax.f32 %v419, %v899
  %v1041 = vmax.f32 %v424, %v904
  %v1042 = vmax.f32 %v427, %v907
  %v1043 = vmax.f32 %v432, %v912
  %v1044 = vmax.f32 %v435, %v915
  %v1045 = vmax.f32 %v440, %v920
  %v1046 = vmax.f32 %v443, %v923
  %v1047 = vmax.f32 %v448, %v928
  %v1048 = vmax.f32 %v451, %v931
  %v1049 = vmax.f32 %v456, %v936
  %v1050 = vmax.f32 %v459, %v939
  %v1051 = vmax.f32 %v464, %v944
  %v1052 = vmax.f32 %v467, %v947
  %v1053 = vmax.f32 %v472, %v952
  %v1054 = vmax.f32 %v475, %v955
  %v1055 = vmax.f32 %v480, %v960
  %v1056 = vmax.f32 %v483, %v963
  %v1057 = vmax.f32 %v488, %v968
  %v1058 = vmax.f32 %v491, %v971
  %v1059 = vmax.f32 %v496, %v976
  %v1060 = vmax.f32 %v499, %v979
  %v1061 = vmax.f32 %v504, %v984
  %v1062 = vmax.f32 %v507, %v987
  %v1063 = vmax.f32 %v512, %v992
  %v1064 = vmax.f32 %v515, %v995
  %v1065 = vmax.f32 %v520, %v1000
  %v1066 = vmax.f32 %v523, %v1003
  %v1067 = vmax.f32 %v528, %v1008
  %v1068 = vmax.f32 %v531, %v1011
  %v1069 = vmax.f32 %v536, %v1016
  %s1070 = scalar_lea.vmem %s0, 392
  %v1071 = vld [vmem:[%s1070] sm:$0xf]
  %v1072 = vld [vmem:[%s1070 + $0x4] sm:$0xf]
  %v1073 = vld [vmem:[%s1070 + $0x8] sm:$0xf]
  %v1074 = vld [vmem:[%s1070 + $0xc] sm:$0xf]
  %v1075 = vld [vmem:[%s1070 + $0x10] sm:$0xf]
  %v1076 = vld [vmem:[%s1070 + $0x14] sm:$0xf]
  %v1077 = vld [vmem:[%s1070 + $0x18] sm:$0xf]
  %v1078 = vld [vmem:[%s1070 + $0x1c] sm:$0xf]
  %v1079 = vld [vmem:[%s1070 + $0x20] sm:$0xf]
  %v1080 = vld [vmem:[%s1070 + $0x24] sm:$0xf]
  %v1081 = vld [vmem:[%s1070 + $0x28] sm:$0xf]
  %v1082 = vld [vmem:[%s1070 + $0x2c] sm:$0xf]
  %v1083 = vld [vmem:[%s1070 + $0x30] sm:$0xf]
  %v1084 = vld [vmem:[%s1070 + $0x34] sm:$0xf]
  %v1085 = vld [vmem:[%s1070 + $0x38] sm:$0xf]
  %v1086 = vld [vmem:[%s1070 + $0x3c] sm:$0xf]
  %v1087 = vld [vmem:[%s1070 + $0x40] sm:$0xf]
  %v1088 = vld [vmem:[%s1070 + $0x44] sm:$0xf]
  %v1089 = vld [vmem:[%s1070 + $0x48] sm:$0xf]
  %v1090 = vld [vmem:[%s1070 + $0x4c] sm:$0xf]
  %v1091 = vld [vmem:[%s1070 + $0x50] sm:$0xf]
  %v1092 = vld [vmem:[%s1070 + $0x54] sm:$0xf]
  %v1093 = vld [vmem:[%s1070 + $0x58] sm:$0xf]
  %v1094 = vld [vmem:[%s1070 + $0x5c] sm:$0xf]
  %v1095 = vld [vmem:[%s1070 + $0x60] sm:$0xf]
  %v1096 = vld [vmem:[%s1070 + $0x64] sm:$0xf]
  %v1097 = vld [vmem:[%s1070 + $0x68] sm:$0xf]
  %v1098 = vld [vmem:[%s1070 + $0x6c] sm:$0xf]
  %v1099 = vld [vmem:[%s1070 + $0x70] sm:$0xf]
  %v1100 = vld [vmem:[%s1070 + $0x74] sm:$0xf]
  %v1101 = vld [vmem:[%s1070 + $0x78] sm:$0xf]
  %v1102 = vld [vmem:[%s1070 + $0x7c] sm:$0xf]
  %v1103 = vld [vmem:[%s1070 + $0x80] sm:$0xf]
  %v1104 = vld [vmem:[%s1070 + $0x84] sm:$0xf]
  %v1105 = vld [vmem:[%s1070 + $0x88] sm:$0xf]
  %v1106 = vld [vmem:[%s1070 + $0x8c] sm:$0xf]
  %v1107 = vld [vmem:[%s1070 + $0x90] sm:$0xf]
  %v1108 = vld [vmem:[%s1070 + $0x94] sm:$0xf]
  %v1109 = vld [vmem:[%s1070 + $0x98] sm:$0xf]
  %v1110 = vld [vmem:[%s1070 + $0x9c] sm:$0xf]
  %v1111 = vld [vmem:[%s1070 + $0xa0] sm:$0xf]
  %v1112 = vld [vmem:[%s1070 + $0xa4] sm:$0xf]
  %v1113 = vld [vmem:[%s1070 + $0xa8] sm:$0xf]
  %v1114 = vld [vmem:[%s1070 + $0xac] sm:$0xf]
  %v1115 = vld [vmem:[%s1070 + $0xb0] sm:$0xf]
  %v1116 = vld [vmem:[%s1070 + $0xb4] sm:$0xf]
  %v1117 = vld [vmem:[%s1070 + $0xb8] sm:$0xf]
  %v1118 = vld [vmem:[%s1070 + $0xbc] sm:$0xf]
  %v1119 = vld [vmem:[%s1070 + $0xc0] sm:$0xf]
  %v1169 = vunpack.c.l.b16 %v1071
  %v1170 = vunpack.c.l.b16 %v1072
  %v1171 = vunpack.c.l.b16 %v1073
  %v1172 = vunpack.c.l.b16 %v1074
  %v1173 = vunpack.c.l.b16 %v1075
  %v1174 = vunpack.c.l.b16 %v1076
  %v1175 = vunpack.c.l.b16 %v1077
  %v1176 = vunpack.c.l.b16 %v1078
  %v1177 = vunpack.c.l.b16 %v1079
  %v1178 = vunpack.c.l.b16 %v1080
  %v1179 = vunpack.c.l.b16 %v1081
  %v1180 = vunpack.c.l.b16 %v1082
  %v1181 = vunpack.c.l.b16 %v1083
  %v1182 = vunpack.c.l.b16 %v1084
  %v1183 = vunpack.c.l.b16 %v1085
  %v1184 = vunpack.c.l.b16 %v1086
  %v1185 = vunpack.c.l.b16 %v1087
  %v1186 = vunpack.c.l.b16 %v1088
  %v1187 = vunpack.c.l.b16 %v1089
  %v1188 = vunpack.c.l.b16 %v1090
  %v1189 = vunpack.c.l.b16 %v1091
  %v1190 = vunpack.c.l.b16 %v1092
  %v1191 = vunpack.c.l.b16 %v1093
  %v1192 = vunpack.c.l.b16 %v1094
  %v1193 = vunpack.c.l.b16 %v1095
  %v1194 = vunpack.c.l.b16 %v1096
  %v1195 = vunpack.c.l.b16 %v1097
  %v1196 = vunpack.c.l.b16 %v1098
  %v1197 = vunpack.c.l.b16 %v1099
  %v1198 = vunpack.c.l.b16 %v1100
  %v1199 = vunpack.c.l.b16 %v1101
  %v1200 = vunpack.c.l.b16 %v1102
  %v1201 = vunpack.c.l.b16 %v1103
  %v1202 = vunpack.c.l.b16 %v1104
  %v1203 = vunpack.c.l.b16 %v1105
  %v1204 = vunpack.c.l.b16 %v1106
  %v1205 = vunpack.c.l.b16 %v1107
  %v1206 = vunpack.c.l.b16 %v1108
  %v1207 = vunpack.c.l.b16 %v1109
  %v1208 = vunpack.c.l.b16 %v1110
  %v1209 = vunpack.c.l.b16 %v1111
  %v1210 = vunpack.c.l.b16 %v1112
  %v1211 = vunpack.c.l.b16 %v1113
  %v1212 = vunpack.c.l.b16 %v1114
  %v1213 = vunpack.c.l.b16 %v1115
  %v1214 = vunpack.c.l.b16 %v1116
  %v1215 = vunpack.c.l.b16 %v1117
  %v1216 = vunpack.c.l.b16 %v1118
  %v1217 = vunpack.c.l.b16 %v1119
  %v1218 = vpack.c.b16 %v1170, %v1169
  %v1219 = vpack.c.b16 %v1172, %v1171
  %v1220 = vpack.c.b16 %v1174, %v1173
  %v1221 = vpack.c.b16 %v1176, %v1175
  %v1222 = vpack.c.b16 %v1178, %v1177
  %v1223 = vpack.c.b16 %v1180, %v1179
  %v1224 = vpack.c.b16 %v1182, %v1181
  %v1225 = vpack.c.b16 %v1184, %v1183
  %v1226 = vpack.c.b16 %v1186, %v1185
  %v1227 = vpack.c.b16 %v1188, %v1187
  %v1228 = vpack.c.b16 %v1190, %v1189
  %v1229 = vpack.c.b16 %v1192, %v1191
  %v1230 = vpack.c.b16 %v1194, %v1193
  %v1231 = vpack.c.b16 %v1196, %v1195
  %v1232 = vpack.c.b16 %v1198, %v1197
  %v1233 = vpack.c.b16 %v1200, %v1199
  %v1234 = vpack.c.b16 %v1202, %v1201
  %v1235 = vpack.c.b16 %v1204, %v1203
  %v1236 = vpack.c.b16 %v1206, %v1205
  %v1237 = vpack.c.b16 %v1208, %v1207
  %v1238 = vpack.c.b16 %v1210, %v1209
  %v1239 = vpack.c.b16 %v1212, %v1211
  %v1240 = vpack.c.b16 %v1214, %v1213
  %v1241 = vpack.c.b16 %v1216, %v1215
  %v1242 = vpack.c.b16 %v1217, %v1217
  %v1244 = vsel %vm226, %v1218, 0
  %v1247 = vsel %vm226, %v1219, 0
  %v1250 = vsel %vm226, %v1220, 0
  %v1253 = vsel %vm226, %v1221, 0
  %v1256 = vsel %vm226, %v1222, 0
  %v1259 = vsel %vm226, %v1223, 0
  %v1262 = vsel %vm226, %v1224, 0
  %v1265 = vsel %vm226, %v1225, 0
  %v1268 = vsel %vm226, %v1226, 0
  %v1271 = vsel %vm226, %v1227, 0
  %v1274 = vsel %vm226, %v1228, 0
  %v1277 = vsel %vm226, %v1229, 0
  %v1280 = vsel %vm226, %v1230, 0
  %v1283 = vsel %vm226, %v1231, 0
  %v1286 = vsel %vm226, %v1232, 0
  %v1289 = vsel %vm226, %v1233, 0
  %v1292 = vsel %vm226, %v1234, 0
  %v1295 = vsel %vm226, %v1235, 0
  %v1298 = vsel %vm226, %v1236, 0
  %v1301 = vsel %vm226, %v1237, 0
  %v1304 = vsel %vm226, %v1238, 0
  %v1307 = vsel %vm226, %v1239, 0
  %v1310 = vsel %vm226, %v1240, 0
  %v1313 = vsel %vm226, %v1241, 0
  %v1316 = vsel %vm226, %v1242, 0
  %1318 = vmatprep.subr.bf16.mxu0 0
  %1319 = vmatpush1.bf16.msra.mxu0 %v217
  %1320 = vmatprep.subr.bf16.mxu0 0
  %1321 = vmatpush1.bf16.msra.mxu0 %v218
  %1322 = vmatprep.subr.bf16.mxu0 0
  %1323 = vmatpush1.bf16.msra.mxu0 %v219
  %1324 = vmatprep.subr.bf16.mxu0 0
  %1325 = vmatpush1.bf16.msra.mxu0 %v220
  %1326 = vmatprep.subr.bf16.mxu0 0
  %1327 = vmatpush1.bf16.msra.mxu0 %v307
  %1328 = vmatprep.subr.bf16.mxu0 0
  %1329 = vmatpush1.bf16.msra.mxu0 0
  %1330 = vmatprep.subr.bf16.mxu0 0
  %1331 = vmatpush1.bf16.msra.mxu0 0
  %1332 = vmatprep.subr.bf16.mxu0 0
  %1333 = vmatpush1.bf16.msra.mxu0 0
  %1334 = vmatprep.subr.bf16.mxu0 0
  %1335 = vmatpush1.bf16.msra.mxu0 0
  %1336 = vmatprep.subr.bf16.mxu0 0
  %1337 = vmatpush1.bf16.msra.mxu0 0
  %1338 = vmatprep.subr.bf16.mxu0 0
  %1339 = vmatpush1.bf16.msra.mxu0 0
  %1340 = vmatprep.subr.bf16.mxu0 0
  %1341 = vmatpush1.bf16.msra.mxu0 0
  %1342 = vmatprep.subr.bf16.mxu0 0
  %1343 = vmatpush1.bf16.msra.mxu0 0
  %1344 = vmatprep.subr.bf16.mxu0 0
  %1345 = vmatpush1.bf16.msra.mxu0 0
  %1346 = vmatprep.subr.bf16.mxu0 0
  %1347 = vmatpush1.bf16.msra.mxu0 0
  %1348 = vmatprep.subr.bf16.mxu0 0
  %1349 = vmatpush1.bf16.msra.mxu0 0
  %1350 = vmatprep.mubr.bf16.mxu0 0
  %1351 = vmatmul.mubr.bf16.gmra.mrb[0].mxu0 %v1244
  %v1352 = vpop.f32.mrb[0].mxu0
  %v1353 = vadd.f32 0.0, %v1352
  %v1354 = vpop.f32.mrb[0].mxu0
  %v1355 = vpop.f32.mrb[0].mxu0
  %v1356 = vadd.f32 0.0, %v1355
  %v1357 = vpop.f32.mrb[0].mxu0
  %1358 = vmatprep.mubr.bf16.mxu0 0
  %1359 = vmatmul.mubr.bf16.gmra.mrb[0].mxu0 %v1247
  %v1360 = vpop.f32.mrb[0].mxu0
  %v1361 = vadd.f32 0.0, %v1360
  %v1362 = vpop.f32.mrb[0].mxu0
  %v1363 = vpop.f32.mrb[0].mxu0
  %v1364 = vadd.f32 0.0, %v1363
  %v1365 = vpop.f32.mrb[0].mxu0
  %1366 = vmatprep.mubr.bf16.mxu0 0
  %1367 = vmatmul.mubr.bf16.gmra.mrb[0].mxu0 %v1250
  %v1368 = vpop.f32.mrb[0].mxu0
  %v1369 = vadd.f32 0.0, %v1368
  %v1370 = vpop.f32.mrb[0].mxu0
  %v1371 = vpop.f32.mrb[0].mxu0
  %v1372 = vadd.f32 0.0, %v1371
  %v1373 = vpop.f32.mrb[0].mxu0
  %1374 = vmatprep.mubr.bf16.mxu0 0
  %1375 = vmatmul.mubr.bf16.gmra.mrb[0].mxu0 %v1253
  %v1376 = vpop.f32.mrb[0].mxu0
  %v1377 = vadd.f32 0.0, %v1376
  %v1378 = vpop.f32.mrb[0].mxu0
  %v1379 = vpop.f32.mrb[0].mxu0
  %v1380 = vadd.f32 0.0, %v1379
  %v1381 = vpop.f32.mrb[0].mxu0
  %1382 = vmatprep.mubr.bf16.mxu0 0
  %1383 = vmatmul.mubr.bf16.gmra.mrb[0].mxu0 %v1256
  %v1384 = vpop.f32.mrb[0].mxu0
  %v1385 = vadd.f32 0.0, %v1384
  %v1386 = vpop.f32.mrb[0].mxu0
  %v1387 = vpop.f32.mrb[0].mxu0
  %v1388 = vadd.f32 0.0, %v1387
  %v1389 = vpop.f32.mrb[0].mxu0
  %1390 = vmatprep.mubr.bf16.mxu0 0
  %1391 = vmatmul.mubr.bf16.gmra.mrb[0].mxu0 %v1259
  %v1392 = vpop.f32.mrb[0].mxu0
  %v1393 = vadd.f32 0.0, %v1392
  %v1394 = vpop.f32.mrb[0].mxu0
  %v1395 = vpop.f32.mrb[0].mxu0
  %v1396 = vadd.f32 0.0, %v1395
  %v1397 = vpop.f32.mrb[0].mxu0
  %1398 = vmatprep.mubr.bf16.mxu0 0
  %1399 = vmatmul.mubr.bf16.gmra.mrb[0].mxu0 %v1262
  %v1400 = vpop.f32.mrb[0].mxu0
  %v1401 = vadd.f32 0.0, %v1400
  %v1402 = vpop.f32.mrb[0].mxu0
  %v1403 = vpop.f32.mrb[0].mxu0
  %v1404 = vadd.f32 0.0, %v1403
  %v1405 = vpop.f32.mrb[0].mxu0
  %1406 = vmatprep.mubr.bf16.mxu0 0
  %1407 = vmatmul.mubr.bf16.gmra.mrb[0].mxu0 %v1265
  %v1408 = vpop.f32.mrb[0].mxu0
  %v1409 = vadd.f32 0.0, %v1408
  %v1410 = vpop.f32.mrb[0].mxu0
  %v1411 = vpop.f32.mrb[0].mxu0
  %v1412 = vadd.f32 0.0, %v1411
  %v1413 = vpop.f32.mrb[0].mxu0
  %1414 = vmatprep.mubr.bf16.mxu0 0
  %1415 = vmatmul.mubr.bf16.gmra.mrb[0].mxu0 %v1268
  %v1416 = vpop.f32.mrb[0].mxu0
  %v1417 = vadd.f32 0.0, %v1416
  %v1418 = vpop.f32.mrb[0].mxu0
  %v1419 = vpop.f32.mrb[0].mxu0
  %v1420 = vadd.f32 0.0, %v1419
  %v1421 = vpop.f32.mrb[0].mxu0
  %1422 = vmatprep.mubr.bf16.mxu0 0
  %1423 = vmatmul.mubr.bf16.gmra.mrb[0].mxu0 %v1271
  %v1424 = vpop.f32.mrb[0].mxu0
  %v1425 = vadd.f32 0.0, %v1424
  %v1426 = vpop.f32.mrb[0].mxu0
  %v1427 = vpop.f32.mrb[0].mxu0
  %v1428 = vadd.f32 0.0, %v1427
  %v1429 = vpop.f32.mrb[0].mxu0
  %1430 = vmatprep.mubr.bf16.mxu0 0
  %1431 = vmatmul.mubr.bf16.gmra.mrb[0].mxu0 %v1274
  %v1432 = vpop.f32.mrb[0].mxu0
  %v1433 = vadd.f32 0.0, %v1432
  %v1434 = vpop.f32.mrb[0].mxu0
  %v1435 = vpop.f32.mrb[0].mxu0
  %v1436 = vadd.f32 0.0, %v1435
  %v1437 = vpop.f32.mrb[0].mxu0
  %1438 = vmatprep.mubr.bf16.mxu0 0
  %1439 = vmatmul.mubr.bf16.gmra.mrb[0].mxu0 %v1277
  %v1440 = vpop.f32.mrb[0].mxu0
  %v1441 = vadd.f32 0.0, %v1440
  %v1442 = vpop.f32.mrb[0].mxu0
  %v1443 = vpop.f32.mrb[0].mxu0
  %v1444 = vadd.f32 0.0, %v1443
  %v1445 = vpop.f32.mrb[0].mxu0
  %1446 = vmatprep.mubr.bf16.mxu0 0
  %1447 = vmatmul.mubr.bf16.gmra.mrb[0].mxu0 %v1280
  %v1448 = vpop.f32.mrb[0].mxu0
  %v1449 = vadd.f32 0.0, %v1448
  %v1450 = vpop.f32.mrb[0].mxu0
  %v1451 = vpop.f32.mrb[0].mxu0
  %v1452 = vadd.f32 0.0, %v1451
  %v1453 = vpop.f32.mrb[0].mxu0
  %1454 = vmatprep.mubr.bf16.mxu0 0
  %1455 = vmatmul.mubr.bf16.gmra.mrb[0].mxu0 %v1283
  %v1456 = vpop.f32.mrb[0].mxu0
  %v1457 = vadd.f32 0.0, %v1456
  %v1458 = vpop.f32.mrb[0].mxu0
  %v1459 = vpop.f32.mrb[0].mxu0
  %v1460 = vadd.f32 0.0, %v1459
  %v1461 = vpop.f32.mrb[0].mxu0
  %1462 = vmatprep.mubr.bf16.mxu0 0
  %1463 = vmatmul.mubr.bf16.gmra.mrb[0].mxu0 %v1286
  %v1464 = vpop.f32.mrb[0].mxu0
  %v1465 = vadd.f32 0.0, %v1464
  %v1466 = vpop.f32.mrb[0].mxu0
  %v1467 = vpop.f32.mrb[0].mxu0
  %v1468 = vadd.f32 0.0, %v1467
  %v1469 = vpop.f32.mrb[0].mxu0
  %1470 = vmatprep.mubr.bf16.mxu0 0
  %1471 = vmatmul.mubr.bf16.gmra.mrb[0].mxu0 %v1289
  %v1472 = vpop.f32.mrb[0].mxu0
  %v1473 = vadd.f32 0.0, %v1472
  %v1474 = vpop.f32.mrb[0].mxu0
  %v1475 = vpop.f32.mrb[0].mxu0
  %v1476 = vadd.f32 0.0, %v1475
  %v1477 = vpop.f32.mrb[0].mxu0
  %1478 = vmatprep.mubr.bf16.mxu0 0
  %1479 = vmatmul.mubr.bf16.gmra.mrb[0].mxu0 %v1292
  %v1480 = vpop.f32.mrb[0].mxu0
  %v1481 = vadd.f32 0.0, %v1480
  %v1482 = vpop.f32.mrb[0].mxu0
  %v1483 = vpop.f32.mrb[0].mxu0
  %v1484 = vadd.f32 0.0, %v1483
  %v1485 = vpop.f32.mrb[0].mxu0
  %1486 = vmatprep.mubr.bf16.mxu0 0
  %1487 = vmatmul.mubr.bf16.gmra.mrb[0].mxu0 %v1295
  %v1488 = vpop.f32.mrb[0].mxu0
  %v1489 = vadd.f32 0.0, %v1488
  %v1490 = vpop.f32.mrb[0].mxu0
  %v1491 = vpop.f32.mrb[0].mxu0
  %v1492 = vadd.f32 0.0, %v1491
  %v1493 = vpop.f32.mrb[0].mxu0
  %1494 = vmatprep.mubr.bf16.mxu0 0
  %1495 = vmatmul.mubr.bf16.gmra.mrb[0].mxu0 %v1298
  %v1496 = vpop.f32.mrb[0].mxu0
  %v1497 = vadd.f32 0.0, %v1496
  %v1498 = vpop.f32.mrb[0].mxu0
  %v1499 = vpop.f32.mrb[0].mxu0
  %v1500 = vadd.f32 0.0, %v1499
  %v1501 = vpop.f32.mrb[0].mxu0
  %1502 = vmatprep.mubr.bf16.mxu0 0
  %1503 = vmatmul.mubr.bf16.gmra.mrb[0].mxu0 %v1301
  %v1504 = vpop.f32.mrb[0].mxu0
  %v1505 = vadd.f32 0.0, %v1504
  %v1506 = vpop.f32.mrb[0].mxu0
  %v1507 = vpop.f32.mrb[0].mxu0
  %v1508 = vadd.f32 0.0, %v1507
  %v1509 = vpop.f32.mrb[0].mxu0
  %1510 = vmatprep.mubr.bf16.mxu0 0
  %1511 = vmatmul.mubr.bf16.gmra.mrb[0].mxu0 %v1304
  %v1512 = vpop.f32.mrb[0].mxu0
  %v1513 = vadd.f32 0.0, %v1512
  %v1514 = vpop.f32.mrb[0].mxu0
  %v1515 = vpop.f32.mrb[0].mxu0
  %v1516 = vadd.f32 0.0, %v1515
  %v1517 = vpop.f32.mrb[0].mxu0
  %1518 = vmatprep.mubr.bf16.mxu0 0
  %1519 = vmatmul.mubr.bf16.gmra.mrb[0].mxu0 %v1307
  %v1520 = vpop.f32.mrb[0].mxu0
  %v1521 = vadd.f32 0.0, %v1520
  %v1522 = vpop.f32.mrb[0].mxu0
  %v1523 = vpop.f32.mrb[0].mxu0
  %v1524 = vadd.f32 0.0, %v1523
  %v1525 = vpop.f32.mrb[0].mxu0
  %1526 = vmatprep.mubr.bf16.mxu0 0
  %1527 = vmatmul.mubr.bf16.gmra.mrb[0].mxu0 %v1310
  %v1528 = vpop.f32.mrb[0].mxu0
  %v1529 = vadd.f32 0.0, %v1528
  %v1530 = vpop.f32.mrb[0].mxu0
  %v1531 = vpop.f32.mrb[0].mxu0
  %v1532 = vadd.f32 0.0, %v1531
  %v1533 = vpop.f32.mrb[0].mxu0
  %1534 = vmatprep.mubr.bf16.mxu0 0
  %1535 = vmatmul.mubr.bf16.gmra.mrb[0].mxu0 %v1313
  %v1536 = vpop.f32.mrb[0].mxu0
  %v1537 = vadd.f32 0.0, %v1536
  %v1538 = vpop.f32.mrb[0].mxu0
  %v1539 = vpop.f32.mrb[0].mxu0
  %v1540 = vadd.f32 0.0, %v1539
  %v1541 = vpop.f32.mrb[0].mxu0
  %1542 = vmatprep.mubr.bf16.mxu0 0
  %1543 = vmatmul.mubr.bf16.gmra.mrb[0].mxu0 %v1316
  %v1544 = vpop.f32.mrb[0].mxu0
  %v1545 = vadd.f32 0.0, %v1544
  %v1546 = vpop.f32.mrb[0].mxu0
  %v1547 = vpop.f32.mrb[0].mxu0
  %v1548 = vpop.f32.mrb[0].mxu0
  %1549 = vdwg.mxu0
  %v1550 = vmax.f32 %v1021, %v1353
  %v1551 = vmax.f32 %v1022, %v1356
  %v1552 = vmax.f32 %v1023, %v1361
  %v1553 = vmax.f32 %v1024, %v1364
  %v1554 = vmax.f32 %v1025, %v1369
  %v1555 = vmax.f32 %v1026, %v1372
  %v1556 = vmax.f32 %v1027, %v1377
  %v1557 = vmax.f32 %v1028, %v1380
  %v1558 = vmax.f32 %v1029, %v1385
  %v1559 = vmax.f32 %v1030, %v1388
  %v1560 = vmax.f32 %v1031, %v1393
  %v1561 = vmax.f32 %v1032, %v1396
  %v1562 = vmax.f32 %v1033, %v1401
  %v1563 = vmax.f32 %v1034, %v1404
  %v1564 = vmax.f32 %v1035, %v1409
  %v1565 = vmax.f32 %v1036, %v1412
  %v1566 = vmax.f32 %v1037, %v1417
  %v1567 = vmax.f32 %v1038, %v1420
  %v1568 = vmax.f32 %v1039, %v1425
  %v1569 = vmax.f32 %v1040, %v1428
  %v1570 = vmax.f32 %v1041, %v1433
  %v1571 = vmax.f32 %v1042, %v1436
  %v1572 = vmax.f32 %v1043, %v1441
  %v1573 = vmax.f32 %v1044, %v1444
  %v1574 = vmax.f32 %v1045, %v1449
  %v1575 = vmax.f32 %v1046, %v1452
  %v1576 = vmax.f32 %v1047, %v1457
  %v1577 = vmax.f32 %v1048, %v1460
  %v1578 = vmax.f32 %v1049, %v1465
  %v1579 = vmax.f32 %v1050, %v1468
  %v1580 = vmax.f32 %v1051, %v1473
  %v1581 = vmax.f32 %v1052, %v1476
  %v1582 = vmax.f32 %v1053, %v1481
  %v1583 = vmax.f32 %v1054, %v1484
  %v1584 = vmax.f32 %v1055, %v1489
  %v1585 = vmax.f32 %v1056, %v1492
  %v1586 = vmax.f32 %v1057, %v1497
  %v1587 = vmax.f32 %v1058, %v1500
  %v1588 = vmax.f32 %v1059, %v1505
  %v1589 = vmax.f32 %v1060, %v1508
  %v1590 = vmax.f32 %v1061, %v1513
  %v1591 = vmax.f32 %v1062, %v1516
  %v1592 = vmax.f32 %v1063, %v1521
  %v1593 = vmax.f32 %v1064, %v1524
  %v1594 = vmax.f32 %v1065, %v1529
  %v1595 = vmax.f32 %v1066, %v1532
  %v1596 = vmax.f32 %v1067, %v1537
  %v1597 = vmax.f32 %v1068, %v1540
  %v1598 = vmax.f32 %v1069, %v1545
  %s1599 = scalar_lea.vmem %s0, 588
  %v1600 = vld [vmem:[%s1599] sm:$0xf]
  %v1601 = vld [vmem:[%s1599 + $0x4] sm:$0xf]
  %v1602 = vld [vmem:[%s1599 + $0x8] sm:$0xf]
  %v1603 = vld [vmem:[%s1599 + $0xc] sm:$0xf]
  %v1604 = vld [vmem:[%s1599 + $0x10] sm:$0xf]
  %v1605 = vld [vmem:[%s1599 + $0x14] sm:$0xf]
  %v1606 = vld [vmem:[%s1599 + $0x18] sm:$0xf]
  %v1607 = vld [vmem:[%s1599 + $0x1c] sm:$0xf]
  %v1608 = vld [vmem:[%s1599 + $0x20] sm:$0xf]
  %v1609 = vld [vmem:[%s1599 + $0x24] sm:$0xf]
  %v1610 = vld [vmem:[%s1599 + $0x28] sm:$0xf]
  %v1611 = vld [vmem:[%s1599 + $0x2c] sm:$0xf]
  %v1612 = vld [vmem:[%s1599 + $0x30] sm:$0xf]
  %v1613 = vld [vmem:[%s1599 + $0x34] sm:$0xf]
  %v1614 = vld [vmem:[%s1599 + $0x38] sm:$0xf]
  %v1615 = vld [vmem:[%s1599 + $0x3c] sm:$0xf]
  %v1616 = vld [vmem:[%s1599 + $0x40] sm:$0xf]
  %v1617 = vld [vmem:[%s1599 + $0x44] sm:$0xf]
  %v1618 = vld [vmem:[%s1599 + $0x48] sm:$0xf]
  %v1619 = vld [vmem:[%s1599 + $0x4c] sm:$0xf]
  %v1620 = vld [vmem:[%s1599 + $0x50] sm:$0xf]
  %v1621 = vld [vmem:[%s1599 + $0x54] sm:$0xf]
  %v1622 = vld [vmem:[%s1599 + $0x58] sm:$0xf]
  %v1623 = vld [vmem:[%s1599 + $0x5c] sm:$0xf]
  %v1624 = vld [vmem:[%s1599 + $0x60] sm:$0xf]
  %v1625 = vld [vmem:[%s1599 + $0x64] sm:$0xf]
  %v1626 = vld [vmem:[%s1599 + $0x68] sm:$0xf]
  %v1627 = vld [vmem:[%s1599 + $0x6c] sm:$0xf]
  %v1628 = vld [vmem:[%s1599 + $0x70] sm:$0xf]
  %v1629 = vld [vmem:[%s1599 + $0x74] sm:$0xf]
  %v1630 = vld [vmem:[%s1599 + $0x78] sm:$0xf]
  %v1631 = vld [vmem:[%s1599 + $0x7c] sm:$0xf]
  %v1632 = vld [vmem:[%s1599 + $0x80] sm:$0xf]
  %v1633 = vld [vmem:[%s1599 + $0x84] sm:$0xf]
  %v1634 = vld [vmem:[%s1599 + $0x88] sm:$0xf]
  %v1635 = vld [vmem:[%s1599 + $0x8c] sm:$0xf]
  %v1636 = vld [vmem:[%s1599 + $0x90] sm:$0xf]
  %v1637 = vld [vmem:[%s1599 + $0x94] sm:$0xf]
  %v1638 = vld [vmem:[%s1599 + $0x98] sm:$0xf]
  %v1639 = vld [vmem:[%s1599 + $0x9c] sm:$0xf]
  %v1640 = vld [vmem:[%s1599 + $0xa0] sm:$0xf]
  %v1641 = vld [vmem:[%s1599 + $0xa4] sm:$0xf]
  %v1642 = vld [vmem:[%s1599 + $0xa8] sm:$0xf]
  %v1643 = vld [vmem:[%s1599 + $0xac] sm:$0xf]
  %v1644 = vld [vmem:[%s1599 + $0xb0] sm:$0xf]
  %v1645 = vld [vmem:[%s1599 + $0xb4] sm:$0xf]
  %v1646 = vld [vmem:[%s1599 + $0xb8] sm:$0xf]
  %v1647 = vld [vmem:[%s1599 + $0xbc] sm:$0xf]
  %v1648 = vld [vmem:[%s1599 + $0xc0] sm:$0xf]
  %v1698 = vunpack.c.l.b16 %v1600
  %v1699 = vunpack.c.l.b16 %v1601
  %v1700 = vunpack.c.l.b16 %v1602
  %v1701 = vunpack.c.l.b16 %v1603
  %v1702 = vunpack.c.l.b16 %v1604
  %v1703 = vunpack.c.l.b16 %v1605
  %v1704 = vunpack.c.l.b16 %v1606
  %v1705 = vunpack.c.l.b16 %v1607
  %v1706 = vunpack.c.l.b16 %v1608
  %v1707 = vunpack.c.l.b16 %v1609
  %v1708 = vunpack.c.l.b16 %v1610
  %v1709 = vunpack.c.l.b16 %v1611
  %v1710 = vunpack.c.l.b16 %v1612
  %v1711 = vunpack.c.l.b16 %v1613
  %v1712 = vunpack.c.l.b16 %v1614
  %v1713 = vunpack.c.l.b16 %v1615
  %v1714 = vunpack.c.l.b16 %v1616
  %v1715 = vunpack.c.l.b16 %v1617
  %v1716 = vunpack.c.l.b16 %v1618
  %v1717 = vunpack.c.l.b16 %v1619
  %v1718 = vunpack.c.l.b16 %v1620
  %v1719 = vunpack.c.l.b16 %v1621
  %v1720 = vunpack.c.l.b16 %v1622
  %v1721 = vunpack.c.l.b16 %v1623
  %v1722 = vunpack.c.l.b16 %v1624
  %v1723 = vunpack.c.l.b16 %v1625
  %v1724 = vunpack.c.l.b16 %v1626
  %v1725 = vunpack.c.l.b16 %v1627
  %v1726 = vunpack.c.l.b16 %v1628
  %v1727 = vunpack.c.l.b16 %v1629
  %v1728 = vunpack.c.l.b16 %v1630
  %v1729 = vunpack.c.l.b16 %v1631
  %v1730 = vunpack.c.l.b16 %v1632
  %v1731 = vunpack.c.l.b16 %v1633
  %v1732 = vunpack.c.l.b16 %v1634
  %v1733 = vunpack.c.l.b16 %v1635
  %v1734 = vunpack.c.l.b16 %v1636
  %v1735 = vunpack.c.l.b16 %v1637
  %v1736 = vunpack.c.l.b16 %v1638
  %v1737 = vunpack.c.l.b16 %v1639
  %v1738 = vunpack.c.l.b16 %v1640
  %v1739 = vunpack.c.l.b16 %v1641
  %v1740 = vunpack.c.l.b16 %v1642
  %v1741 = vunpack.c.l.b16 %v1643
  %v1742 = vunpack.c.l.b16 %v1644
  %v1743 = vunpack.c.l.b16 %v1645
  %v1744 = vunpack.c.l.b16 %v1646
  %v1745 = vunpack.c.l.b16 %v1647
  %v1746 = vunpack.c.l.b16 %v1648
  %v1747 = vpack.c.b16 %v1699, %v1698
  %v1748 = vpack.c.b16 %v1701, %v1700
  %v1749 = vpack.c.b16 %v1703, %v1702
  %v1750 = vpack.c.b16 %v1705, %v1704
  %v1751 = vpack.c.b16 %v1707, %v1706
  %v1752 = vpack.c.b16 %v1709, %v1708
  %v1753 = vpack.c.b16 %v1711, %v1710
  %v1754 = vpack.c.b16 %v1713, %v1712
  %v1755 = vpack.c.b16 %v1715, %v1714
  %v1756 = vpack.c.b16 %v1717, %v1716
  %v1757 = vpack.c.b16 %v1719, %v1718
  %v1758 = vpack.c.b16 %v1721, %v1720
  %v1759 = vpack.c.b16 %v1723, %v1722
  %v1760 = vpack.c.b16 %v1725, %v1724
  %v1761 = vpack.c.b16 %v1727, %v1726
  %v1762 = vpack.c.b16 %v1729, %v1728
  %v1763 = vpack.c.b16 %v1731, %v1730
  %v1764 = vpack.c.b16 %v1733, %v1732
  %v1765 = vpack.c.b16 %v1735, %v1734
  %v1766 = vpack.c.b16 %v1737, %v1736
  %v1767 = vpack.c.b16 %v1739, %v1738
  %v1768 = vpack.c.b16 %v1741, %v1740
  %v1769 = vpack.c.b16 %v1743, %v1742
  %v1770 = vpack.c.b16 %v1745, %v1744
  %v1771 = vpack.c.b16 %v1746, %v1746
  %v1773 = vsel %vm226, %v1747, 0
  %v1776 = vsel %vm226, %v1748, 0
  %v1779 = vsel %vm226, %v1749, 0
  %v1782 = vsel %vm226, %v1750, 0
  %v1785 = vsel %vm226, %v1751, 0
  %v1788 = vsel %vm226, %v1752, 0
  %v1791 = vsel %vm226, %v1753, 0
  %v1794 = vsel %vm226, %v1754, 0
  %v1797 = vsel %vm226, %v1755, 0
  %v1800 = vsel %vm226, %v1756, 0
  %v1803 = vsel %vm226, %v1757, 0
  %v1806 = vsel %vm226, %v1758, 0
  %v1809 = vsel %vm226, %v1759, 0
  %v1812 = vsel %vm226, %v1760, 0
  %v1815 = vsel %vm226, %v1761, 0
  %v1818 = vsel %vm226, %v1762, 0
  %v1821 = vsel %vm226, %v1763, 0
  %v1824 = vsel %vm226, %v1764, 0
  %v1827 = vsel %vm226, %v1765, 0
  %v1830 = vsel %vm226, %v1766, 0
  %v1833 = vsel %vm226, %v1767, 0
  %v1836 = vsel %vm226, %v1768, 0
  %v1839 = vsel %vm226, %v1769, 0
  %v1842 = vsel %vm226, %v1770, 0
  %v1845 = vsel %vm226, %v1771, 0
  %1847 = vmatprep.subr.bf16.mxu0 0
  %1848 = vmatpush1.bf16.msra.mxu0 %v217
  %1849 = vmatprep.subr.bf16.mxu0 0
  %1850 = vmatpush1.bf16.msra.mxu0 %v218
  %1851 = vmatprep.subr.bf16.mxu0 0
  %1852 = vmatpush1.bf16.msra.mxu0 %v219
  %1853 = vmatprep.subr.bf16.mxu0 0
  %1854 = vmatpush1.bf16.msra.mxu0 %v220
  %1855 = vmatprep.subr.bf16.mxu0 0
  %1856 = vmatpush1.bf16.msra.mxu0 %v307
  %1857 = vmatprep.subr.bf16.mxu0 0
  %1858 = vmatpush1.bf16.msra.mxu0 0
  %1859 = vmatprep.subr.bf16.mxu0 0
  %1860 = vmatpush1.bf16.msra.mxu0 0
  %1861 = vmatprep.subr.bf16.mxu0 0
  %1862 = vmatpush1.bf16.msra.mxu0 0
  %1863 = vmatprep.subr.bf16.mxu0 0
  %1864 = vmatpush1.bf16.msra.mxu0 0
  %1865 = vmatprep.subr.bf16.mxu0 0
  %1866 = vmatpush1.bf16.msra.mxu0 0
  %1867 = vmatprep.subr.bf16.mxu0 0
  %1868 = vmatpush1.bf16.msra.mxu0 0
  %1869 = vmatprep.subr.bf16.mxu0 0
  %1870 = vmatpush1.bf16.msra.mxu0 0
  %1871 = vmatprep.subr.bf16.mxu0 0
  %1872 = vmatpush1.bf16.msra.mxu0 0
  %1873 = vmatprep.subr.bf16.mxu0 0
  %1874 = vmatpush1.bf16.msra.mxu0 0
  %1875 = vmatprep.subr.bf16.mxu0 0
  %1876 = vmatpush1.bf16.msra.mxu0 0
  %1877 = vmatprep.subr.bf16.mxu0 0
  %1878 = vmatpush1.bf16.msra.mxu0 0
  %1879 = vmatprep.mubr.bf16.mxu0 0
  %1880 = vmatmul.mubr.bf16.gmra.mrb[0].mxu0 %v1773
  %v1881 = vpop.f32.mrb[0].mxu0
  %v1882 = vadd.f32 0.0, %v1881
  %v1883 = vpop.f32.mrb[0].mxu0
  %v1884 = vpop.f32.mrb[0].mxu0
  %v1885 = vadd.f32 0.0, %v1884
  %v1886 = vpop.f32.mrb[0].mxu0
  %1887 = vmatprep.mubr.bf16.mxu0 0
  %1888 = vmatmul.mubr.bf16.gmra.mrb[0].mxu0 %v1776
  %v1889 = vpop.f32.mrb[0].mxu0
  %v1890 = vadd.f32 0.0, %v1889
  %v1891 = vpop.f32.mrb[0].mxu0
  %v1892 = vpop.f32.mrb[0].mxu0
  %v1893 = vadd.f32 0.0, %v1892
  %v1894 = vpop.f32.mrb[0].mxu0
  %1895 = vmatprep.mubr.bf16.mxu0 0
  %1896 = vmatmul.mubr.bf16.gmra.mrb[0].mxu0 %v1779
  %v1897 = vpop.f32.mrb[0].mxu0
  %v1898 = vadd.f32 0.0, %v1897
  %v1899 = vpop.f32.mrb[0].mxu0
  %v1900 = vpop.f32.mrb[0].mxu0
  %v1901 = vadd.f32 0.0, %v1900
  %v1902 = vpop.f32.mrb[0].mxu0
  %1903 = vmatprep.mubr.bf16.mxu0 0
  %1904 = vmatmul.mubr.bf16.gmra.mrb[0].mxu0 %v1782
  %v1905 = vpop.f32.mrb[0].mxu0
  %v1906 = vadd.f32 0.0, %v1905
  %v1907 = vpop.f32.mrb[0].mxu0
  %v1908 = vpop.f32.mrb[0].mxu0
  %v1909 = vadd.f32 0.0, %v1908
  %v1910 = vpop.f32.mrb[0].mxu0
  %1911 = vmatprep.mubr.bf16.mxu0 0
  %1912 = vmatmul.mubr.bf16.gmra.mrb[0].mxu0 %v1785
  %v1913 = vpop.f32.mrb[0].mxu0
  %v1914 = vadd.f32 0.0, %v1913
  %v1915 = vpop.f32.mrb[0].mxu0
  %v1916 = vpop.f32.mrb[0].mxu0
  %v1917 = vadd.f32 0.0, %v1916
  %v1918 = vpop.f32.mrb[0].mxu0
  %1919 = vmatprep.mubr.bf16.mxu0 0
  %1920 = vmatmul.mubr.bf16.gmra.mrb[0].mxu0 %v1788
  %v1921 = vpop.f32.mrb[0].mxu0
  %v1922 = vadd.f32 0.0, %v1921
  %v1923 = vpop.f32.mrb[0].mxu0
  %v1924 = vpop.f32.mrb[0].mxu0
  %v1925 = vadd.f32 0.0, %v1924
  %v1926 = vpop.f32.mrb[0].mxu0
  %1927 = vmatprep.mubr.bf16.mxu0 0
  %1928 = vmatmul.mubr.bf16.gmra.mrb[0].mxu0 %v1791
  %v1929 = vpop.f32.mrb[0].mxu0
  %v1930 = vadd.f32 0.0, %v1929
  %v1931 = vpop.f32.mrb[0].mxu0
  %v1932 = vpop.f32.mrb[0].mxu0
  %v1933 = vadd.f32 0.0, %v1932
  %v1934 = vpop.f32.mrb[0].mxu0
  %1935 = vmatprep.mubr.bf16.mxu0 0
  %1936 = vmatmul.mubr.bf16.gmra.mrb[0].mxu0 %v1794
  %v1937 = vpop.f32.mrb[0].mxu0
  %v1938 = vadd.f32 0.0, %v1937
  %v1939 = vpop.f32.mrb[0].mxu0
  %v1940 = vpop.f32.mrb[0].mxu0
  %v1941 = vadd.f32 0.0, %v1940
  %v1942 = vpop.f32.mrb[0].mxu0
  %1943 = vmatprep.mubr.bf16.mxu0 0
  %1944 = vmatmul.mubr.bf16.gmra.mrb[0].mxu0 %v1797
  %v1945 = vpop.f32.mrb[0].mxu0
  %v1946 = vadd.f32 0.0, %v1945
  %v1947 = vpop.f32.mrb[0].mxu0
  %v1948 = vpop.f32.mrb[0].mxu0
  %v1949 = vadd.f32 0.0, %v1948
  %v1950 = vpop.f32.mrb[0].mxu0
  %1951 = vmatprep.mubr.bf16.mxu0 0
  %1952 = vmatmul.mubr.bf16.gmra.mrb[0].mxu0 %v1800
  %v1953 = vpop.f32.mrb[0].mxu0
  %v1954 = vadd.f32 0.0, %v1953
  %v1955 = vpop.f32.mrb[0].mxu0
  %v1956 = vpop.f32.mrb[0].mxu0
  %v1957 = vadd.f32 0.0, %v1956
  %v1958 = vpop.f32.mrb[0].mxu0
  %1959 = vmatprep.mubr.bf16.mxu0 0
  %1960 = vmatmul.mubr.bf16.gmra.mrb[0].mxu0 %v1803
  %v1961 = vpop.f32.mrb[0].mxu0
  %v1962 = vadd.f32 0.0, %v1961
  %v1963 = vpop.f32.mrb[0].mxu0
  %v1964 = vpop.f32.mrb[0].mxu0
  %v1965 = vadd.f32 0.0, %v1964
  %v1966 = vpop.f32.mrb[0].mxu0
  %1967 = vmatprep.mubr.bf16.mxu0 0
  %1968 = vmatmul.mubr.bf16.gmra.mrb[0].mxu0 %v1806
  %v1969 = vpop.f32.mrb[0].mxu0
  %v1970 = vadd.f32 0.0, %v1969
  %v1971 = vpop.f32.mrb[0].mxu0
  %v1972 = vpop.f32.mrb[0].mxu0
  %v1973 = vadd.f32 0.0, %v1972
  %v1974 = vpop.f32.mrb[0].mxu0
  %1975 = vmatprep.mubr.bf16.mxu0 0
  %1976 = vmatmul.mubr.bf16.gmra.mrb[0].mxu0 %v1809
  %v1977 = vpop.f32.mrb[0].mxu0
  %v1978 = vadd.f32 0.0, %v1977
  %v1979 = vpop.f32.mrb[0].mxu0
  %v1980 = vpop.f32.mrb[0].mxu0
  %v1981 = vadd.f32 0.0, %v1980
  %v1982 = vpop.f32.mrb[0].mxu0
  %1983 = vmatprep.mubr.bf16.mxu0 0
  %1984 = vmatmul.mubr.bf16.gmra.mrb[0].mxu0 %v1812
  %v1985 = vpop.f32.mrb[0].mxu0
  %v1986 = vadd.f32 0.0, %v1985
  %v1987 = vpop.f32.mrb[0].mxu0
  %v1988 = vpop.f32.mrb[0].mxu0
  %v1989 = vadd.f32 0.0, %v1988
  %v1990 = vpop.f32.mrb[0].mxu0
  %1991 = vmatprep.mubr.bf16.mxu0 0
  %1992 = vmatmul.mubr.bf16.gmra.mrb[0].mxu0 %v1815
  %v1993 = vpop.f32.mrb[0].mxu0
  %v1994 = vadd.f32 0.0, %v1993
  %v1995 = vpop.f32.mrb[0].mxu0
  %v1996 = vpop.f32.mrb[0].mxu0
  %v1997 = vadd.f32 0.0, %v1996
  %v1998 = vpop.f32.mrb[0].mxu0
  %1999 = vmatprep.mubr.bf16.mxu0 0
  %2000 = vmatmul.mubr.bf16.gmra.mrb[0].mxu0 %v1818
  %v2001 = vpop.f32.mrb[0].mxu0
  %v2002 = vadd.f32 0.0, %v2001
  %v2003 = vpop.f32.mrb[0].mxu0
  %v2004 = vpop.f32.mrb[0].mxu0
  %v2005 = vadd.f32 0.0, %v2004
  %v2006 = vpop.f32.mrb[0].mxu0
  %2007 = vmatprep.mubr.bf16.mxu0 0
  %2008 = vmatmul.mubr.bf16.gmra.mrb[0].mxu0 %v1821
  %v2009 = vpop.f32.mrb[0].mxu0
  %v2010 = vadd.f32 0.0, %v2009
  %v2011 = vpop.f32.mrb[0].mxu0
  %v2012 = vpop.f32.mrb[0].mxu0
  %v2013 = vadd.f32 0.0, %v2012
  %v2014 = vpop.f32.mrb[0].mxu0
  %2015 = vmatprep.mubr.bf16.mxu0 0
  %2016 = vmatmul.mubr.bf16.gmra.mrb[0].mxu0 %v1824
  %v2017 = vpop.f32.mrb[0].mxu0
  %v2018 = vadd.f32 0.0, %v2017
  %v2019 = vpop.f32.mrb[0].mxu0
  %v2020 = vpop.f32.mrb[0].mxu0
  %v2021 = vadd.f32 0.0, %v2020
  %v2022 = vpop.f32.mrb[0].mxu0
  %2023 = vmatprep.mubr.bf16.mxu0 0
  %2024 = vmatmul.mubr.bf16.gmra.mrb[0].mxu0 %v1827
  %v2025 = vpop.f32.mrb[0].mxu0
  %v2026 = vadd.f32 0.0, %v2025
  %v2027 = vpop.f32.mrb[0].mxu0
  %v2028 = vpop.f32.mrb[0].mxu0
  %v2029 = vadd.f32 0.0, %v2028
  %v2030 = vpop.f32.mrb[0].mxu0
  %2031 = vmatprep.mubr.bf16.mxu0 0
  %2032 = vmatmul.mubr.bf16.gmra.mrb[0].mxu0 %v1830
  %v2033 = vpop.f32.mrb[0].mxu0
  %v2034 = vadd.f32 0.0, %v2033
  %v2035 = vpop.f32.mrb[0].mxu0
  %v2036 = vpop.f32.mrb[0].mxu0
  %v2037 = vadd.f32 0.0, %v2036
  %v2038 = vpop.f32.mrb[0].mxu0
  %2039 = vmatprep.mubr.bf16.mxu0 0
  %2040 = vmatmul.mubr.bf16.gmra.mrb[0].mxu0 %v1833
  %v2041 = vpop.f32.mrb[0].mxu0
  %v2042 = vadd.f32 0.0, %v2041
  %v2043 = vpop.f32.mrb[0].mxu0
  %v2044 = vpop.f32.mrb[0].mxu0
  %v2045 = vadd.f32 0.0, %v2044
  %v2046 = vpop.f32.mrb[0].mxu0
  %2047 = vmatprep.mubr.bf16.mxu0 0
  %2048 = vmatmul.mubr.bf16.gmra.mrb[0].mxu0 %v1836
  %v2049 = vpop.f32.mrb[0].mxu0
  %v2050 = vadd.f32 0.0, %v2049
  %v2051 = vpop.f32.mrb[0].mxu0
  %v2052 = vpop.f32.mrb[0].mxu0
  %v2053 = vadd.f32 0.0, %v2052
  %v2054 = vpop.f32.mrb[0].mxu0
  %2055 = vmatprep.mubr.bf16.mxu0 0
  %2056 = vmatmul.mubr.bf16.gmra.mrb[0].mxu0 %v1839
  %v2057 = vpop.f32.mrb[0].mxu0
  %v2058 = vadd.f32 0.0, %v2057
  %v2059 = vpop.f32.mrb[0].mxu0
  %v2060 = vpop.f32.mrb[0].mxu0
  %v2061 = vadd.f32 0.0, %v2060
  %v2062 = vpop.f32.mrb[0].mxu0
  %2063 = vmatprep.mubr.bf16.mxu0 0
  %2064 = vmatmul.mubr.bf16.gmra.mrb[0].mxu0 %v1842
  %v2065 = vpop.f32.mrb[0].mxu0
  %v2066 = vadd.f32 0.0, %v2065
  %v2067 = vpop.f32.mrb[0].mxu0
  %v2068 = vpop.f32.mrb[0].mxu0
  %v2069 = vadd.f32 0.0, %v2068
  %v2070 = vpop.f32.mrb[0].mxu0
  %2071 = vmatprep.mubr.bf16.mxu0 0
  %2072 = vmatmul.mubr.bf16.gmra.mrb[0].mxu0 %v1845
  %v2073 = vpop.f32.mrb[0].mxu0
  %v2074 = vadd.f32 0.0, %v2073
  %v2075 = vpop.f32.mrb[0].mxu0
  %v2076 = vpop.f32.mrb[0].mxu0
  %v2077 = vpop.f32.mrb[0].mxu0
  %2078 = vdwg.mxu0
  %v2079 = vmax.f32 %v1550, %v1882
  %v2080 = vmax.f32 %v1551, %v1885
  %v2081 = vmax.f32 %v1552, %v1890
  %v2082 = vmax.f32 %v1553, %v1893
  %v2083 = vmax.f32 %v1554, %v1898
  %v2084 = vmax.f32 %v1555, %v1901
  %v2085 = vmax.f32 %v1556, %v1906
  %v2086 = vmax.f32 %v1557, %v1909
  %v2087 = vmax.f32 %v1558, %v1914
  %v2088 = vmax.f32 %v1559, %v1917
  %v2089 = vmax.f32 %v1560, %v1922
  %v2090 = vmax.f32 %v1561, %v1925
  %v2091 = vmax.f32 %v1562, %v1930
  %v2092 = vmax.f32 %v1563, %v1933
  %v2093 = vmax.f32 %v1564, %v1938
  %v2094 = vmax.f32 %v1565, %v1941
  %v2095 = vmax.f32 %v1566, %v1946
  %v2096 = vmax.f32 %v1567, %v1949
  %v2097 = vmax.f32 %v1568, %v1954
  %v2098 = vmax.f32 %v1569, %v1957
  %v2099 = vmax.f32 %v1570, %v1962
  %v2100 = vmax.f32 %v1571, %v1965
  %v2101 = vmax.f32 %v1572, %v1970
  %v2102 = vmax.f32 %v1573, %v1973
  %v2103 = vmax.f32 %v1574, %v1978
  %v2104 = vmax.f32 %v1575, %v1981
  %v2105 = vmax.f32 %v1576, %v1986
  %v2106 = vmax.f32 %v1577, %v1989
  %v2107 = vmax.f32 %v1578, %v1994
  %v2108 = vmax.f32 %v1579, %v1997
  %v2109 = vmax.f32 %v1580, %v2002
  %v2110 = vmax.f32 %v1581, %v2005
  %v2111 = vmax.f32 %v1582, %v2010
  %v2112 = vmax.f32 %v1583, %v2013
  %v2113 = vmax.f32 %v1584, %v2018
  %v2114 = vmax.f32 %v1585, %v2021
  %v2115 = vmax.f32 %v1586, %v2026
  %v2116 = vmax.f32 %v1587, %v2029
  %v2117 = vmax.f32 %v1588, %v2034
  %v2118 = vmax.f32 %v1589, %v2037
  %v2119 = vmax.f32 %v1590, %v2042
  %v2120 = vmax.f32 %v1591, %v2045
  %v2121 = vmax.f32 %v1592, %v2050
  %v2122 = vmax.f32 %v1593, %v2053
  %v2123 = vmax.f32 %v1594, %v2058
  %v2124 = vmax.f32 %v1595, %v2061
  %v2125 = vmax.f32 %v1596, %v2066
  %v2126 = vmax.f32 %v1597, %v2069
  %v2127 = vmax.f32 %v1598, %v2074
  %v2128 = vld [vmem:[%s2] sm:$0x1]
  %v2130 = vlaneseq
  %v2131 = vshrl.u32 %v2130, 7
  %v2132 = vsub.s32 0, %v2131
  %v2133 = vrot.slane %v2128, %v2132
  %v2135 = vadd.f32 %v2079, %v2133
  %v2136 = vadd.f32 %v2080, %v2133
  %v2137 = vadd.f32 %v2081, %v2133
  %v2138 = vadd.f32 %v2082, %v2133
  %v2139 = vadd.f32 %v2083, %v2133
  %v2140 = vadd.f32 %v2084, %v2133
  %v2141 = vadd.f32 %v2085, %v2133
  %v2142 = vadd.f32 %v2086, %v2133
  %v2143 = vadd.f32 %v2087, %v2133
  %v2144 = vadd.f32 %v2088, %v2133
  %v2145 = vadd.f32 %v2089, %v2133
  %v2146 = vadd.f32 %v2090, %v2133
  %v2147 = vadd.f32 %v2091, %v2133
  %v2148 = vadd.f32 %v2092, %v2133
  %v2149 = vadd.f32 %v2093, %v2133
  %v2150 = vadd.f32 %v2094, %v2133
  %v2151 = vadd.f32 %v2095, %v2133
  %v2152 = vadd.f32 %v2096, %v2133
  %v2153 = vadd.f32 %v2097, %v2133
  %v2154 = vadd.f32 %v2098, %v2133
  %v2155 = vadd.f32 %v2099, %v2133
  %v2156 = vadd.f32 %v2100, %v2133
  %v2157 = vadd.f32 %v2101, %v2133
  %v2158 = vadd.f32 %v2102, %v2133
  %v2159 = vadd.f32 %v2103, %v2133
  %v2160 = vadd.f32 %v2104, %v2133
  %v2161 = vadd.f32 %v2105, %v2133
  %v2162 = vadd.f32 %v2106, %v2133
  %v2163 = vadd.f32 %v2107, %v2133
  %v2164 = vadd.f32 %v2108, %v2133
  %v2165 = vadd.f32 %v2109, %v2133
  %v2166 = vadd.f32 %v2110, %v2133
  %v2167 = vadd.f32 %v2111, %v2133
  %v2168 = vadd.f32 %v2112, %v2133
  %v2169 = vadd.f32 %v2113, %v2133
  %v2170 = vadd.f32 %v2114, %v2133
  %v2171 = vadd.f32 %v2115, %v2133
  %v2172 = vadd.f32 %v2116, %v2133
  %v2173 = vadd.f32 %v2117, %v2133
  %v2174 = vadd.f32 %v2118, %v2133
  %v2175 = vadd.f32 %v2119, %v2133
  %v2176 = vadd.f32 %v2120, %v2133
  %v2177 = vadd.f32 %v2121, %v2133
  %v2178 = vadd.f32 %v2122, %v2133
  %v2179 = vadd.f32 %v2123, %v2133
  %v2180 = vadd.f32 %v2124, %v2133
  %v2181 = vadd.f32 %v2125, %v2133
  %v2182 = vadd.f32 %v2126, %v2133
  %v2183 = vadd.f32 %v2127, %v2133
  %v2184 = vmax.f32 %v2135, 0.0
  %v2185 = vmax.f32 %v2136, 0.0
  %v2186 = vmax.f32 %v2137, 0.0
  %v2187 = vmax.f32 %v2138, 0.0
  %v2188 = vmax.f32 %v2139, 0.0
  %v2189 = vmax.f32 %v2140, 0.0
  %v2190 = vmax.f32 %v2141, 0.0
  %v2191 = vmax.f32 %v2142, 0.0
  %v2192 = vmax.f32 %v2143, 0.0
  %v2193 = vmax.f32 %v2144, 0.0
  %v2194 = vmax.f32 %v2145, 0.0
  %v2195 = vmax.f32 %v2146, 0.0
  %v2196 = vmax.f32 %v2147, 0.0
  %v2197 = vmax.f32 %v2148, 0.0
  %v2198 = vmax.f32 %v2149, 0.0
  %v2199 = vmax.f32 %v2150, 0.0
  %v2200 = vmax.f32 %v2151, 0.0
  %v2201 = vmax.f32 %v2152, 0.0
  %v2202 = vmax.f32 %v2153, 0.0
  %v2203 = vmax.f32 %v2154, 0.0
  %v2204 = vmax.f32 %v2155, 0.0
  %v2205 = vmax.f32 %v2156, 0.0
  %v2206 = vmax.f32 %v2157, 0.0
  %v2207 = vmax.f32 %v2158, 0.0
  %v2208 = vmax.f32 %v2159, 0.0
  %v2209 = vmax.f32 %v2160, 0.0
  %v2210 = vmax.f32 %v2161, 0.0
  %v2211 = vmax.f32 %v2162, 0.0
  %v2212 = vmax.f32 %v2163, 0.0
  %v2213 = vmax.f32 %v2164, 0.0
  %v2214 = vmax.f32 %v2165, 0.0
  %v2215 = vmax.f32 %v2166, 0.0
  %v2216 = vmax.f32 %v2167, 0.0
  %v2217 = vmax.f32 %v2168, 0.0
  %v2218 = vmax.f32 %v2169, 0.0
  %v2219 = vmax.f32 %v2170, 0.0
  %v2220 = vmax.f32 %v2171, 0.0
  %v2221 = vmax.f32 %v2172, 0.0
  %v2222 = vmax.f32 %v2173, 0.0
  %v2223 = vmax.f32 %v2174, 0.0
  %v2224 = vmax.f32 %v2175, 0.0
  %v2225 = vmax.f32 %v2176, 0.0
  %v2226 = vmax.f32 %v2177, 0.0
  %v2227 = vmax.f32 %v2178, 0.0
  %v2228 = vmax.f32 %v2179, 0.0
  %v2229 = vmax.f32 %v2180, 0.0
  %v2230 = vmax.f32 %v2181, 0.0
  %v2231 = vmax.f32 %v2182, 0.0
  %v2232 = vmax.f32 %v2183, 0.0
  %v2233 = vpack.c.bf16 %v2185, %v2184
  %v2234 = vpack.c.bf16 %v2187, %v2186
  %v2235 = vpack.c.bf16 %v2189, %v2188
  %v2236 = vpack.c.bf16 %v2191, %v2190
  %v2237 = vpack.c.bf16 %v2193, %v2192
  %v2238 = vpack.c.bf16 %v2195, %v2194
  %v2239 = vpack.c.bf16 %v2197, %v2196
  %v2240 = vpack.c.bf16 %v2199, %v2198
  %v2241 = vpack.c.bf16 %v2201, %v2200
  %v2242 = vpack.c.bf16 %v2203, %v2202
  %v2243 = vpack.c.bf16 %v2205, %v2204
  %v2244 = vpack.c.bf16 %v2207, %v2206
  %v2245 = vpack.c.bf16 %v2209, %v2208
  %v2246 = vpack.c.bf16 %v2211, %v2210
  %v2247 = vpack.c.bf16 %v2213, %v2212
  %v2248 = vpack.c.bf16 %v2215, %v2214
  %v2249 = vpack.c.bf16 %v2217, %v2216
  %v2250 = vpack.c.bf16 %v2219, %v2218
  %v2251 = vpack.c.bf16 %v2221, %v2220
  %v2252 = vpack.c.bf16 %v2223, %v2222
  %v2253 = vpack.c.bf16 %v2225, %v2224
  %v2254 = vpack.c.bf16 %v2227, %v2226
  %v2255 = vpack.c.bf16 %v2229, %v2228
  %v2256 = vpack.c.bf16 %v2231, %v2230
  %v2257 = vpack.c.bf16 %v2232, %v2232
  %v2283 = vunpack.c.l.b16 %v2233
  %v2284 = vunpack.c.h.b16 %v2233
  %v2285 = vunpack.c.l.b16 %v2234
  %v2286 = vunpack.c.h.b16 %v2234
  %v2287 = vunpack.c.l.b16 %v2235
  %v2288 = vunpack.c.h.b16 %v2235
  %v2289 = vunpack.c.l.b16 %v2236
  %v2290 = vunpack.c.h.b16 %v2236
  %v2291 = vunpack.c.l.b16 %v2237
  %v2292 = vunpack.c.h.b16 %v2237
  %v2293 = vunpack.c.l.b16 %v2238
  %v2294 = vunpack.c.h.b16 %v2238
  %v2295 = vunpack.c.l.b16 %v2239
  %v2296 = vunpack.c.h.b16 %v2239
  %v2297 = vunpack.c.l.b16 %v2240
  %v2298 = vunpack.c.h.b16 %v2240
  %v2299 = vunpack.c.l.b16 %v2241
  %v2300 = vunpack.c.h.b16 %v2241
  %v2301 = vunpack.c.l.b16 %v2242
  %v2302 = vunpack.c.h.b16 %v2242
  %v2303 = vunpack.c.l.b16 %v2243
  %v2304 = vunpack.c.h.b16 %v2243
  %v2305 = vunpack.c.l.b16 %v2244
  %v2306 = vunpack.c.h.b16 %v2244
  %v2307 = vunpack.c.l.b16 %v2245
  %v2308 = vunpack.c.h.b16 %v2245
  %v2309 = vunpack.c.l.b16 %v2246
  %v2310 = vunpack.c.h.b16 %v2246
  %v2311 = vunpack.c.l.b16 %v2247
  %v2312 = vunpack.c.h.b16 %v2247
  %v2313 = vunpack.c.l.b16 %v2248
  %v2314 = vunpack.c.h.b16 %v2248
  %v2315 = vunpack.c.l.b16 %v2249
  %v2316 = vunpack.c.h.b16 %v2249
  %v2317 = vunpack.c.l.b16 %v2250
  %v2318 = vunpack.c.h.b16 %v2250
  %v2319 = vunpack.c.l.b16 %v2251
  %v2320 = vunpack.c.h.b16 %v2251
  %v2321 = vunpack.c.l.b16 %v2252
  %v2322 = vunpack.c.h.b16 %v2252
  %v2323 = vunpack.c.l.b16 %v2253
  %v2324 = vunpack.c.h.b16 %v2253
  %v2325 = vunpack.c.l.b16 %v2254
  %v2326 = vunpack.c.h.b16 %v2254
  %v2327 = vunpack.c.l.b16 %v2255
  %v2328 = vunpack.c.h.b16 %v2255
  %v2329 = vunpack.c.l.b16 %v2256
  %v2330 = vunpack.c.h.b16 %v2256
  %v2331 = vunpack.c.l.b16 %v2257
  %v2332 = vpack.c.b16 %v2283, %v2283
  %v2333 = vpack.c.b16 %v2284, %v2284
  %v2334 = vpack.c.b16 %v2285, %v2285
  %v2335 = vpack.c.b16 %v2286, %v2286
  %v2336 = vpack.c.b16 %v2287, %v2287
  %v2337 = vpack.c.b16 %v2288, %v2288
  %v2338 = vpack.c.b16 %v2289, %v2289
  %v2339 = vpack.c.b16 %v2290, %v2290
  %v2340 = vpack.c.b16 %v2291, %v2291
  %v2341 = vpack.c.b16 %v2292, %v2292
  %v2342 = vpack.c.b16 %v2293, %v2293
  %v2343 = vpack.c.b16 %v2294, %v2294
  %v2344 = vpack.c.b16 %v2295, %v2295
  %v2345 = vpack.c.b16 %v2296, %v2296
  %v2346 = vpack.c.b16 %v2297, %v2297
  %v2347 = vpack.c.b16 %v2298, %v2298
  %v2348 = vpack.c.b16 %v2299, %v2299
  %v2349 = vpack.c.b16 %v2300, %v2300
  %v2350 = vpack.c.b16 %v2301, %v2301
  %v2351 = vpack.c.b16 %v2302, %v2302
  %v2352 = vpack.c.b16 %v2303, %v2303
  %v2353 = vpack.c.b16 %v2304, %v2304
  %v2354 = vpack.c.b16 %v2305, %v2305
  %v2355 = vpack.c.b16 %v2306, %v2306
  %v2356 = vpack.c.b16 %v2307, %v2307
  %v2357 = vpack.c.b16 %v2308, %v2308
  %v2358 = vpack.c.b16 %v2309, %v2309
  %v2359 = vpack.c.b16 %v2310, %v2310
  %v2360 = vpack.c.b16 %v2311, %v2311
  %v2361 = vpack.c.b16 %v2312, %v2312
  %v2362 = vpack.c.b16 %v2313, %v2313
  %v2363 = vpack.c.b16 %v2314, %v2314
  %v2364 = vpack.c.b16 %v2315, %v2315
  %v2365 = vpack.c.b16 %v2316, %v2316
  %v2366 = vpack.c.b16 %v2317, %v2317
  %v2367 = vpack.c.b16 %v2318, %v2318
  %v2368 = vpack.c.b16 %v2319, %v2319
  %v2369 = vpack.c.b16 %v2320, %v2320
  %v2370 = vpack.c.b16 %v2321, %v2321
  %v2371 = vpack.c.b16 %v2322, %v2322
  %v2372 = vpack.c.b16 %v2323, %v2323
  %v2373 = vpack.c.b16 %v2324, %v2324
  %v2374 = vpack.c.b16 %v2325, %v2325
  %v2375 = vpack.c.b16 %v2326, %v2326
  %v2376 = vpack.c.b16 %v2327, %v2327
  %v2377 = vpack.c.b16 %v2328, %v2328
  %v2378 = vpack.c.b16 %v2329, %v2329
  %v2379 = vpack.c.b16 %v2330, %v2330
  %v2380 = vpack.c.b16 %v2331, %v2331
  %vm2430 = vcmask 125952
  %2431 = vst.msk [vmem:[%s3] sm:$0xf] %vm2430, %v2332
  %2432 = vst.msk [vmem:[%s3 + $0x4] sm:$0xf] %vm2430, %v2333
  %2433 = vst.msk [vmem:[%s3 + $0x8] sm:$0xf] %vm2430, %v2334
  %2434 = vst.msk [vmem:[%s3 + $0xc] sm:$0xf] %vm2430, %v2335
  %2435 = vst.msk [vmem:[%s3 + $0x10] sm:$0xf] %vm2430, %v2336
  %2436 = vst.msk [vmem:[%s3 + $0x14] sm:$0xf] %vm2430, %v2337
  %2437 = vst.msk [vmem:[%s3 + $0x18] sm:$0xf] %vm2430, %v2338
  %2438 = vst.msk [vmem:[%s3 + $0x1c] sm:$0xf] %vm2430, %v2339
  %2439 = vst.msk [vmem:[%s3 + $0x20] sm:$0xf] %vm2430, %v2340
  %2440 = vst.msk [vmem:[%s3 + $0x24] sm:$0xf] %vm2430, %v2341
  %2441 = vst.msk [vmem:[%s3 + $0x28] sm:$0xf] %vm2430, %v2342
  %2442 = vst.msk [vmem:[%s3 + $0x2c] sm:$0xf] %vm2430, %v2343
  %2443 = vst.msk [vmem:[%s3 + $0x30] sm:$0xf] %vm2430, %v2344
  %2444 = vst.msk [vmem:[%s3 + $0x34] sm:$0xf] %vm2430, %v2345
  %2445 = vst.msk [vmem:[%s3 + $0x38] sm:$0xf] %vm2430, %v2346
  %2446 = vst.msk [vmem:[%s3 + $0x3c] sm:$0xf] %vm2430, %v2347
  %2447 = vst.msk [vmem:[%s3 + $0x40] sm:$0xf] %vm2430, %v2348
  %2448 = vst.msk [vmem:[%s3 + $0x44] sm:$0xf] %vm2430, %v2349
  %2449 = vst.msk [vmem:[%s3 + $0x48] sm:$0xf] %vm2430, %v2350
  %2450 = vst.msk [vmem:[%s3 + $0x4c] sm:$0xf] %vm2430, %v2351
  %2451 = vst.msk [vmem:[%s3 + $0x50] sm:$0xf] %vm2430, %v2352
  %2452 = vst.msk [vmem:[%s3 + $0x54] sm:$0xf] %vm2430, %v2353
  %2453 = vst.msk [vmem:[%s3 + $0x58] sm:$0xf] %vm2430, %v2354
  %2454 = vst.msk [vmem:[%s3 + $0x5c] sm:$0xf] %vm2430, %v2355
  %2455 = vst.msk [vmem:[%s3 + $0x60] sm:$0xf] %vm2430, %v2356
  %2456 = vst.msk [vmem:[%s3 + $0x64] sm:$0xf] %vm2430, %v2357
  %2457 = vst.msk [vmem:[%s3 + $0x68] sm:$0xf] %vm2430, %v2358
  %2458 = vst.msk [vmem:[%s3 + $0x6c] sm:$0xf] %vm2430, %v2359
  %2459 = vst.msk [vmem:[%s3 + $0x70] sm:$0xf] %vm2430, %v2360
  %2460 = vst.msk [vmem:[%s3 + $0x74] sm:$0xf] %vm2430, %v2361
  %2461 = vst.msk [vmem:[%s3 + $0x78] sm:$0xf] %vm2430, %v2362
  %2462 = vst.msk [vmem:[%s3 + $0x7c] sm:$0xf] %vm2430, %v2363
  %2463 = vst.msk [vmem:[%s3 + $0x80] sm:$0xf] %vm2430, %v2364
  %2464 = vst.msk [vmem:[%s3 + $0x84] sm:$0xf] %vm2430, %v2365
  %2465 = vst.msk [vmem:[%s3 + $0x88] sm:$0xf] %vm2430, %v2366
  %2466 = vst.msk [vmem:[%s3 + $0x8c] sm:$0xf] %vm2430, %v2367
  %2467 = vst.msk [vmem:[%s3 + $0x90] sm:$0xf] %vm2430, %v2368
  %2468 = vst.msk [vmem:[%s3 + $0x94] sm:$0xf] %vm2430, %v2369
  %2469 = vst.msk [vmem:[%s3 + $0x98] sm:$0xf] %vm2430, %v2370
  %2470 = vst.msk [vmem:[%s3 + $0x9c] sm:$0xf] %vm2430, %v2371
  %2471 = vst.msk [vmem:[%s3 + $0xa0] sm:$0xf] %vm2430, %v2372
  %2472 = vst.msk [vmem:[%s3 + $0xa4] sm:$0xf] %vm2430, %v2373
  %2473 = vst.msk [vmem:[%s3 + $0xa8] sm:$0xf] %vm2430, %v2374
  %2474 = vst.msk [vmem:[%s3 + $0xac] sm:$0xf] %vm2430, %v2375
  %2475 = vst.msk [vmem:[%s3 + $0xb0] sm:$0xf] %vm2430, %v2376
  %2476 = vst.msk [vmem:[%s3 + $0xb4] sm:$0xf] %vm2430, %v2377
  %2477 = vst.msk [vmem:[%s3 + $0xb8] sm:$0xf] %vm2430, %v2378
  %2478 = vst.msk [vmem:[%s3 + $0xbc] sm:$0xf] %vm2430, %v2379
  %2479 = vst.msk [vmem:[%s3 + $0xc0] sm:$0xf] %vm2430, %v2380
  // Predicated region
  $region14: #{net_forward.2} parent=0 // pred_check
    _
  $region15: #{net_forward.2} parent=0 // pred_check_branch
    %2481 = sbr.rel (0) target = $region17
  $region16: #{net_forward.2} parent=0 // pred_region
    _
  $region17: #{net_forward.2} parent=0 // pred_fallthru
    _
  // Predicated region
  $region18: #{net_forward.2} parent=0 // pred_check
    _
  $region19: #{net_forward.2} parent=0 // pred_check_branch
    %2483 = sbr.rel (0) target = $region21
  $region20: #{net_forward.2} parent=0 // pred_region
    _
  $region21: #{net_forward.2} parent=0 // pred_fallthru
    _

// kernel: net_forward.3
$region0: #{net_forward.3}
  #allocation0 [shape = 'u32[]', space=smem, size = 0x4, offset = 0x4, fixed_abs, tag = 'smem constant byte address 0x4 - core index']
  #allocation1 [shape = 'u32[144,128]{1,0:T(1,128)}', space=vmem, size = 0x12000, scoped, tag = 'internal scratch']
  %s0 = inlined_call_operand.vmem [shape: bf16[4,50,400], index: 0, kind: input, shape index: {}]
  %s1 = inlined_call_operand.vmem [shape: bf16[400,32], index: 1, kind: input, shape index: {}]
  %s2 = inlined_call_operand.vmem [shape: f32[1,32], index: 2, kind: input, shape index: {}]
  %s3 = inlined_call_operand.vmem [shape: bf16[25,32,64], index: 3, kind: input, shape index: {}]
  %s4 = inlined_call_operand.vmem [shape: f32[1,64], index: 4, kind: input, shape index: {}]
  %s5 = inlined_call_operand.vmem [shape: bf16[64,128], index: 5, kind: input, shape index: {}]
  %s6 = inlined_call_operand.vmem [shape: f32[1,128], index: 6, kind: input, shape index: {}]
  %s7 = inlined_call_operand.vmem [shape: bf16[128,128], index: 7, kind: input, shape index: {}]
  %s8 = inlined_call_operand.vmem [shape: f32[1,128], index: 8, kind: input, shape index: {}]
  %s9 = inlined_call_operand.hbm [shape: f32[2,128], index: 9, kind: output, shape index: {}]
  %s10 = sld [smem:[#allocation0]]
  $region46: #{net_forward.3} parent=0
    _
  %s12 = ssub.s32 1, %s10
  %s13 = scalar_select 0, %s12, %s10
  $region1: #{net_forward.3} parent=0
    #allocation2 [shape = 'u8[1024]{0}', space=vmem, size = 0x400, scoped, tag = 'output window, operand 0, single buffered']
    #allocation3 [shape = 's32[1]{0}', space=sflag, size = 0x4, scoped, tag = 'scoped memory for net_forward.3']
    %14 = vsyncpa [#allocation3], 0
    // Predicated region
    $region2: #{net_forward.3} parent=1 // pred_check
      _
    $region3: #{net_forward.3} parent=1 // pred_check_branch
      %16 = sbr.rel (0) target = $region5
    $region4: #{net_forward.3} parent=1 // pred_region
      _
    $region5: #{net_forward.3} parent=1 // pred_fallthru
      _
    // Predicated region
    $region6: #{net_forward.3} parent=1 // pred_check
      _
    $region7: #{net_forward.3} parent=1 // pred_check_branch
      %18 = sbr.rel (0) target = $region9
    $region8: #{net_forward.3} parent=1 // pred_region
      _
    $region9: #{net_forward.3} parent=1 // pred_fallthru
      _
    // Predicated region
    $region10: #{net_forward.3} parent=1 // pred_check
      _
    $region11: #{net_forward.3} parent=1 // pred_check_branch
      %20 = sbr.rel (0) target = $region13
    $region12: #{net_forward.3} parent=1 // pred_region
      _
    $region13: #{net_forward.3} parent=1 // pred_fallthru
      _
    // Predicated region
    $region14: #{net_forward.3} parent=1 // pred_check
      _
    $region15: #{net_forward.3} parent=1 // pred_check_branch
      %22 = sbr.rel (0) target = $region17
    $region16: #{net_forward.3} parent=1 // pred_region
      _
    $region17: #{net_forward.3} parent=1 // pred_fallthru
      _
    // Predicated region
    $region18: #{net_forward.3} parent=1 // pred_check
      _
    $region19: #{net_forward.3} parent=1 // pred_check_branch
      %24 = sbr.rel (0) target = $region21
    $region20: #{net_forward.3} parent=1 // pred_region
      _
    $region21: #{net_forward.3} parent=1 // pred_fallthru
      _
    // Predicated region
    $region22: #{net_forward.3} parent=1 // pred_check
      _
    $region23: #{net_forward.3} parent=1 // pred_check_branch
      %26 = sbr.rel (0) target = $region25
    $region24: #{net_forward.3} parent=1 // pred_region
      _
    $region25: #{net_forward.3} parent=1 // pred_fallthru
      _
    // Predicated region
    $region26: #{net_forward.3} parent=1 // pred_check
      _
    $region27: #{net_forward.3} parent=1 // pred_check_branch
      %28 = sbr.rel (0) target = $region29
    $region28: #{net_forward.3} parent=1 // pred_region
      _
    $region29: #{net_forward.3} parent=1 // pred_fallthru
      _
    // Predicated region
    $region30: #{net_forward.3} parent=1 // pred_check
      _
    $region31: #{net_forward.3} parent=1 // pred_check_branch
      %30 = sbr.rel (0) target = $region33
    $region32: #{net_forward.3} parent=1 // pred_region
      _
    $region33: #{net_forward.3} parent=1 // pred_fallthru
      _
    // Predicated region
    $region34: #{net_forward.3} parent=1 // pred_check
      _
    $region35: #{net_forward.3} parent=1 // pred_check_branch
      %32 = sbr.rel (0) target = $region37
    $region36: #{net_forward.3} parent=1 // pred_region
      _
    $region37: #{net_forward.3} parent=1 // pred_fallthru
      _
    %v34 = vld [vmem:[%s1] sm:$0xf]
    %v35 = vld [vmem:[%s1 + $0x4] sm:$0xf]
    %v36 = vld [vmem:[%s1 + $0x8] sm:$0xf]
    %v37 = vld [vmem:[%s1 + $0xc] sm:$0xf]
    %v38 = vld [vmem:[%s1 + $0x10] sm:$0xf]
    %v39 = vld [vmem:[%s1 + $0x14] sm:$0xf]
    %v40 = vld [vmem:[%s1 + $0x18] sm:$0xf]
    %v41 = vld [vmem:[%s1 + $0x1c] sm:$0xf]
    %v42 = vld [vmem:[%s1 + $0x20] sm:$0xf]
    %v43 = vld [vmem:[%s1 + $0x24] sm:$0xf]
    %v44 = vld [vmem:[%s1 + $0x28] sm:$0xf]
    %v45 = vld [vmem:[%s1 + $0x2c] sm:$0xf]
    %v46 = vld [vmem:[%s1 + $0x30] sm:$0xf]
    %v47 = vld [vmem:[%s1 + $0x34] sm:$0xf]
    %v48 = vld [vmem:[%s1 + $0x38] sm:$0xf]
    %v49 = vld [vmem:[%s1 + $0x3c] sm:$0xf]
    %v50 = vld [vmem:[%s1 + $0x40] sm:$0xf]
    %v51 = vld [vmem:[%s1 + $0x44] sm:$0xf]
    %v52 = vld [vmem:[%s1 + $0x48] sm:$0xf]
    %v53 = vld [vmem:[%s1 + $0x4c] sm:$0xf]
    %v54 = vld [vmem:[%s1 + $0x50] sm:$0xf]
    %v55 = vld [vmem:[%s1 + $0x54] sm:$0xf]
    %v56 = vld [vmem:[%s1 + $0x58] sm:$0xf]
    %v57 = vld [vmem:[%s1 + $0x5c] sm:$0xf]
    %v58 = vld [vmem:[%s1 + $0x60] sm:$0xf]
    %v59 = vld [vmem:[%s1 + $0x64] sm:$0xf]
    %v60 = vld [vmem:[%s1 + $0x68] sm:$0xf]
    %v61 = vld [vmem:[%s1 + $0x6c] sm:$0xf]
    %v62 = vld [vmem:[%s1 + $0x70] sm:$0xf]
    %v63 = vld [vmem:[%s1 + $0x74] sm:$0xf]
    %v64 = vld [vmem:[%s1 + $0x78] sm:$0xf]
    %v65 = vld [vmem:[%s1 + $0x7c] sm:$0xf]
    %v66 = vld [vmem:[%s1 + $0x80] sm:$0xf]
    %v67 = vld [vmem:[%s1 + $0x84] sm:$0xf]
    %v68 = vld [vmem:[%s1 + $0x88] sm:$0xf]
    %v69 = vld [vmem:[%s1 + $0x8c] sm:$0xf]
    %v70 = vld [vmem:[%s1 + $0x90] sm:$0xf]
    %v71 = vld [vmem:[%s1 + $0x94] sm:$0xf]
    %v72 = vld [vmem:[%s1 + $0x98] sm:$0xf]
    %v73 = vld [vmem:[%s1 + $0x9c] sm:$0xf]
    %v74 = vld [vmem:[%s1 + $0xa0] sm:$0xf]
    %v75 = vld [vmem:[%s1 + $0xa4] sm:$0xf]
    %v76 = vld [vmem:[%s1 + $0xa8] sm:$0xf]
    %v77 = vld [vmem:[%s1 + $0xac] sm:$0xf]
    %v78 = vld [vmem:[%s1 + $0xb0] sm:$0xf]
    %v79 = vld [vmem:[%s1 + $0xb4] sm:$0xf]
    %v80 = vld [vmem:[%s1 + $0xb8] sm:$0xf]
    %v81 = vld [vmem:[%s1 + $0xbc] sm:$0xf]
    %v82 = vld [vmem:[%s1 + $0xc0] sm:$0xf]
    %v83 = vld [vmem:[%s1 + $0xc4] sm:$0xf]
    %v84 = vld [vmem:[%s0] sm:$0xff]
    %v85 = vld [vmem:[%s0 + $0x8] sm:$0xff]
    %v86 = vld [vmem:[%s0 + $0x10] sm:$0xff]
    %v87 = vld [vmem:[%s0 + $0x18] sm:$0xff]
    %v88 = vld [vmem:[%s0 + $0x20] sm:$0xff]
    %v89 = vld [vmem:[%s0 + $0x28] sm:$0xff]
    %v90 = vld [vmem:[%s0 + $0x30] sm:$0xff]
    %v91 = vld [vmem:[%s0 + $0x38] sm:$0xff]
    %v92 = vld [vmem:[%s0 + $0x40] sm:$0xff]
    %v93 = vld [vmem:[%s0 + $0x48] sm:$0xff]
    %v94 = vld [vmem:[%s0 + $0x50] sm:$0xff]
    %v95 = vld [vmem:[%s0 + $0x58] sm:$0xff]
    %v96 = vld [vmem:[%s0 + $0x60] sm:$0x11]
    %v97 = vld [vmem:[%s0 + $0x68] sm:$0x11]
    %v112 = vunpack.c.l.b16 %v84
    %v113 = vunpack.c.h.b16 %v84
    %v114 = vunpack.c.l.b16 %v85
    %v115 = vunpack.c.h.b16 %v85
    %v116 = vunpack.c.l.b16 %v86
    %v117 = vunpack.c.h.b16 %v86
    %v118 = vunpack.c.l.b16 %v87
    %v119 = vunpack.c.h.b16 %v87
    %v120 = vunpack.c.l.b16 %v88
    %v121 = vunpack.c.h.b16 %v88
    %v122 = vunpack.c.l.b16 %v89
    %v123 = vunpack.c.h.b16 %v89
    %v124 = vunpack.c.l.b16 %v90
    %v125 = vunpack.c.h.b16 %v90
    %v126 = vunpack.c.l.b16 %v91
    %v127 = vunpack.c.h.b16 %v91
    %v128 = vunpack.c.l.b16 %v92
    %v129 = vunpack.c.h.b16 %v92
    %v130 = vunpack.c.l.b16 %v93
    %v131 = vunpack.c.h.b16 %v93
    %v132 = vunpack.c.l.b16 %v94
    %v133 = vunpack.c.h.b16 %v94
    %v134 = vunpack.c.l.b16 %v95
    %v135 = vunpack.c.h.b16 %v95
    %v136 = vunpack.c.l.b16 %v96
    %v137 = vunpack.c.h.b16 %v96
    %v138 = vunpack.c.l.b16 %v97
    %v139 = vunpack.c.h.b16 %v97
    %v140 = vpack.c.b16 %v116, %v112
    %v141 = vpack.c.b16 %v117, %v113
    %v142 = vpack.c.b16 %v118, %v114
    %v143 = vpack.c.b16 %v119, %v115
    %v144 = vpack.c.b16 %v124, %v120
    %v145 = vpack.c.b16 %v125, %v121
    %v146 = vpack.c.b16 %v126, %v122
    %v147 = vpack.c.b16 %v127, %v123
    %v148 = vpack.c.b16 %v132, %v128
    %v149 = vpack.c.b16 %v133, %v129
    %v150 = vpack.c.b16 %v134, %v130
    %v151 = vpack.c.b16 %v135, %v131
    %v152 = vpack.c.b16 %v136, %v136
    %v153 = vpack.c.b16 %v137, %v137
    %v154 = vpack.c.b16 %v138, %v138
    %v155 = vpack.c.b16 %v139, %v139
    %v218 = vunpack.c.l.b16 %v34
    %v219 = vunpack.c.l.b16 %v35
    %v220 = vunpack.c.l.b16 %v36
    %v221 = vunpack.c.l.b16 %v37
    %v222 = vunpack.c.l.b16 %v38
    %v223 = vunpack.c.l.b16 %v39
    %v224 = vunpack.c.l.b16 %v40
    %v225 = vunpack.c.l.b16 %v41
    %v226 = vunpack.c.l.b16 %v42
    %v227 = vunpack.c.l.b16 %v43
    %v228 = vunpack.c.l.b16 %v44
    %v229 = vunpack.c.l.b16 %v45
    %v230 = vunpack.c.l.b16 %v46
    %v231 = vunpack.c.l.b16 %v47
    %v232 = vunpack.c.l.b16 %v48
    %v233 = vunpack.c.l.b16 %v49
    %v234 = vunpack.c.l.b16 %v50
    %v235 = vunpack.c.l.b16 %v51
    %v236 = vunpack.c.l.b16 %v52
    %v237 = vunpack.c.l.b16 %v53
    %v238 = vunpack.c.l.b16 %v54
    %v239 = vunpack.c.l.b16 %v55
    %v240 = vunpack.c.l.b16 %v56
    %v241 = vunpack.c.l.b16 %v57
    %v242 = vunpack.c.l.b16 %v58
    %v243 = vunpack.c.l.b16 %v59
    %v244 = vunpack.c.l.b16 %v60
    %v245 = vunpack.c.l.b16 %v61
    %v246 = vunpack.c.l.b16 %v62
    %v247 = vunpack.c.l.b16 %v63
    %v248 = vunpack.c.l.b16 %v64
    %v249 = vunpack.c.l.b16 %v65
    %v250 = vunpack.c.l.b16 %v66
    %v251 = vunpack.c.l.b16 %v67
    %v252 = vunpack.c.l.b16 %v68
    %v253 = vunpack.c.l.b16 %v69
    %v254 = vunpack.c.l.b16 %v70
    %v255 = vunpack.c.l.b16 %v71
    %v256 = vunpack.c.l.b16 %v72
    %v257 = vunpack.c.l.b16 %v73
    %v258 = vunpack.c.l.b16 %v74
    %v259 = vunpack.c.l.b16 %v75
    %v260 = vunpack.c.l.b16 %v76
    %v261 = vunpack.c.l.b16 %v77
    %v262 = vunpack.c.l.b16 %v78
    %v263 = vunpack.c.l.b16 %v79
    %v264 = vunpack.c.l.b16 %v80
    %v265 = vunpack.c.l.b16 %v81
    %v266 = vunpack.c.l.b16 %v82
    %v267 = vunpack.c.l.b16 %v83
    %v268 = vpack.c.b16 %v219, %v218
    %v269 = vpack.c.b16 %v221, %v220
    %v270 = vpack.c.b16 %v223, %v222
    %v271 = vpack.c.b16 %v225, %v224
    %v272 = vpack.c.b16 %v227, %v226
    %v273 = vpack.c.b16 %v229, %v228
    %v274 = vpack.c.b16 %v231, %v230
    %v275 = vpack.c.b16 %v233, %v232
    %v276 = vpack.c.b16 %v235, %v234
    %v277 = vpack.c.b16 %v237, %v236
    %v278 = vpack.c.b16 %v239, %v238
    %v279 = vpack.c.b16 %v241, %v240
    %v280 = vpack.c.b16 %v243, %v242
    %v281 = vpack.c.b16 %v245, %v244
    %v282 = vpack.c.b16 %v247, %v246
    %v283 = vpack.c.b16 %v249, %v248
    %v284 = vpack.c.b16 %v251, %v250
    %v285 = vpack.c.b16 %v253, %v252
    %v286 = vpack.c.b16 %v255, %v254
    %v287 = vpack.c.b16 %v257, %v256
    %v288 = vpack.c.b16 %v259, %v258
    %v289 = vpack.c.b16 %v261, %v260
    %v290 = vpack.c.b16 %v263, %v262
    %v291 = vpack.c.b16 %v265, %v264
    %v292 = vpack.c.b16 %v267, %v266
    %vm318 = vcmask 130048
    %v320 = vsel %vm318, %v143, 0
    %v323 = vsel %vm318, %v147, 0
    %v326 = vsel %vm318, %v151, 0
    %v329 = vsel %vm318, %v155, 0
    %331 = vmatprep.subr.bf16.mxu0 0
    %332 = vmatpush1.bf16.msra.mxu0 %v268
    %333 = vmatprep.subr.bf16.mxu0 0
    %334 = vmatpush1.bf16.msra.mxu0 %v269
    %335 = vmatprep.subr.bf16.mxu0 0
    %336 = vmatpush1.bf16.msra.mxu0 %v270
    %337 = vmatprep.subr.bf16.mxu0 0
    %338 = vmatpush1.bf16.msra.mxu0 %v271
    %339 = vmatprep.subr.bf16.mxu0 0
    %340 = vmatpush1.bf16.msra.mxu0 %v272
    %341 = vmatprep.subr.bf16.mxu0 0
    %342 = vmatpush1.bf16.msra.mxu0 %v273
    %343 = vmatprep.subr.bf16.mxu0 0
    %344 = vmatpush1.bf16.msra.mxu0 %v274
    %345 = vmatprep.subr.bf16.mxu0 0
    %346 = vmatpush1.bf16.msra.mxu0 %v275
    %347 = vmatprep.subr.bf16.mxu0 0
    %348 = vmatpush1.bf16.msra.mxu0 %v276
    %349 = vmatprep.subr.bf16.mxu0 0
    %350 = vmatpush1.bf16.msra.mxu0 %v277
    %351 = vmatprep.subr.bf16.mxu0 0
    %352 = vmatpush1.bf16.msra.mxu0 %v278
    %353 = vmatprep.subr.bf16.mxu0 0
    %354 = vmatpush1.bf16.msra.mxu0 %v279
    %355 = vmatprep.subr.bf16.mxu0 0
    %356 = vmatpush1.bf16.msra.mxu0 %v280
    %357 = vmatprep.subr.bf16.mxu0 0
    %358 = vmatpush1.bf16.msra.mxu0 %v281
    %359 = vmatprep.subr.bf16.mxu0 0
    %360 = vmatpush1.bf16.msra.mxu0 %v282
    %361 = vmatprep.subr.bf16.mxu0 0
    %362 = vmatpush1.bf16.msra.mxu0 %v283
    %363 = vmatprep.mubr.bf16.mxu0 %v141
    %364 = vmatmul.mubr.bf16.gmra.mrb[0].mxu0 %v140
    %v365 = vpop.f32.mrb[0].mxu0
    %v366 = vadd.f32 0.0, %v365
    %v367 = vpop.f32.mrb[0].mxu0
    %v368 = vpop.f32.mrb[0].mxu0
    %v369 = vadd.f32 0.0, %v368
    %v370 = vpop.f32.mrb[0].mxu0
    %371 = vmatprep.mubr.bf16.mxu0 %v145
    %372 = vmatmul.mubr.bf16.gmra.mrb[0].mxu0 %v144
    %v373 = vpop.f32.mrb[0].mxu0
    %v374 = vadd.f32 0.0, %v373
    %v375 = vpop.f32.mrb[0].mxu0
    %v376 = vpop.f32.mrb[0].mxu0
    %v377 = vadd.f32 0.0, %v376
    %v378 = vpop.f32.mrb[0].mxu0
    %379 = vmatprep.mubr.bf16.mxu0 %v149
    %380 = vmatmul.mubr.bf16.gmra.mrb[0].mxu0 %v148
    %v381 = vpop.f32.mrb[0].mxu0
    %v382 = vadd.f32 0.0, %v381
    %v383 = vpop.f32.mrb[0].mxu0
    %v384 = vpop.f32.mrb[0].mxu0
    %v385 = vadd.f32 0.0, %v384
    %v386 = vpop.f32.mrb[0].mxu0
    %387 = vmatprep.mubr.bf16.mxu0 %v153
    %388 = vmatmul.mubr.bf16.gmra.mrb[0].mxu0 %v152
    %v389 = vpop.f32.mrb[0].mxu0
    %v390 = vadd.f32 0.0, %v389
    %v391 = vpop.f32.mrb[0].mxu0
    %v392 = vpop.f32.mrb[0].mxu0
    %v393 = vpop.f32.mrb[0].mxu0
    %394 = vdwg.mxu0
    %395 = vmatprep.subr.bf16.mxu0 0
    %396 = vmatpush1.bf16.msra.mxu0 %v284
    %397 = vmatprep.subr.bf16.mxu0 0
    %398 = vmatpush1.bf16.msra.mxu0 %v285
    %399 = vmatprep.subr.bf16.mxu0 0
    %400 = vmatpush1.bf16.msra.mxu0 %v286
    %401 = vmatprep.subr.bf16.mxu0 0
    %402 = vmatpush1.bf16.msra.mxu0 %v287
    %403 = vmatprep.subr.bf16.mxu0 0
    %404 = vmatpush1.bf16.msra.mxu0 %v288
    %405 = vmatprep.subr.bf16.mxu0 0
    %406 = vmatpush1.bf16.msra.mxu0 %v289
    %407 = vmatprep.subr.bf16.mxu0 0
    %408 = vmatpush1.bf16.msra.mxu0 %v290
    %409 = vmatprep.subr.bf16.mxu0 0
    %410 = vmatpush1.bf16.msra.mxu0 %v291
    %411 = vmatprep.subr.bf16.mxu0 0
    %412 = vmatpush1.bf16.msra.mxu0 %v292
    %413 = vmatprep.subr.bf16.mxu0 0
    %414 = vmatpush1.bf16.msra.mxu0 0
    %415 = vmatprep.subr.bf16.mxu0 0
    %416 = vmatpush1.bf16.msra.mxu0 0
    %417 = vmatprep.subr.bf16.mxu0 0
    %418 = vmatpush1.bf16.msra.mxu0 0
    %419 = vmatprep.subr.bf16.mxu0 0
    %420 = vmatpush1.bf16.msra.mxu0 0
    %421 = vmatprep.subr.bf16.mxu0 0
    %422 = vmatpush1.bf16.msra.mxu0 0
    %423 = vmatprep.subr.bf16.mxu0 0
    %424 = vmatpush1.bf16.msra.mxu0 0
    %425 = vmatprep.subr.bf16.mxu0 0
    %426 = vmatpush1.bf16.msra.mxu0 0
    %427 = vmatprep.mubr.bf16.mxu0 %v320
    %428 = vmatmul.mubr.bf16.gmra.mrb[0].mxu0 %v142
    %v429 = vpop.f32.mrb[0].mxu0
    %v430 = vadd.f32 %v366, %v429
    %v431 = vpop.f32.mrb[0].mxu0
    %v432 = vpop.f32.mrb[0].mxu0
    %v433 = vadd.f32 %v369, %v432
    %v434 = vpop.f32.mrb[0].mxu0
    %435 = vmatprep.mubr.bf16.mxu0 %v323
    %436 = vmatmul.mubr.bf16.gmra.mrb[0].mxu0 %v146
    %v437 = vpop.f32.mrb[0].mxu0
    %v438 = vadd.f32 %v374, %v437
    %v439 = vpop.f32.mrb[0].mxu0
    %v440 = vpop.f32.mrb[0].mxu0
    %v441 = vadd.f32 %v377, %v440
    %v442 = vpop.f32.mrb[0].mxu0
    %443 = vmatprep.mubr.bf16.mxu0 %v326
    %444 = vmatmul.mubr.bf16.gmra.mrb[0].mxu0 %v150
    %v445 = vpop.f32.mrb[0].mxu0
    %v446 = vadd.f32 %v382, %v445
    %v447 = vpop.f32.mrb[0].mxu0
    %v448 = vpop.f32.mrb[0].mxu0
    %v449 = vadd.f32 %v385, %v448
    %v450 = vpop.f32.mrb[0].mxu0
    %451 = vmatprep.mubr.bf16.mxu0 %v329
    %452 = vmatmul.mubr.bf16.gmra.mrb[0].mxu0 %v154
    %v453 = vpop.f32.mrb[0].mxu0
    %v454 = vadd.f32 %v390, %v453
    %v455 = vpop.f32.mrb[0].mxu0
    %v456 = vpop.f32.mrb[0].mxu0
    %v457 = vpop.f32.mrb[0].mxu0
    %458 = vdwg.mxu0
    %s459 = scalar_lea.vmem %s0, 112
    %v460 = vld [vmem:[%s459] sm:$0xff]
    %v461 = vld [vmem:[%s459 + $0x8] sm:$0xff]
    %v462 = vld [vmem:[%s459 + $0x10] sm:$0xff]
    %v463 = vld [vmem:[%s459 + $0x18] sm:$0xff]
    %v464 = vld [vmem:[%s459 + $0x20] sm:$0xff]
    %v465 = vld [vmem:[%s459 + $0x28] sm:$0xff]
    %v466 = vld [vmem:[%s459 + $0x30] sm:$0xff]
    %v467 = vld [vmem:[%s459 + $0x38] sm:$0xff]
    %v468 = vld [vmem:[%s459 + $0x40] sm:$0xff]
    %v469 = vld [vmem:[%s459 + $0x48] sm:$0xff]
    %v470 = vld [vmem:[%s459 + $0x50] sm:$0xff]
    %v471 = vld [vmem:[%s459 + $0x58] sm:$0xff]
    %v472 = vld [vmem:[%s459 + $0x60] sm:$0x11]
    %v473 = vld [vmem:[%s459 + $0x68] sm:$0x11]
    %v488 = vunpack.c.l.b16 %v460
    %v489 = vunpack.c.h.b16 %v460
    %v490 = vunpack.c.l.b16 %v461
    %v491 = vunpack.c.h.b16 %v461
    %v492 = vunpack.c.l.b16 %v462
    %v493 = vunpack.c.h.b16 %v462
    %v494 = vunpack.c.l.b16 %v463
    %v495 = vunpack.c.h.b16 %v463
    %v496 = vunpack.c.l.b16 %v464
    %v497 = vunpack.c.h.b16 %v464
    %v498 = vunpack.c.l.b16 %v465
    %v499 = vunpack.c.h.b16 %v465
    %v500 = vunpack.c.l.b16 %v466
    %v501 = vunpack.c.h.b16 %v466
    %v502 = vunpack.c.l.b16 %v467
    %v503 = vunpack.c.h.b16 %v467
    %v504 = vunpack.c.l.b16 %v468
    %v505 = vunpack.c.h.b16 %v468
    %v506 = vunpack.c.l.b16 %v469
    %v507 = vunpack.c.h.b16 %v469
    %v508 = vunpack.c.l.b16 %v470
    %v509 = vunpack.c.h.b16 %v470
    %v510 = vunpack.c.l.b16 %v471
    %v511 = vunpack.c.h.b16 %v471
    %v512 = vunpack.c.l.b16 %v472
    %v513 = vunpack.c.h.b16 %v472
    %v514 = vunpack.c.l.b16 %v473
    %v515 = vunpack.c.h.b16 %v473
    %v516 = vpack.c.b16 %v492, %v488
    %v517 = vpack.c.b16 %v493, %v489
    %v518 = vpack.c.b16 %v494, %v490
    %v519 = vpack.c.b16 %v495, %v491
    %v520 = vpack.c.b16 %v500, %v496
    %v521 = vpack.c.b16 %v501, %v497
    %v522 = vpack.c.b16 %v502, %v498
    %v523 = vpack.c.b16 %v503, %v499
    %v524 = vpack.c.b16 %v508, %v504
    %v525 = vpack.c.b16 %v509, %v505
    %v526 = vpack.c.b16 %v510, %v506
    %v527 = vpack.c.b16 %v511, %v507
    %v528 = vpack.c.b16 %v512, %v512
    %v529 = vpack.c.b16 %v513, %v513
    %v530 = vpack.c.b16 %v514, %v514
    %v531 = vpack.c.b16 %v515, %v515
    %v545 = vsel %vm318, %v519, 0
    %v548 = vsel %vm318, %v523, 0
    %v551 = vsel %vm318, %v527, 0
    %v554 = vsel %vm318, %v531, 0
    %556 = vmatprep.subr.bf16.mxu0 0
    %557 = vmatpush1.bf16.msra.mxu0 %v268
    %558 = vmatprep.subr.bf16.mxu0 0
    %559 = vmatpush1.bf16.msra.mxu0 %v269
    %560 = vmatprep.subr.bf16.mxu0 0
    %561 = vmatpush1.bf16.msra.mxu0 %v270
    %562 = vmatprep.subr.bf16.mxu0 0
    %563 = vmatpush1.bf16.msra.mxu0 %v271
    %564 = vmatprep.subr.bf16.mxu0 0
    %565 = vmatpush1.bf16.msra.mxu0 %v272
    %566 = vmatprep.subr.bf16.mxu0 0
    %567 = vmatpush1.bf16.msra.mxu0 %v273
    %568 = vmatprep.subr.bf16.mxu0 0
    %569 = vmatpush1.bf16.msra.mxu0 %v274
    %570 = vmatprep.subr.bf16.mxu0 0
    %571 = vmatpush1.bf16.msra.mxu0 %v275
    %572 = vmatprep.subr.bf16.mxu0 0
    %573 = vmatpush1.bf16.msra.mxu0 %v276
    %574 = vmatprep.subr.bf16.mxu0 0
    %575 = vmatpush1.bf16.msra.mxu0 %v277
    %576 = vmatprep.subr.bf16.mxu0 0
    %577 = vmatpush1.bf16.msra.mxu0 %v278
    %578 = vmatprep.subr.bf16.mxu0 0
    %579 = vmatpush1.bf16.msra.mxu0 %v279
    %580 = vmatprep.subr.bf16.mxu0 0
    %581 = vmatpush1.bf16.msra.mxu0 %v280
    %582 = vmatprep.subr.bf16.mxu0 0
    %583 = vmatpush1.bf16.msra.mxu0 %v281
    %584 = vmatprep.subr.bf16.mxu0 0
    %585 = vmatpush1.bf16.msra.mxu0 %v282
    %586 = vmatprep.subr.bf16.mxu0 0
    %587 = vmatpush1.bf16.msra.mxu0 %v283
    %588 = vmatprep.mubr.bf16.mxu0 %v517
    %589 = vmatmul.mubr.bf16.gmra.mrb[0].mxu0 %v516
    %v590 = vpop.f32.mrb[0].mxu0
    %v591 = vadd.f32 0.0, %v590
    %v592 = vpop.f32.mrb[0].mxu0
    %v593 = vpop.f32.mrb[0].mxu0
    %v594 = vadd.f32 0.0, %v593
    %v595 = vpop.f32.mrb[0].mxu0
    %596 = vmatprep.mubr.bf16.mxu0 %v521
    %597 = vmatmul.mubr.bf16.gmra.mrb[0].mxu0 %v520
    %v598 = vpop.f32.mrb[0].mxu0
    %v599 = vadd.f32 0.0, %v598
    %v600 = vpop.f32.mrb[0].mxu0
    %v601 = vpop.f32.mrb[0].mxu0
    %v602 = vadd.f32 0.0, %v601
    %v603 = vpop.f32.mrb[0].mxu0
    %604 = vmatprep.mubr.bf16.mxu0 %v525
    %605 = vmatmul.mubr.bf16.gmra.mrb[0].mxu0 %v524
    %v606 = vpop.f32.mrb[0].mxu0
    %v607 = vadd.f32 0.0, %v606
    %v608 = vpop.f32.mrb[0].mxu0
    %v609 = vpop.f32.mrb[0].mxu0
    %v610 = vadd.f32 0.0, %v609
    %v611 = vpop.f32.mrb[0].mxu0
    %612 = vmatprep.mubr.bf16.mxu0 %v529
    %613 = vmatmul.mubr.bf16.gmra.mrb[0].mxu0 %v528
    %v614 = vpop.f32.mrb[0].mxu0
    %v615 = vadd.f32 0.0, %v614
    %v616 = vpop.f32.mrb[0].mxu0
    %v617 = vpop.f32.mrb[0].mxu0
    %v618 = vpop.f32.mrb[0].mxu0
    %619 = vdwg.mxu0
    %620 = vmatprep.subr.bf16.mxu0 0
    %621 = vmatpush1.bf16.msra.mxu0 %v284
    %622 = vmatprep.subr.bf16.mxu0 0
    %623 = vmatpush1.bf16.msra.mxu0 %v285
    %624 = vmatprep.subr.bf16.mxu0 0
    %625 = vmatpush1.bf16.msra.mxu0 %v286
    %626 = vmatprep.subr.bf16.mxu0 0
    %627 = vmatpush1.bf16.msra.mxu0 %v287
    %628 = vmatprep.subr.bf16.mxu0 0
    %629 = vmatpush1.bf16.msra.mxu0 %v288
    %630 = vmatprep.subr.bf16.mxu0 0
    %631 = vmatpush1.bf16.msra.mxu0 %v289
    %632 = vmatprep.subr.bf16.mxu0 0
    %633 = vmatpush1.bf16.msra.mxu0 %v290
    %634 = vmatprep.subr.bf16.mxu0 0
    %635 = vmatpush1.bf16.msra.mxu0 %v291
    %636 = vmatprep.subr.bf16.mxu0 0
    %637 = vmatpush1.bf16.msra.mxu0 %v292
    %638 = vmatprep.subr.bf16.mxu0 0
    %639 = vmatpush1.bf16.msra.mxu0 0
    %640 = vmatprep.subr.bf16.mxu0 0
    %641 = vmatpush1.bf16.msra.mxu0 0
    %642 = vmatprep.subr.bf16.mxu0 0
    %643 = vmatpush1.bf16.msra.mxu0 0
    %644 = vmatprep.subr.bf16.mxu0 0
    %645 = vmatpush1.bf16.msra.mxu0 0
    %646 = vmatprep.subr.bf16.mxu0 0
    %647 = vmatpush1.bf16.msra.mxu0 0
    %648 = vmatprep.subr.bf16.mxu0 0
    %649 = vmatpush1.bf16.msra.mxu0 0
    %650 = vmatprep.subr.bf16.mxu0 0
    %651 = vmatpush1.bf16.msra.mxu0 0
    %652 = vmatprep.mubr.bf16.mxu0 %v545
    %653 = vmatmul.mubr.bf16.gmra.mrb[0].mxu0 %v518
    %v654 = vpop.f32.mrb[0].mxu0
    %v655 = vadd.f32 %v591, %v654
    %v656 = vpop.f32.mrb[0].mxu0
    %v657 = vpop.f32.mrb[0].mxu0
    %v658 = vadd.f32 %v594, %v657
    %v659 = vpop.f32.mrb[0].mxu0
    %660 = vmatprep.mubr.bf16.mxu0 %v548
    %661 = vmatmul.mubr.bf16.gmra.mrb[0].mxu0 %v522
    %v662 = vpop.f32.mrb[0].mxu0
    %v663 = vadd.f32 %v599, %v662
    %v664 = vpop.f32.mrb[0].mxu0
    %v665 = vpop.f32.mrb[0].mxu0
    %v666 = vadd.f32 %v602, %v665
    %v667 = vpop.f32.mrb[0].mxu0
    %668 = vmatprep.mubr.bf16.mxu0 %v551
    %669 = vmatmul.mubr.bf16.gmra.mrb[0].mxu0 %v526
    %v670 = vpop.f32.mrb[0].mxu0
    %v671 = vadd.f32 %v607, %v670
    %v672 = vpop.f32.mrb[0].mxu0
    %v673 = vpop.f32.mrb[0].mxu0
    %v674 = vadd.f32 %v610, %v673
    %v675 = vpop.f32.mrb[0].mxu0
    %676 = vmatprep.mubr.bf16.mxu0 %v554
    %677 = vmatmul.mubr.bf16.gmra.mrb[0].mxu0 %v530
    %v678 = vpop.f32.mrb[0].mxu0
    %v679 = vadd.f32 %v615, %v678
    %v680 = vpop.f32.mrb[0].mxu0
    %v681 = vpop.f32.mrb[0].mxu0
    %v682 = vpop.f32.mrb[0].mxu0
    %683 = vdwg.mxu0
    %v684 = vmax.f32 %v430, %v655
    %v685 = vmax.f32 %v433, %v658
    %v686 = vmax.f32 %v438, %v663
    %v687 = vmax.f32 %v441, %v666
    %v688 = vmax.f32 %v446, %v671
    %v689 = vmax.f32 %v449, %v674
    %v690 = vmax.f32 %v454, %v679
    %s691 = scalar_lea.vmem %s0, 224
    %v692 = vld [vmem:[%s691] sm:$0xff]
    %v693 = vld [vmem:[%s691 + $0x8] sm:$0xff]
    %v694 = vld [vmem:[%s691 + $0x10] sm:$0xff]
    %v695 = vld [vmem:[%s691 + $0x18] sm:$0xff]
    %v696 = vld [vmem:[%s691 + $0x20] sm:$0xff]
    %v697 = vld [vmem:[%s691 + $0x28] sm:$0xff]
    %v698 = vld [vmem:[%s691 + $0x30] sm:$0xff]
    %v699 = vld [vmem:[%s691 + $0x38] sm:$0xff]
    %v700 = vld [vmem:[%s691 + $0x40] sm:$0xff]
    %v701 = vld [vmem:[%s691 + $0x48] sm:$0xff]
    %v702 = vld [vmem:[%s691 + $0x50] sm:$0xff]
    %v703 = vld [vmem:[%s691 + $0x58] sm:$0xff]
    %v704 = vld [vmem:[%s691 + $0x60] sm:$0x11]
    %v705 = vld [vmem:[%s691 + $0x68] sm:$0x11]
    %v720 = vunpack.c.l.b16 %v692
    %v721 = vunpack.c.h.b16 %v692
    %v722 = vunpack.c.l.b16 %v693
    %v723 = vunpack.c.h.b16 %v693
    %v724 = vunpack.c.l.b16 %v694
    %v725 = vunpack.c.h.b16 %v694
    %v726 = vunpack.c.l.b16 %v695
    %v727 = vunpack.c.h.b16 %v695
    %v728 = vunpack.c.l.b16 %v696
    %v729 = vunpack.c.h.b16 %v696
    %v730 = vunpack.c.l.b16 %v697
    %v731 = vunpack.c.h.b16 %v697
    %v732 = vunpack.c.l.b16 %v698
    %v733 = vunpack.c.h.b16 %v698
    %v734 = vunpack.c.l.b16 %v699
    %v735 = vunpack.c.h.b16 %v699
    %v736 = vunpack.c.l.b16 %v700
    %v737 = vunpack.c.h.b16 %v700
    %v738 = vunpack.c.l.b16 %v701
    %v739 = vunpack.c.h.b16 %v701
    %v740 = vunpack.c.l.b16 %v702
    %v741 = vunpack.c.h.b16 %v702
    %v742 = vunpack.c.l.b16 %v703
    %v743 = vunpack.c.h.b16 %v703
    %v744 = vunpack.c.l.b16 %v704
    %v745 = vunpack.c.h.b16 %v704
    %v746 = vunpack.c.l.b16 %v705
    %v747 = vunpack.c.h.b16 %v705
    %v748 = vpack.c.b16 %v724, %v720
    %v749 = vpack.c.b16 %v725, %v721
    %v750 = vpack.c.b16 %v726, %v722
    %v751 = vpack.c.b16 %v727, %v723
    %v752 = vpack.c.b16 %v732, %v728
    %v753 = vpack.c.b16 %v733, %v729
    %v754 = vpack.c.b16 %v734, %v730
    %v755 = vpack.c.b16 %v735, %v731
    %v756 = vpack.c.b16 %v740, %v736
    %v757 = vpack.c.b16 %v741, %v737
    %v758 = vpack.c.b16 %v742, %v738
    %v759 = vpack.c.b16 %v743, %v739
    %v760 = vpack.c.b16 %v744, %v744
    %v761 = vpack.c.b16 %v745, %v745
    %v762 = vpack.c.b16 %v746, %v746
    %v763 = vpack.c.b16 %v747, %v747
    %v777 = vsel %vm318, %v751, 0
    %v780 = vsel %vm318, %v755, 0
    %v783 = vsel %vm318, %v759, 0
    %v786 = vsel %vm318, %v763, 0
    %788 = vmatprep.subr.bf16.mxu0 0
    %789 = vmatpush1.bf16.msra.mxu0 %v268
    %790 = vmatprep.subr.bf16.mxu0 0
    %791 = vmatpush1.bf16.msra.mxu0 %v269
    %792 = vmatprep.subr.bf16.mxu0 0
    %793 = vmatpush1.bf16.msra.mxu0 %v270
    %794 = vmatprep.subr.bf16.mxu0 0
    %795 = vmatpush1.bf16.msra.mxu0 %v271
    %796 = vmatprep.subr.bf16.mxu0 0
    %797 = vmatpush1.bf16.msra.mxu0 %v272
    %798 = vmatprep.subr.bf16.mxu0 0
    %799 = vmatpush1.bf16.msra.mxu0 %v273
    %800 = vmatprep.subr.bf16.mxu0 0
    %801 = vmatpush1.bf16.msra.mxu0 %v274
    %802 = vmatprep.subr.bf16.mxu0 0
    %803 = vmatpush1.bf16.msra.mxu0 %v275
    %804 = vmatprep.subr.bf16.mxu0 0
    %805 = vmatpush1.bf16.msra.mxu0 %v276
    %806 = vmatprep.subr.bf16.mxu0 0
    %807 = vmatpush1.bf16.msra.mxu0 %v277
    %808 = vmatprep.subr.bf16.mxu0 0
    %809 = vmatpush1.bf16.msra.mxu0 %v278
    %810 = vmatprep.subr.bf16.mxu0 0
    %811 = vmatpush1.bf16.msra.mxu0 %v279
    %812 = vmatprep.subr.bf16.mxu0 0
    %813 = vmatpush1.bf16.msra.mxu0 %v280
    %814 = vmatprep.subr.bf16.mxu0 0
    %815 = vmatpush1.bf16.msra.mxu0 %v281
    %816 = vmatprep.subr.bf16.mxu0 0
    %817 = vmatpush1.bf16.msra.mxu0 %v282
    %818 = vmatprep.subr.bf16.mxu0 0
    %819 = vmatpush1.bf16.msra.mxu0 %v283
    %820 = vmatprep.mubr.bf16.mxu0 %v749
    %821 = vmatmul.mubr.bf16.gmra.mrb[0].mxu0 %v748
    %v822 = vpop.f32.mrb[0].mxu0
    %v823 = vadd.f32 0.0, %v822
    %v824 = vpop.f32.mrb[0].mxu0
    %v825 = vpop.f32.mrb[0].mxu0
    %v826 = vadd.f32 0.0, %v825
    %v827 = vpop.f32.mrb[0].mxu0
    %828 = vmatprep.mubr.bf16.mxu0 %v753
    %829 = vmatmul.mubr.bf16.gmra.mrb[0].mxu0 %v752
    %v830 = vpop.f32.mrb[0].mxu0
    %v831 = vadd.f32 0.0, %v830
    %v832 = vpop.f32.mrb[0].mxu0
    %v833 = vpop.f32.mrb[0].mxu0
    %v834 = vadd.f32 0.0, %v833
    %v835 = vpop.f32.mrb[0].mxu0
    %836 = vmatprep.mubr.bf16.mxu0 %v757
    %837 = vmatmul.mubr.bf16.gmra.mrb[0].mxu0 %v756
    %v838 = vpop.f32.mrb[0].mxu0
    %v839 = vadd.f32 0.0, %v838
    %v840 = vpop.f32.mrb[0].mxu0
    %v841 = vpop.f32.mrb[0].mxu0
    %v842 = vadd.f32 0.0, %v841
    %v843 = vpop.f32.mrb[0].mxu0
    %844 = vmatprep.mubr.bf16.mxu0 %v761
    %845 = vmatmul.mubr.bf16.gmra.mrb[0].mxu0 %v760
    %v846 = vpop.f32.mrb[0].mxu0
    %v847 = vadd.f32 0.0, %v846
    %v848 = vpop.f32.mrb[0].mxu0
    %v849 = vpop.f32.mrb[0].mxu0
    %v850 = vpop.f32.mrb[0].mxu0
    %851 = vdwg.mxu0
    %852 = vmatprep.subr.bf16.mxu0 0
    %853 = vmatpush1.bf16.msra.mxu0 %v284
    %854 = vmatprep.subr.bf16.mxu0 0
    %855 = vmatpush1.bf16.msra.mxu0 %v285
    %856 = vmatprep.subr.bf16.mxu0 0
    %857 = vmatpush1.bf16.msra.mxu0 %v286
    %858 = vmatprep.subr.bf16.mxu0 0
    %859 = vmatpush1.bf16.msra.mxu0 %v287
    %860 = vmatprep.subr.bf16.mxu0 0
    %861 = vmatpush1.bf16.msra.mxu0 %v288
    %862 = vmatprep.subr.bf16.mxu0 0
    %863 = vmatpush1.bf16.msra.mxu0 %v289
    %864 = vmatprep.subr.bf16.mxu0 0
    %865 = vmatpush1.bf16.msra.mxu0 %v290
    %866 = vmatprep.subr.bf16.mxu0 0
    %867 = vmatpush1.bf16.msra.mxu0 %v291
    %868 = vmatprep.subr.bf16.mxu0 0
    %869 = vmatpush1.bf16.msra.mxu0 %v292
    %870 = vmatprep.subr.bf16.mxu0 0
    %871 = vmatpush1.bf16.msra.mxu0 0
    %872 = vmatprep.subr.bf16.mxu0 0
    %873 = vmatpush1.bf16.msra.mxu0 0
    %874 = vmatprep.subr.bf16.mxu0 0
    %875 = vmatpush1.bf16.msra.mxu0 0
    %876 = vmatprep.subr.bf16.mxu0 0
    %877 = vmatpush1.bf16.msra.mxu0 0
    %878 = vmatprep.subr.bf16.mxu0 0
    %879 = vmatpush1.bf16.msra.mxu0 0
    %880 = vmatprep.subr.bf16.mxu0 0
    %881 = vmatpush1.bf16.msra.mxu0 0
    %882 = vmatprep.subr.bf16.mxu0 0
    %883 = vmatpush1.bf16.msra.mxu0 0
    %884 = vmatprep.mubr.bf16.mxu0 %v777
    %885 = vmatmul.mubr.bf16.gmra.mrb[0].mxu0 %v750
    %v886 = vpop.f32.mrb[0].mxu0
    %v887 = vadd.f32 %v823, %v886
    %v888 = vpop.f32.mrb[0].mxu0
    %v889 = vpop.f32.mrb[0].mxu0
    %v890 = vadd.f32 %v826, %v889
    %v891 = vpop.f32.mrb[0].mxu0
    %892 = vmatprep.mubr.bf16.mxu0 %v780
    %893 = vmatmul.mubr.bf16.gmra.mrb[0].mxu0 %v754
    %v894 = vpop.f32.mrb[0].mxu0
    %v895 = vadd.f32 %v831, %v894
    %v896 = vpop.f32.mrb[0].mxu0
    %v897 = vpop.f32.mrb[0].mxu0
    %v898 = vadd.f32 %v834, %v897
    %v899 = vpop.f32.mrb[0].mxu0
    %900 = vmatprep.mubr.bf16.mxu0 %v783
    %901 = vmatmul.mubr.bf16.gmra.mrb[0].mxu0 %v758
    %v902 = vpop.f32.mrb[0].mxu0
    %v903 = vadd.f32 %v839, %v902
    %v904 = vpop.f32.mrb[0].mxu0
    %v905 = vpop.f32.mrb[0].mxu0
    %v906 = vadd.f32 %v842, %v905
    %v907 = vpop.f32.mrb[0].mxu0
    %908 = vmatprep.mubr.bf16.mxu0 %v786
    %909 = vmatmul.mubr.bf16.gmra.mrb[0].mxu0 %v762
    %v910 = vpop.f32.mrb[0].mxu0
    %v911 = vadd.f32 %v847, %v910
    %v912 = vpop.f32.mrb[0].mxu0
    %v913 = vpop.f32.mrb[0].mxu0
    %v914 = vpop.f32.mrb[0].mxu0
    %915 = vdwg.mxu0
    %v916 = vmax.f32 %v684, %v887
    %v917 = vmax.f32 %v685, %v890
    %v918 = vmax.f32 %v686, %v895
    %v919 = vmax.f32 %v687, %v898
    %v920 = vmax.f32 %v688, %v903
    %v921 = vmax.f32 %v689, %v906
    %v922 = vmax.f32 %v690, %v911
    %s923 = scalar_lea.vmem %s0, 336
    %v924 = vld [vmem:[%s923] sm:$0xff]
    %v925 = vld [vmem:[%s923 + $0x8] sm:$0xff]
    %v926 = vld [vmem:[%s923 + $0x10] sm:$0xff]
    %v927 = vld [vmem:[%s923 + $0x18] sm:$0xff]
    %v928 = vld [vmem:[%s923 + $0x20] sm:$0xff]
    %v929 = vld [vmem:[%s923 + $0x28] sm:$0xff]
    %v930 = vld [vmem:[%s923 + $0x30] sm:$0xff]
    %v931 = vld [vmem:[%s923 + $0x38] sm:$0xff]
    %v932 = vld [vmem:[%s923 + $0x40] sm:$0xff]
    %v933 = vld [vmem:[%s923 + $0x48] sm:$0xff]
    %v934 = vld [vmem:[%s923 + $0x50] sm:$0xff]
    %v935 = vld [vmem:[%s923 + $0x58] sm:$0xff]
    %v936 = vld [vmem:[%s923 + $0x60] sm:$0x11]
    %v937 = vld [vmem:[%s923 + $0x68] sm:$0x11]
    %v952 = vunpack.c.l.b16 %v924
    %v953 = vunpack.c.h.b16 %v924
    %v954 = vunpack.c.l.b16 %v925
    %v955 = vunpack.c.h.b16 %v925
    %v956 = vunpack.c.l.b16 %v926
    %v957 = vunpack.c.h.b16 %v926
    %v958 = vunpack.c.l.b16 %v927
    %v959 = vunpack.c.h.b16 %v927
    %v960 = vunpack.c.l.b16 %v928
    %v961 = vunpack.c.h.b16 %v928
    %v962 = vunpack.c.l.b16 %v929
    %v963 = vunpack.c.h.b16 %v929
    %v964 = vunpack.c.l.b16 %v930
    %v965 = vunpack.c.h.b16 %v930
    %v966 = vunpack.c.l.b16 %v931
    %v967 = vunpack.c.h.b16 %v931
    %v968 = vunpack.c.l.b16 %v932
    %v969 = vunpack.c.h.b16 %v932
    %v970 = vunpack.c.l.b16 %v933
    %v971 = vunpack.c.h.b16 %v933
    %v972 = vunpack.c.l.b16 %v934
    %v973 = vunpack.c.h.b16 %v934
    %v974 = vunpack.c.l.b16 %v935
    %v975 = vunpack.c.h.b16 %v935
    %v976 = vunpack.c.l.b16 %v936
    %v977 = vunpack.c.h.b16 %v936
    %v978 = vunpack.c.l.b16 %v937
    %v979 = vunpack.c.h.b16 %v937
    %v980 = vpack.c.b16 %v956, %v952
    %v981 = vpack.c.b16 %v957, %v953
    %v982 = vpack.c.b16 %v958, %v954
    %v983 = vpack.c.b16 %v959, %v955
    %v984 = vpack.c.b16 %v964, %v960
    %v985 = vpack.c.b16 %v965, %v961
    %v986 = vpack.c.b16 %v966, %v962
    %v987 = vpack.c.b16 %v967, %v963
    %v988 = vpack.c.b16 %v972, %v968
    %v989 = vpack.c.b16 %v973, %v969
    %v990 = vpack.c.b16 %v974, %v970
    %v991 = vpack.c.b16 %v975, %v971
    %v992 = vpack.c.b16 %v976, %v976
    %v993 = vpack.c.b16 %v977, %v977
    %v994 = vpack.c.b16 %v978, %v978
    %v995 = vpack.c.b16 %v979, %v979
    %v1009 = vsel %vm318, %v983, 0
    %v1012 = vsel %vm318, %v987, 0
    %v1015 = vsel %vm318, %v991, 0
    %v1018 = vsel %vm318, %v995, 0
    %1020 = vmatprep.subr.bf16.mxu0 0
    %1021 = vmatpush1.bf16.msra.mxu0 %v268
    %1022 = vmatprep.subr.bf16.mxu0 0
    %1023 = vmatpush1.bf16.msra.mxu0 %v269
    %1024 = vmatprep.subr.bf16.mxu0 0
    %1025 = vmatpush1.bf16.msra.mxu0 %v270
    %1026 = vmatprep.subr.bf16.mxu0 0
    %1027 = vmatpush1.bf16.msra.mxu0 %v271
    %1028 = vmatprep.subr.bf16.mxu0 0
    %1029 = vmatpush1.bf16.msra.mxu0 %v272
    %1030 = vmatprep.subr.bf16.mxu0 0
    %1031 = vmatpush1.bf16.msra.mxu0 %v273
    %1032 = vmatprep.subr.bf16.mxu0 0
    %1033 = vmatpush1.bf16.msra.mxu0 %v274
    %1034 = vmatprep.subr.bf16.mxu0 0
    %1035 = vmatpush1.bf16.msra.mxu0 %v275
    %1036 = vmatprep.subr.bf16.mxu0 0
    %1037 = vmatpush1.bf16.msra.mxu0 %v276
    %1038 = vmatprep.subr.bf16.mxu0 0
    %1039 = vmatpush1.bf16.msra.mxu0 %v277
    %1040 = vmatprep.subr.bf16.mxu0 0
    %1041 = vmatpush1.bf16.msra.mxu0 %v278
    %1042 = vmatprep.subr.bf16.mxu0 0
    %1043 = vmatpush1.bf16.msra.mxu0 %v279
    %1044 = vmatprep.subr.bf16.mxu0 0
    %1045 = vmatpush1.bf16.msra.mxu0 %v280
    %1046 = vmatprep.subr.bf16.mxu0 0
    %1047 = vmatpush1.bf16.msra.mxu0 %v281
    %1048 = vmatprep.subr.bf16.mxu0 0
    %1049 = vmatpush1.bf16.msra.mxu0 %v282
    %1050 = vmatprep.subr.bf16.mxu0 0
    %1051 = vmatpush1.bf16.msra.mxu0 %v283
    %1052 = vmatprep.mubr.bf16.mxu0 %v981
    %1053 = vmatmul.mubr.bf16.gmra.mrb[0].mxu0 %v980
    %v1054 = vpop.f32.mrb[0].mxu0
    %v1055 = vadd.f32 0.0, %v1054
    %v1056 = vpop.f32.mrb[0].mxu0
    %v1057 = vpop.f32.mrb[0].mxu0
    %v1058 = vadd.f32 0.0, %v1057
    %v1059 = vpop.f32.mrb[0].mxu0
    %1060 = vmatprep.mubr.bf16.mxu0 %v985
    %1061 = vmatmul.mubr.bf16.gmra.mrb[0].mxu0 %v984
    %v1062 = vpop.f32.mrb[0].mxu0
    %v1063 = vadd.f32 0.0, %v1062
    %v1064 = vpop.f32.mrb[0].mxu0
    %v1065 = vpop.f32.mrb[0].mxu0
    %v1066 = vadd.f32 0.0, %v1065
    %v1067 = vpop.f32.mrb[0].mxu0
    %1068 = vmatprep.mubr.bf16.mxu0 %v989
    %1069 = vmatmul.mubr.bf16.gmra.mrb[0].mxu0 %v988
    %v1070 = vpop.f32.mrb[0].mxu0
    %v1071 = vadd.f32 0.0, %v1070
    %v1072 = vpop.f32.mrb[0].mxu0
    %v1073 = vpop.f32.mrb[0].mxu0
    %v1074 = vadd.f32 0.0, %v1073
    %v1075 = vpop.f32.mrb[0].mxu0
    %1076 = vmatprep.mubr.bf16.mxu0 %v993
    %1077 = vmatmul.mubr.bf16.gmra.mrb[0].mxu0 %v992
    %v1078 = vpop.f32.mrb[0].mxu0
    %v1079 = vadd.f32 0.0, %v1078
    %v1080 = vpop.f32.mrb[0].mxu0
    %v1081 = vpop.f32.mrb[0].mxu0
    %v1082 = vpop.f32.mrb[0].mxu0
    %1083 = vdwg.mxu0
    %1084 = vmatprep.subr.bf16.mxu0 0
    %1085 = vmatpush1.bf16.msra.mxu0 %v284
    %1086 = vmatprep.subr.bf16.mxu0 0
    %1087 = vmatpush1.bf16.msra.mxu0 %v285
    %1088 = vmatprep.subr.bf16.mxu0 0
    %1089 = vmatpush1.bf16.msra.mxu0 %v286
    %1090 = vmatprep.subr.bf16.mxu0 0
    %1091 = vmatpush1.bf16.msra.mxu0 %v287
    %1092 = vmatprep.subr.bf16.mxu0 0
    %1093 = vmatpush1.bf16.msra.mxu0 %v288
    %1094 = vmatprep.subr.bf16.mxu0 0
    %1095 = vmatpush1.bf16.msra.mxu0 %v289
    %1096 = vmatprep.subr.bf16.mxu0 0
    %1097 = vmatpush1.bf16.msra.mxu0 %v290
    %1098 = vmatprep.subr.bf16.mxu0 0
    %1099 = vmatpush1.bf16.msra.mxu0 %v291
    %1100 = vmatprep.subr.bf16.mxu0 0
    %1101 = vmatpush1.bf16.msra.mxu0 %v292
    %1102 = vmatprep.subr.bf16.mxu0 0
    %1103 = vmatpush1.bf16.msra.mxu0 0
    %1104 = vmatprep.subr.bf16.mxu0 0
    %1105 = vmatpush1.bf16.msra.mxu0 0
    %1106 = vmatprep.subr.bf16.mxu0 0
    %1107 = vmatpush1.bf16.msra.mxu0 0
    %1108 = vmatprep.subr.bf16.mxu0 0
    %1109 = vmatpush1.bf16.msra.mxu0 0
    %1110 = vmatprep.subr.bf16.mxu0 0
    %1111 = vmatpush1.bf16.msra.mxu0 0
    %1112 = vmatprep.subr.bf16.mxu0 0
    %1113 = vmatpush1.bf16.msra.mxu0 0
    %1114 = vmatprep.subr.bf16.mxu0 0
    %1115 = vmatpush1.bf16.msra.mxu0 0
    %1116 = vmatprep.mubr.bf16.mxu0 %v1009
    %1117 = vmatmul.mubr.bf16.gmra.mrb[0].mxu0 %v982
    %v1118 = vpop.f32.mrb[0].mxu0
    %v1119 = vadd.f32 %v1055, %v1118
    %v1120 = vpop.f32.mrb[0].mxu0
    %v1121 = vpop.f32.mrb[0].mxu0
    %v1122 = vadd.f32 %v1058, %v1121
    %v1123 = vpop.f32.mrb[0].mxu0
    %1124 = vmatprep.mubr.bf16.mxu0 %v1012
    %1125 = vmatmul.mubr.bf16.gmra.mrb[0].mxu0 %v986
    %v1126 = vpop.f32.mrb[0].mxu0
    %v1127 = vadd.f32 %v1063, %v1126
    %v1128 = vpop.f32.mrb[0].mxu0
    %v1129 = vpop.f32.mrb[0].mxu0
    %v1130 = vadd.f32 %v1066, %v1129
    %v1131 = vpop.f32.mrb[0].mxu0
    %1132 = vmatprep.mubr.bf16.mxu0 %v1015
    %1133 = vmatmul.mubr.bf16.gmra.mrb[0].mxu0 %v990
    %v1134 = vpop.f32.mrb[0].mxu0
    %v1135 = vadd.f32 %v1071, %v1134
    %v1136 = vpop.f32.mrb[0].mxu0
    %v1137 = vpop.f32.mrb[0].mxu0
    %v1138 = vadd.f32 %v1074, %v1137
    %v1139 = vpop.f32.mrb[0].mxu0
    %1140 = vmatprep.mubr.bf16.mxu0 %v1018
    %1141 = vmatmul.mubr.bf16.gmra.mrb[0].mxu0 %v994
    %v1142 = vpop.f32.mrb[0].mxu0
    %v1143 = vadd.f32 %v1079, %v1142
    %v1144 = vpop.f32.mrb[0].mxu0
    %v1145 = vpop.f32.mrb[0].mxu0
    %v1146 = vpop.f32.mrb[0].mxu0
    %1147 = vdwg.mxu0
    %v1148 = vmax.f32 %v916, %v1119
    %v1149 = vmax.f32 %v917, %v1122
    %v1150 = vmax.f32 %v918, %v1127
    %v1151 = vmax.f32 %v919, %v1130
    %v1152 = vmax.f32 %v920, %v1135
    %v1153 = vmax.f32 %v921, %v1138
    %v1154 = vmax.f32 %v922, %v1143
    %v1155 = vld [vmem:[%s2] sm:$0x1]
    %v1157 = vlaneseq
    %v1158 = vshrl.u32 %v1157, 7
    %v1159 = vsub.s32 0, %v1158
    %v1160 = vrot.slane %v1155, %v1159
    %v1162 = vadd.f32 %v1148, %v1160
    %v1163 = vadd.f32 %v1149, %v1160
    %v1164 = vadd.f32 %v1150, %v1160
    %v1165 = vadd.f32 %v1151, %v1160
    %v1166 = vadd.f32 %v1152, %v1160
    %v1167 = vadd.f32 %v1153, %v1160
    %v1168 = vadd.f32 %v1154, %v1160
    %v1169 = vmax.f32 %v1162, 0.0
    %v1170 = vmax.f32 %v1163, 0.0
    %v1171 = vmax.f32 %v1164, 0.0
    %v1172 = vmax.f32 %v1165, 0.0
    %v1173 = vmax.f32 %v1166, 0.0
    %v1174 = vmax.f32 %v1167, 0.0
    %v1175 = vmax.f32 %v1168, 0.0
    %v1176 = vpack.c.bf16 %v1170, %v1169
    %v1177 = vpack.c.bf16 %v1172, %v1171
    %v1178 = vpack.c.bf16 %v1174, %v1173
    %v1179 = vpack.c.bf16 %v1175, %v1175
    %v1180 = vld [vmem:[%s3] sm:$0xf]
    %v1181 = vld [vmem:[%s3 + $0x4] sm:$0xf]
    %v1182 = vld [vmem:[%s3 + $0x8] sm:$0xf]
    %v1183 = vld [vmem:[%s3 + $0xc] sm:$0xf]
    %s1184 = scalar_lea.vmem %s3, 16
    %v1185 = vld [vmem:[%s1184] sm:$0xf]
    %v1186 = vld [vmem:[%s1184 + $0x4] sm:$0xf]
    %v1187 = vld [vmem:[%s1184 + $0x8] sm:$0xf]
    %v1188 = vld [vmem:[%s1184 + $0xc] sm:$0xf]
    %v1190 = vrot.slane %v1176, 1
    %v1195 = vunpack.c.l.b16 %v1185
    %v1196 = vunpack.c.l.b16 %v1186
    %v1197 = vunpack.c.l.b16 %v1187
    %v1198 = vunpack.c.l.b16 %v1188
    %v1199 = vpack.c.b16 %v1196, %v1195
    %v1200 = vpack.c.b16 %v1198, %v1197
    %vm1203 = vcmask 261120
    %v1205 = vsel %vm1203, %v1190, 0
    %1207 = vmatprep.subr.bf16.mxu0 0
    %1208 = vmatpush1.bf16.msra.mxu0 %v1199
    %1209 = vmatprep.subr.bf16.mxu0 0
    %1210 = vmatpush1.bf16.msra.mxu0 %v1200
    %1211 = vmatprep.subr.bf16.mxu0 0
    %1212 = vmatpush1.bf16.msra.mxu0 0
    %1213 = vmatprep.subr.bf16.mxu0 0
    %1214 = vmatpush1.bf16.msra.mxu0 0
    %1215 = vmatprep.subr.bf16.mxu0 0
    %1216 = vmatpush1.bf16.msra.mxu0 0
    %1217 = vmatprep.subr.bf16.mxu0 0
    %1218 = vmatpush1.bf16.msra.mxu0 0
    %1219 = vmatprep.subr.bf16.mxu0 0
    %1220 = vmatpush1.bf16.msra.mxu0 0
    %1221 = vmatprep.subr.bf16.mxu0 0
    %1222 = vmatpush1.bf16.msra.mxu0 0
    %1223 = vmatprep.subr.bf16.mxu0 0
    %1224 = vmatpush1.bf16.msra.mxu0 0
    %1225 = vmatprep.subr.bf16.mxu0 0
    %1226 = vmatpush1.bf16.msra.mxu0 0
    %1227 = vmatprep.subr.bf16.mxu0 0
    %1228 = vmatpush1.bf16.msra.mxu0 0
    %1229 = vmatprep.subr.bf16.mxu0 0
    %1230 = vmatpush1.bf16.msra.mxu0 0
    %1231 = vmatprep.subr.bf16.mxu0 0
    %1232 = vmatpush1.bf16.msra.mxu0 0
    %1233 = vmatprep.subr.bf16.mxu0 0
    %1234 = vmatpush1.bf16.msra.mxu0 0
    %1235 = vmatprep.subr.bf16.mxu0 0
    %1236 = vmatpush1.bf16.msra.mxu0 0
    %1237 = vmatprep.subr.bf16.mxu0 0
    %1238 = vmatpush1.bf16.msra.mxu0 0
    %1239 = vmatprep.mubr.bf16.mxu0 0
    %1240 = vmatmul.mubr.bf16.gmra.mrb[0].mxu0 %v1205
    %v1241 = vpop.f32.mrb[0].mxu0
    %v1242 = vadd.f32 0.0, %v1241
    %v1243 = vpop.f32.mrb[0].mxu0
    %v1244 = vpop.f32.mrb[0].mxu0
    %v1245 = vpop.f32.mrb[0].mxu0
    %1246 = vdwg.mxu0
    %v1251 = vunpack.c.l.b16 %v1180
    %v1252 = vunpack.c.l.b16 %v1181
    %v1253 = vunpack.c.l.b16 %v1182
    %v1254 = vunpack.c.l.b16 %v1183
    %v1255 = vpack.c.b16 %v1252, %v1251
    %v1256 = vpack.c.b16 %v1254, %v1253
    %v1260 = vsel %vm1203, %v1176, 0
    %1262 = vmatprep.subr.bf16.mxu0 0
    %1263 = vmatpush1.bf16.msra.mxu0 %v1255
    %1264 = vmatprep.subr.bf16.mxu0 0
    %1265 = vmatpush1.bf16.msra.mxu0 %v1256
    %1266 = vmatprep.subr.bf16.mxu0 0
    %1267 = vmatpush1.bf16.msra.mxu0 0
    %1268 = vmatprep.subr.bf16.mxu0 0
    %1269 = vmatpush1.bf16.msra.mxu0 0
    %1270 = vmatprep.subr.bf16.mxu0 0
    %1271 = vmatpush1.bf16.msra.mxu0 0
    %1272 = vmatprep.subr.bf16.mxu0 0
    %1273 = vmatpush1.bf16.msra.mxu0 0
    %1274 = vmatprep.subr.bf16.mxu0 0
    %1275 = vmatpush1.bf16.msra.mxu0 0
    %1276 = vmatprep.subr.bf16.mxu0 0
    %1277 = vmatpush1.bf16.msra.mxu0 0
    %1278 = vmatprep.subr.bf16.mxu0 0
    %1279 = vmatpush1.bf16.msra.mxu0 0
    %1280 = vmatprep.subr.bf16.mxu0 0
    %1281 = vmatpush1.bf16.msra.mxu0 0
    %1282 = vmatprep.subr.bf16.mxu0 0
    %1283 = vmatpush1.bf16.msra.mxu0 0
    %1284 = vmatprep.subr.bf16.mxu0 0
    %1285 = vmatpush1.bf16.msra.mxu0 0
    %1286 = vmatprep.subr.bf16.mxu0 0
    %1287 = vmatpush1.bf16.msra.mxu0 0
    %1288 = vmatprep.subr.bf16.mxu0 0
    %1289 = vmatpush1.bf16.msra.mxu0 0
    %1290 = vmatprep.subr.bf16.mxu0 0
    %1291 = vmatpush1.bf16.msra.mxu0 0
    %1292 = vmatprep.subr.bf16.mxu0 0
    %1293 = vmatpush1.bf16.msra.mxu0 0
    %1294 = vmatprep.mubr.bf16.mxu0 0
    %1295 = vmatmul.mubr.bf16.gmra.mrb[0].mxu0 %v1260
    %v1296 = vpop.f32.mrb[0].mxu0
    %v1297 = vadd.f32 %v1242, %v1296
    %v1298 = vpop.f32.mrb[0].mxu0
    %v1299 = vpop.f32.mrb[0].mxu0
    %v1300 = vpop.f32.mrb[0].mxu0
    %1301 = vdwg.mxu0
    %s1302 = scalar_lea.vmem %s3, 32
    %v1303 = vld [vmem:[%s1302] sm:$0xf]
    %v1304 = vld [vmem:[%s1302 + $0x4] sm:$0xf]
    %v1305 = vld [vmem:[%s1302 + $0x8] sm:$0xf]
    %v1306 = vld [vmem:[%s1302 + $0xc] sm:$0xf]
    %v1307 = vrot.slane %v1176, 2
    %v1312 = vunpack.c.l.b16 %v1303
    %v1313 = vunpack.c.l.b16 %v1304
    %v1314 = vunpack.c.l.b16 %v1305
    %v1315 = vunpack.c.l.b16 %v1306
    %v1316 = vpack.c.b16 %v1313, %v1312
    %v1317 = vpack.c.b16 %v1315, %v1314
    %v1321 = vsel %vm1203, %v1307, 0
    %1323 = vmatprep.subr.bf16.mxu0 0
    %1324 = vmatpush1.bf16.msra.mxu0 %v1316
    %1325 = vmatprep.subr.bf16.mxu0 0
    %1326 = vmatpush1.bf16.msra.mxu0 %v1317
    %1327 = vmatprep.subr.bf16.mxu0 0
    %1328 = vmatpush1.bf16.msra.mxu0 0
    %1329 = vmatprep.subr.bf16.mxu0 0
    %1330 = vmatpush1.bf16.msra.mxu0 0
    %1331 = vmatprep.subr.bf16.mxu0 0
    %1332 = vmatpush1.bf16.msra.mxu0 0
    %1333 = vmatprep.subr.bf16.mxu0 0
    %1334 = vmatpush1.bf16.msra.mxu0 0
    %1335 = vmatprep.subr.bf16.mxu0 0
    %1336 = vmatpush1.bf16.msra.mxu0 0
    %1337 = vmatprep.subr.bf16.mxu0 0
    %1338 = vmatpush1.bf16.msra.mxu0 0
    %1339 = vmatprep.subr.bf16.mxu0 0
    %1340 = vmatpush1.bf16.msra.mxu0 0
    %1341 = vmatprep.subr.bf16.mxu0 0
    %1342 = vmatpush1.bf16.msra.mxu0 0
    %1343 = vmatprep.subr.bf16.mxu0 0
    %1344 = vmatpush1.bf16.msra.mxu0 0
    %1345 = vmatprep.subr.bf16.mxu0 0
    %1346 = vmatpush1.bf16.msra.mxu0 0
    %1347 = vmatprep.subr.bf16.mxu0 0
    %1348 = vmatpush1.bf16.msra.mxu0 0
    %1349 = vmatprep.subr.bf16.mxu0 0
    %1350 = vmatpush1.bf16.msra.mxu0 0
    %1351 = vmatprep.subr.bf16.mxu0 0
    %1352 = vmatpush1.bf16.msra.mxu0 0
    %1353 = vmatprep.subr.bf16.mxu0 0
    %1354 = vmatpush1.bf16.msra.mxu0 0
    %1355 = vmatprep.mubr.bf16.mxu0 0
    %1356 = vmatmul.mubr.bf16.gmra.mrb[0].mxu0 %v1321
    %v1357 = vpop.f32.mrb[0].mxu0
    %v1358 = vadd.f32 0.0, %v1357
    %v1359 = vpop.f32.mrb[0].mxu0
    %v1360 = vpop.f32.mrb[0].mxu0
    %v1361 = vpop.f32.mrb[0].mxu0
    %1362 = vdwg.mxu0
    %v1363 = vadd.f32 %v1297, %v1358
    %s1364 = scalar_lea.vmem %s3, 48
    %v1365 = vld [vmem:[%s1364] sm:$0xf]
    %v1366 = vld [vmem:[%s1364 + $0x4] sm:$0xf]
    %v1367 = vld [vmem:[%s1364 + $0x8] sm:$0xf]
    %v1368 = vld [vmem:[%s1364 + $0xc] sm:$0xf]
    %v1369 = vrot.slane %v1176, 3
    %v1374 = vunpack.c.l.b16 %v1365
    %v1375 = vunpack.c.l.b16 %v1366
    %v1376 = vunpack.c.l.b16 %v1367
    %v1377 = vunpack.c.l.b16 %v1368
    %v1378 = vpack.c.b16 %v1375, %v1374
    %v1379 = vpack.c.b16 %v1377, %v1376
    %v1383 = vsel %vm1203, %v1369, 0
    %1385 = vmatprep.subr.bf16.mxu0 0
    %1386 = vmatpush1.bf16.msra.mxu0 %v1378
    %1387 = vmatprep.subr.bf16.mxu0 0
    %1388 = vmatpush1.bf16.msra.mxu0 %v1379
    %1389 = vmatprep.subr.bf16.mxu0 0
    %1390 = vmatpush1.bf16.msra.mxu0 0
    %1391 = vmatprep.subr.bf16.mxu0 0
    %1392 = vmatpush1.bf16.msra.mxu0 0
    %1393 = vmatprep.subr.bf16.mxu0 0
    %1394 = vmatpush1.bf16.msra.mxu0 0
    %1395 = vmatprep.subr.bf16.mxu0 0
    %1396 = vmatpush1.bf16.msra.mxu0 0
    %1397 = vmatprep.subr.bf16.mxu0 0
    %1398 = vmatpush1.bf16.msra.mxu0 0
    %1399 = vmatprep.subr.bf16.mxu0 0
    %1400 = vmatpush1.bf16.msra.mxu0 0
    %1401 = vmatprep.subr.bf16.mxu0 0
    %1402 = vmatpush1.bf16.msra.mxu0 0
    %1403 = vmatprep.subr.bf16.mxu0 0
    %1404 = vmatpush1.bf16.msra.mxu0 0
    %1405 = vmatprep.subr.bf16.mxu0 0
    %1406 = vmatpush1.bf16.msra.mxu0 0
    %1407 = vmatprep.subr.bf16.mxu0 0
    %1408 = vmatpush1.bf16.msra.mxu0 0
    %1409 = vmatprep.subr.bf16.mxu0 0
    %1410 = vmatpush1.bf16.msra.mxu0 0
    %1411 = vmatprep.subr.bf16.mxu0 0
    %1412 = vmatpush1.bf16.msra.mxu0 0
    %1413 = vmatprep.subr.bf16.mxu0 0
    %1414 = vmatpush1.bf16.msra.mxu0 0
    %1415 = vmatprep.subr.bf16.mxu0 0
    %1416 = vmatpush1.bf16.msra.mxu0 0
    %1417 = vmatprep.mubr.bf16.mxu0 0
    %1418 = vmatmul.mubr.bf16.gmra.mrb[0].mxu0 %v1383
    %v1419 = vpop.f32.mrb[0].mxu0
    %v1420 = vadd.f32 0.0, %v1419
    %v1421 = vpop.f32.mrb[0].mxu0
    %v1422 = vpop.f32.mrb[0].mxu0
    %v1423 = vpop.f32.mrb[0].mxu0
    %1424 = vdwg.mxu0
    %v1425 = vadd.f32 %v1363, %v1420
    %s1426 = scalar_lea.vmem %s3, 64
    %v1427 = vld [vmem:[%s1426] sm:$0xf]
    %v1428 = vld [vmem:[%s1426 + $0x4] sm:$0xf]
    %v1429 = vld [vmem:[%s1426 + $0x8] sm:$0xf]
    %v1430 = vld [vmem:[%s1426 + $0xc] sm:$0xf]
    %v1431 = vrot.slane %v1176, 4
    %v1436 = vunpack.c.l.b16 %v1427
    %v1437 = vunpack.c.l.b16 %v1428
    %v1438 = vunpack.c.l.b16 %v1429
    %v1439 = vunpack.c.l.b16 %v1430
    %v1440 = vpack.c.b16 %v1437, %v1436
    %v1441 = vpack.c.b16 %v1439, %v1438
    %v1445 = vsel %vm1203, %v1431, 0
    %1447 = vmatprep.subr.bf16.mxu0 0
    %1448 = vmatpush1.bf16.msra.mxu0 %v1440
    %1449 = vmatprep.subr.bf16.mxu0 0
    %1450 = vmatpush1.bf16.msra.mxu0 %v1441
    %1451 = vmatprep.subr.bf16.mxu0 0
    %1452 = vmatpush1.bf16.msra.mxu0 0
    %1453 = vmatprep.subr.bf16.mxu0 0
    %1454 = vmatpush1.bf16.msra.mxu0 0
    %1455 = vmatprep.subr.bf16.mxu0 0
    %1456 = vmatpush1.bf16.msra.mxu0 0
    %1457 = vmatprep.subr.bf16.mxu0 0
    %1458 = vmatpush1.bf16.msra.mxu0 0
    %1459 = vmatprep.subr.bf16.mxu0 0
    %1460 = vmatpush1.bf16.msra.mxu0 0
    %1461 = vmatprep.subr.bf16.mxu0 0
    %1462 = vmatpush1.bf16.msra.mxu0 0
    %1463 = vmatprep.subr.bf16.mxu0 0
    %1464 = vmatpush1.bf16.msra.mxu0 0
    %1465 = vmatprep.subr.bf16.mxu0 0
    %1466 = vmatpush1.bf16.msra.mxu0 0
    %1467 = vmatprep.subr.bf16.mxu0 0
    %1468 = vmatpush1.bf16.msra.mxu0 0
    %1469 = vmatprep.subr.bf16.mxu0 0
    %1470 = vmatpush1.bf16.msra.mxu0 0
    %1471 = vmatprep.subr.bf16.mxu0 0
    %1472 = vmatpush1.bf16.msra.mxu0 0
    %1473 = vmatprep.subr.bf16.mxu0 0
    %1474 = vmatpush1.bf16.msra.mxu0 0
    %1475 = vmatprep.subr.bf16.mxu0 0
    %1476 = vmatpush1.bf16.msra.mxu0 0
    %1477 = vmatprep.subr.bf16.mxu0 0
    %1478 = vmatpush1.bf16.msra.mxu0 0
    %1479 = vmatprep.mubr.bf16.mxu0 0
    %1480 = vmatmul.mubr.bf16.gmra.mrb[0].mxu0 %v1445
    %v1481 = vpop.f32.mrb[0].mxu0
    %v1482 = vadd.f32 0.0, %v1481
    %v1483 = vpop.f32.mrb[0].mxu0
    %v1484 = vpop.f32.mrb[0].mxu0
    %v1485 = vpop.f32.mrb[0].mxu0
    %1486 = vdwg.mxu0
    %v1487 = vadd.f32 %v1425, %v1482
    %s1488 = scalar_lea.vmem %s3, 80
    %v1489 = vld [vmem:[%s1488] sm:$0xf]
    %v1490 = vld [vmem:[%s1488 + $0x4] sm:$0xf]
    %v1491 = vld [vmem:[%s1488 + $0x8] sm:$0xf]
    %v1492 = vld [vmem:[%s1488 + $0xc] sm:$0xf]
    %v1493 = vrot.slane %v1176, 5
    %v1498 = vunpack.c.l.b16 %v1489
    %v1499 = vunpack.c.l.b16 %v1490
    %v1500 = vunpack.c.l.b16 %v1491
    %v1501 = vunpack.c.l.b16 %v1492
    %v1502 = vpack.c.b16 %v1499, %v1498
    %v1503 = vpack.c.b16 %v1501, %v1500
    %v1507 = vsel %vm1203, %v1493, 0
    %1509 = vmatprep.subr.bf16.mxu0 0
    %1510 = vmatpush1.bf16.msra.mxu0 %v1502
    %1511 = vmatprep.subr.bf16.mxu0 0
    %1512 = vmatpush1.bf16.msra.mxu0 %v1503
    %1513 = vmatprep.subr.bf16.mxu0 0
    %1514 = vmatpush1.bf16.msra.mxu0 0
    %1515 = vmatprep.subr.bf16.mxu0 0
    %1516 = vmatpush1.bf16.msra.mxu0 0
    %1517 = vmatprep.subr.bf16.mxu0 0
    %1518 = vmatpush1.bf16.msra.mxu0 0
    %1519 = vmatprep.subr.bf16.mxu0 0
    %1520 = vmatpush1.bf16.msra.mxu0 0
    %1521 = vmatprep.subr.bf16.mxu0 0
    %1522 = vmatpush1.bf16.msra.mxu0 0
    %1523 = vmatprep.subr.bf16.mxu0 0
    %1524 = vmatpush1.bf16.msra.mxu0 0
    %1525 = vmatprep.subr.bf16.mxu0 0
    %1526 = vmatpush1.bf16.msra.mxu0 0
    %1527 = vmatprep.subr.bf16.mxu0 0
    %1528 = vmatpush1.bf16.msra.mxu0 0
    %1529 = vmatprep.subr.bf16.mxu0 0
    %1530 = vmatpush1.bf16.msra.mxu0 0
    %1531 = vmatprep.subr.bf16.mxu0 0
    %1532 = vmatpush1.bf16.msra.mxu0 0
    %1533 = vmatprep.subr.bf16.mxu0 0
    %1534 = vmatpush1.bf16.msra.mxu0 0
    %1535 = vmatprep.subr.bf16.mxu0 0
    %1536 = vmatpush1.bf16.msra.mxu0 0
    %1537 = vmatprep.subr.bf16.mxu0 0
    %1538 = vmatpush1.bf16.msra.mxu0 0
    %1539 = vmatprep.subr.bf16.mxu0 0
    %1540 = vmatpush1.bf16.msra.mxu0 0
    %1541 = vmatprep.mubr.bf16.mxu0 0
    %1542 = vmatmul.mubr.bf16.gmra.mrb[0].mxu0 %v1507
    %v1543 = vpop.f32.mrb[0].mxu0
    %v1544 = vadd.f32 0.0, %v1543
    %v1545 = vpop.f32.mrb[0].mxu0
    %v1546 = vpop.f32.mrb[0].mxu0
    %v1547 = vpop.f32.mrb[0].mxu0
    %1548 = vdwg.mxu0
    %v1549 = vadd.f32 %v1487, %v1544
    %s1550 = scalar_lea.vmem %s3, 96
    %v1551 = vld [vmem:[%s1550] sm:$0xf]
    %v1552 = vld [vmem:[%s1550 + $0x4] sm:$0xf]
    %v1553 = vld [vmem:[%s1550 + $0x8] sm:$0xf]
    %v1554 = vld [vmem:[%s1550 + $0xc] sm:$0xf]
    %v1555 = vrot.slane %v1176, 6
    %v1560 = vunpack.c.l.b16 %v1551
    %v1561 = vunpack.c.l.b16 %v1552
    %v1562 = vunpack.c.l.b16 %v1553
    %v1563 = vunpack.c.l.b16 %v1554
    %v1564 = vpack.c.b16 %v1561, %v1560
    %v1565 = vpack.c.b16 %v1563, %v1562
    %v1569 = vsel %vm1203, %v1555, 0
    %1571 = vmatprep.subr.bf16.mxu0 0
    %1572 = vmatpush1.bf16.msra.mxu0 %v1564
    %1573 = vmatprep.subr.bf16.mxu0 0
    %1574 = vmatpush1.bf16.msra.mxu0 %v1565
    %1575 = vmatprep.subr.bf16.mxu0 0
    %1576 = vmatpush1.bf16.msra.mxu0 0
    %1577 = vmatprep.subr.bf16.mxu0 0
    %1578 = vmatpush1.bf16.msra.mxu0 0
    %1579 = vmatprep.subr.bf16.mxu0 0
    %1580 = vmatpush1.bf16.msra.mxu0 0
    %1581 = vmatprep.subr.bf16.mxu0 0
    %1582 = vmatpush1.bf16.msra.mxu0 0
    %1583 = vmatprep.subr.bf16.mxu0 0
    %1584 = vmatpush1.bf16.msra.mxu0 0
    %1585 = vmatprep.subr.bf16.mxu0 0
    %1586 = vmatpush1.bf16.msra.mxu0 0
    %1587 = vmatprep.subr.bf16.mxu0 0
    %1588 = vmatpush1.bf16.msra.mxu0 0
    %1589 = vmatprep.subr.bf16.mxu0 0
    %1590 = vmatpush1.bf16.msra.mxu0 0
    %1591 = vmatprep.subr.bf16.mxu0 0
    %1592 = vmatpush1.bf16.msra.mxu0 0
    %1593 = vmatprep.subr.bf16.mxu0 0
    %1594 = vmatpush1.bf16.msra.mxu0 0
    %1595 = vmatprep.subr.bf16.mxu0 0
    %1596 = vmatpush1.bf16.msra.mxu0 0
    %1597 = vmatprep.subr.bf16.mxu0 0
    %1598 = vmatpush1.bf16.msra.mxu0 0
    %1599 = vmatprep.subr.bf16.mxu0 0
    %1600 = vmatpush1.bf16.msra.mxu0 0
    %1601 = vmatprep.subr.bf16.mxu0 0
    %1602 = vmatpush1.bf16.msra.mxu0 0
    %1603 = vmatprep.mubr.bf16.mxu0 0
    %1604 = vmatmul.mubr.bf16.gmra.mrb[0].mxu0 %v1569
    %v1605 = vpop.f32.mrb[0].mxu0
    %v1606 = vadd.f32 0.0, %v1605
    %v1607 = vpop.f32.mrb[0].mxu0
    %v1608 = vpop.f32.mrb[0].mxu0
    %v1609 = vpop.f32.mrb[0].mxu0
    %1610 = vdwg.mxu0
    %v1611 = vadd.f32 %v1549, %v1606
    %s1612 = scalar_lea.vmem %s3, 112
    %v1613 = vld [vmem:[%s1612] sm:$0xf]
    %v1614 = vld [vmem:[%s1612 + $0x4] sm:$0xf]
    %v1615 = vld [vmem:[%s1612 + $0x8] sm:$0xf]
    %v1616 = vld [vmem:[%s1612 + $0xc] sm:$0xf]
    %v1617 = vrot.slane %v1176, 7
    %v1622 = vunpack.c.l.b16 %v1613
    %v1623 = vunpack.c.l.b16 %v1614
    %v1624 = vunpack.c.l.b16 %v1615
    %v1625 = vunpack.c.l.b16 %v1616
    %v1626 = vpack.c.b16 %v1623, %v1622
    %v1627 = vpack.c.b16 %v1625, %v1624
    %v1631 = vsel %vm1203, %v1617, 0
    %1633 = vmatprep.subr.bf16.mxu0 0
    %1634 = vmatpush1.bf16.msra.mxu0 %v1626
    %1635 = vmatprep.subr.bf16.mxu0 0
    %1636 = vmatpush1.bf16.msra.mxu0 %v1627
    %1637 = vmatprep.subr.bf16.mxu0 0
    %1638 = vmatpush1.bf16.msra.mxu0 0
    %1639 = vmatprep.subr.bf16.mxu0 0
    %1640 = vmatpush1.bf16.msra.mxu0 0
    %1641 = vmatprep.subr.bf16.mxu0 0
    %1642 = vmatpush1.bf16.msra.mxu0 0
    %1643 = vmatprep.subr.bf16.mxu0 0
    %1644 = vmatpush1.bf16.msra.mxu0 0
    %1645 = vmatprep.subr.bf16.mxu0 0
    %1646 = vmatpush1.bf16.msra.mxu0 0
    %1647 = vmatprep.subr.bf16.mxu0 0
    %1648 = vmatpush1.bf16.msra.mxu0 0
    %1649 = vmatprep.subr.bf16.mxu0 0
    %1650 = vmatpush1.bf16.msra.mxu0 0
    %1651 = vmatprep.subr.bf16.mxu0 0
    %1652 = vmatpush1.bf16.msra.mxu0 0
    %1653 = vmatprep.subr.bf16.mxu0 0
    %1654 = vmatpush1.bf16.msra.mxu0 0
    %1655 = vmatprep.subr.bf16.mxu0 0
    %1656 = vmatpush1.bf16.msra.mxu0 0
    %1657 = vmatprep.subr.bf16.mxu0 0
    %1658 = vmatpush1.bf16.msra.mxu0 0
    %1659 = vmatprep.subr.bf16.mxu0 0
    %1660 = vmatpush1.bf16.msra.mxu0 0
    %1661 = vmatprep.subr.bf16.mxu0 0
    %1662 = vmatpush1.bf16.msra.mxu0 0
    %1663 = vmatprep.subr.bf16.mxu0 0
    %1664 = vmatpush1.bf16.msra.mxu0 0
    %1665 = vmatprep.mubr.bf16.mxu0 0
    %1666 = vmatmul.mubr.bf16.gmra.mrb[0].mxu0 %v1631
    %v1667 = vpop.f32.mrb[0].mxu0
    %v1668 = vadd.f32 0.0, %v1667
    %v1669 = vpop.f32.mrb[0].mxu0
    %v1670 = vpop.f32.mrb[0].mxu0
    %v1671 = vpop.f32.mrb[0].mxu0
    %1672 = vdwg.mxu0
    %v1673 = vadd.f32 %v1611, %v1668
    %s1674 = scalar_lea.vmem %s3, 128
    %v1675 = vld [vmem:[%s1674] sm:$0xf]
    %v1676 = vld [vmem:[%s1674 + $0x4] sm:$0xf]
    %v1677 = vld [vmem:[%s1674 + $0x8] sm:$0xf]
    %v1678 = vld [vmem:[%s1674 + $0xc] sm:$0xf]
    %v1683 = vunpack.c.l.b16 %v1675
    %v1684 = vunpack.c.l.b16 %v1676
    %v1685 = vunpack.c.l.b16 %v1677
    %v1686 = vunpack.c.l.b16 %v1678
    %v1687 = vpack.c.b16 %v1684, %v1683
    %v1688 = vpack.c.b16 %v1686, %v1685
    %v1692 = vsel %vm1203, %v1177, 0
    %1694 = vmatprep.subr.bf16.mxu0 0
    %1695 = vmatpush1.bf16.msra.mxu0 %v1687
    %1696 = vmatprep.subr.bf16.mxu0 0
    %1697 = vmatpush1.bf16.msra.mxu0 %v1688
    %1698 = vmatprep.subr.bf16.mxu0 0
    %1699 = vmatpush1.bf16.msra.mxu0 0
    %1700 = vmatprep.subr.bf16.mxu0 0
    %1701 = vmatpush1.bf16.msra.mxu0 0
    %1702 = vmatprep.subr.bf16.mxu0 0
    %1703 = vmatpush1.bf16.msra.mxu0 0
    %1704 = vmatprep.subr.bf16.mxu0 0
    %1705 = vmatpush1.bf16.msra.mxu0 0
    %1706 = vmatprep.subr.bf16.mxu0 0
    %1707 = vmatpush1.bf16.msra.mxu0 0
    %1708 = vmatprep.subr.bf16.mxu0 0
    %1709 = vmatpush1.bf16.msra.mxu0 0
    %1710 = vmatprep.subr.bf16.mxu0 0
    %1711 = vmatpush1.bf16.msra.mxu0 0
    %1712 = vmatprep.subr.bf16.mxu0 0
    %1713 = vmatpush1.bf16.msra.mxu0 0
    %1714 = vmatprep.subr.bf16.mxu0 0
    %1715 = vmatpush1.bf16.msra.mxu0 0
    %1716 = vmatprep.subr.bf16.mxu0 0
    %1717 = vmatpush1.bf16.msra.mxu0 0
    %1718 = vmatprep.subr.bf16.mxu0 0
    %1719 = vmatpush1.bf16.msra.mxu0 0
    %1720 = vmatprep.subr.bf16.mxu0 0
    %1721 = vmatpush1.bf16.msra.mxu0 0
    %1722 = vmatprep.subr.bf16.mxu0 0
    %1723 = vmatpush1.bf16.msra.mxu0 0
    %1724 = vmatprep.subr.bf16.mxu0 0
    %1725 = vmatpush1.bf16.msra.mxu0 0
    %1726 = vmatprep.mubr.bf16.mxu0 0
    %1727 = vmatmul.mubr.bf16.gmra.mrb[0].mxu0 %v1692
    %v1728 = vpop.f32.mrb[0].mxu0
    %v1729 = vadd.f32 0.0, %v1728
    %v1730 = vpop.f32.mrb[0].mxu0
    %v1731 = vpop.f32.mrb[0].mxu0
    %v1732 = vpop.f32.mrb[0].mxu0
    %1733 = vdwg.mxu0
    %v1734 = vadd.f32 %v1673, %v1729
    %s1735 = scalar_lea.vmem %s3, 144
    %v1736 = vld [vmem:[%s1735] sm:$0xf]
    %v1737 = vld [vmem:[%s1735 + $0x4] sm:$0xf]
    %v1738 = vld [vmem:[%s1735 + $0x8] sm:$0xf]
    %v1739 = vld [vmem:[%s1735 + $0xc] sm:$0xf]
    %v1741 = vrot.slane %v1177, 1
    %v1746 = vunpack.c.l.b16 %v1736
    %v1747 = vunpack.c.l.b16 %v1737
    %v1748 = vunpack.c.l.b16 %v1738
    %v1749 = vunpack.c.l.b16 %v1739
    %v1750 = vpack.c.b16 %v1747, %v1746
    %v1751 = vpack.c.b16 %v1749, %v1748
    %v1755 = vsel %vm1203, %v1741, 0
    %1757 = vmatprep.subr.bf16.mxu0 0
    %1758 = vmatpush1.bf16.msra.mxu0 %v1750
    %1759 = vmatprep.subr.bf16.mxu0 0
    %1760 = vmatpush1.bf16.msra.mxu0 %v1751
    %1761 = vmatprep.subr.bf16.mxu0 0
    %1762 = vmatpush1.bf16.msra.mxu0 0
    %1763 = vmatprep.subr.bf16.mxu0 0
    %1764 = vmatpush1.bf16.msra.mxu0 0
    %1765 = vmatprep.subr.bf16.mxu0 0
    %1766 = vmatpush1.bf16.msra.mxu0 0
    %1767 = vmatprep.subr.bf16.mxu0 0
    %1768 = vmatpush1.bf16.msra.mxu0 0
    %1769 = vmatprep.subr.bf16.mxu0 0
    %1770 = vmatpush1.bf16.msra.mxu0 0
    %1771 = vmatprep.subr.bf16.mxu0 0
    %1772 = vmatpush1.bf16.msra.mxu0 0
    %1773 = vmatprep.subr.bf16.mxu0 0
    %1774 = vmatpush1.bf16.msra.mxu0 0
    %1775 = vmatprep.subr.bf16.mxu0 0
    %1776 = vmatpush1.bf16.msra.mxu0 0
    %1777 = vmatprep.subr.bf16.mxu0 0
    %1778 = vmatpush1.bf16.msra.mxu0 0
    %1779 = vmatprep.subr.bf16.mxu0 0
    %1780 = vmatpush1.bf16.msra.mxu0 0
    %1781 = vmatprep.subr.bf16.mxu0 0
    %1782 = vmatpush1.bf16.msra.mxu0 0
    %1783 = vmatprep.subr.bf16.mxu0 0
    %1784 = vmatpush1.bf16.msra.mxu0 0
    %1785 = vmatprep.subr.bf16.mxu0 0
    %1786 = vmatpush1.bf16.msra.mxu0 0
    %1787 = vmatprep.subr.bf16.mxu0 0
    %1788 = vmatpush1.bf16.msra.mxu0 0
    %1789 = vmatprep.mubr.bf16.mxu0 0
    %1790 = vmatmul.mubr.bf16.gmra.mrb[0].mxu0 %v1755
    %v1791 = vpop.f32.mrb[0].mxu0
    %v1792 = vadd.f32 0.0, %v1791
    %v1793 = vpop.f32.mrb[0].mxu0
    %v1794 = vpop.f32.mrb[0].mxu0
    %v1795 = vpop.f32.mrb[0].mxu0
    %1796 = vdwg.mxu0
    %v1797 = vadd.f32 %v1734, %v1792
    %s1798 = scalar_lea.vmem %s3, 160
    %v1799 = vld [vmem:[%s1798] sm:$0xf]
    %v1800 = vld [vmem:[%s1798 + $0x4] sm:$0xf]
    %v1801 = vld [vmem:[%s1798 + $0x8] sm:$0xf]
    %v1802 = vld [vmem:[%s1798 + $0xc] sm:$0xf]
    %v1803 = vrot.slane %v1177, 2
    %v1808 = vunpack.c.l.b16 %v1799
    %v1809 = vunpack.c.l.b16 %v1800
    %v1810 = vunpack.c.l.b16 %v1801
    %v1811 = vunpack.c.l.b16 %v1802
    %v1812 = vpack.c.b16 %v1809, %v1808
    %v1813 = vpack.c.b16 %v1811, %v1810
    %v1817 = vsel %vm1203, %v1803, 0
    %1819 = vmatprep.subr.bf16.mxu0 0
    %1820 = vmatpush1.bf16.msra.mxu0 %v1812
    %1821 = vmatprep.subr.bf16.mxu0 0
    %1822 = vmatpush1.bf16.msra.mxu0 %v1813
    %1823 = vmatprep.subr.bf16.mxu0 0
    %1824 = vmatpush1.bf16.msra.mxu0 0
    %1825 = vmatprep.subr.bf16.mxu0 0
    %1826 = vmatpush1.bf16.msra.mxu0 0
    %1827 = vmatprep.subr.bf16.mxu0 0
    %1828 = vmatpush1.bf16.msra.mxu0 0
    %1829 = vmatprep.subr.bf16.mxu0 0
    %1830 = vmatpush1.bf16.msra.mxu0 0
    %1831 = vmatprep.subr.bf16.mxu0 0
    %1832 = vmatpush1.bf16.msra.mxu0 0
    %1833 = vmatprep.subr.bf16.mxu0 0
    %1834 = vmatpush1.bf16.msra.mxu0 0
    %1835 = vmatprep.subr.bf16.mxu0 0
    %1836 = vmatpush1.bf16.msra.mxu0 0
    %1837 = vmatprep.subr.bf16.mxu0 0
    %1838 = vmatpush1.bf16.msra.mxu0 0
    %1839 = vmatprep.subr.bf16.mxu0 0
    %1840 = vmatpush1.bf16.msra.mxu0 0
    %1841 = vmatprep.subr.bf16.mxu0 0
    %1842 = vmatpush1.bf16.msra.mxu0 0
    %1843 = vmatprep.subr.bf16.mxu0 0
    %1844 = vmatpush1.bf16.msra.mxu0 0
    %1845 = vmatprep.subr.bf16.mxu0 0
    %1846 = vmatpush1.bf16.msra.mxu0 0
    %1847 = vmatprep.subr.bf16.mxu0 0
    %1848 = vmatpush1.bf16.msra.mxu0 0
    %1849 = vmatprep.subr.bf16.mxu0 0
    %1850 = vmatpush1.bf16.msra.mxu0 0
    %1851 = vmatprep.mubr.bf16.mxu0 0
    %1852 = vmatmul.mubr.bf16.gmra.mrb[0].mxu0 %v1817
    %v1853 = vpop.f32.mrb[0].mxu0
    %v1854 = vadd.f32 0.0, %v1853
    %v1855 = vpop.f32.mrb[0].mxu0
    %v1856 = vpop.f32.mrb[0].mxu0
    %v1857 = vpop.f32.mrb[0].mxu0
    %1858 = vdwg.mxu0
    %v1859 = vadd.f32 %v1797, %v1854
    %s1860 = scalar_lea.vmem %s3, 176
    %v1861 = vld [vmem:[%s1860] sm:$0xf]
    %v1862 = vld [vmem:[%s1860 + $0x4] sm:$0xf]
    %v1863 = vld [vmem:[%s1860 + $0x8] sm:$0xf]
    %v1864 = vld [vmem:[%s1860 + $0xc] sm:$0xf]
    %v1865 = vrot.slane %v1177, 3
    %v1870 = vunpack.c.l.b16 %v1861
    %v1871 = vunpack.c.l.b16 %v1862
    %v1872 = vunpack.c.l.b16 %v1863
    %v1873 = vunpack.c.l.b16 %v1864
    %v1874 = vpack.c.b16 %v1871, %v1870
    %v1875 = vpack.c.b16 %v1873, %v1872
    %v1879 = vsel %vm1203, %v1865, 0
    %1881 = vmatprep.subr.bf16.mxu0 0
    %1882 = vmatpush1.bf16.msra.mxu0 %v1874
    %1883 = vmatprep.subr.bf16.mxu0 0
    %1884 = vmatpush1.bf16.msra.mxu0 %v1875
    %1885 = vmatprep.subr.bf16.mxu0 0
    %1886 = vmatpush1.bf16.msra.mxu0 0
    %1887 = vmatprep.subr.bf16.mxu0 0
    %1888 = vmatpush1.bf16.msra.mxu0 0
    %1889 = vmatprep.subr.bf16.mxu0 0
    %1890 = vmatpush1.bf16.msra.mxu0 0
    %1891 = vmatprep.subr.bf16.mxu0 0
    %1892 = vmatpush1.bf16.msra.mxu0 0
    %1893 = vmatprep.subr.bf16.mxu0 0
    %1894 = vmatpush1.bf16.msra.mxu0 0
    %1895 = vmatprep.subr.bf16.mxu0 0
    %1896 = vmatpush1.bf16.msra.mxu0 0
    %1897 = vmatprep.subr.bf16.mxu0 0
    %1898 = vmatpush1.bf16.msra.mxu0 0
    %1899 = vmatprep.subr.bf16.mxu0 0
    %1900 = vmatpush1.bf16.msra.mxu0 0
    %1901 = vmatprep.subr.bf16.mxu0 0
    %1902 = vmatpush1.bf16.msra.mxu0 0
    %1903 = vmatprep.subr.bf16.mxu0 0
    %1904 = vmatpush1.bf16.msra.mxu0 0
    %1905 = vmatprep.subr.bf16.mxu0 0
    %1906 = vmatpush1.bf16.msra.mxu0 0
    %1907 = vmatprep.subr.bf16.mxu0 0
    %1908 = vmatpush1.bf16.msra.mxu0 0
    %1909 = vmatprep.subr.bf16.mxu0 0
    %1910 = vmatpush1.bf16.msra.mxu0 0
    %1911 = vmatprep.subr.bf16.mxu0 0
    %1912 = vmatpush1.bf16.msra.mxu0 0
    %1913 = vmatprep.mubr.bf16.mxu0 0
    %1914 = vmatmul.mubr.bf16.gmra.mrb[0].mxu0 %v1879
    %v1915 = vpop.f32.mrb[0].mxu0
    %v1916 = vadd.f32 0.0, %v1915
    %v1917 = vpop.f32.mrb[0].mxu0
    %v1918 = vpop.f32.mrb[0].mxu0
    %v1919 = vpop.f32.mrb[0].mxu0
    %1920 = vdwg.mxu0
    %v1921 = vadd.f32 %v1859, %v1916
    %s1922 = scalar_lea.vmem %s3, 192
    %v1923 = vld [vmem:[%s1922] sm:$0xf]
    %v1924 = vld [vmem:[%s1922 + $0x4] sm:$0xf]
    %v1925 = vld [vmem:[%s1922 + $0x8] sm:$0xf]
    %v1926 = vld [vmem:[%s1922 + $0xc] sm:$0xf]
    %v1927 = vrot.slane %v1177, 4
    %v1932 = vunpack.c.l.b16 %v1923
    %v1933 = vunpack.c.l.b16 %v1924
    %v1934 = vunpack.c.l.b16 %v1925
    %v1935 = vunpack.c.l.b16 %v1926
    %v1936 = vpack.c.b16 %v1933, %v1932
    %v1937 = vpack.c.b16 %v1935, %v1934
    %v1941 = vsel %vm1203, %v1927, 0
    %1943 = vmatprep.subr.bf16.mxu0 0
    %1944 = vmatpush1.bf16.msra.mxu0 %v1936
    %1945 = vmatprep.subr.bf16.mxu0 0
    %1946 = vmatpush1.bf16.msra.mxu0 %v1937
    %1947 = vmatprep.subr.bf16.mxu0 0
    %1948 = vmatpush1.bf16.msra.mxu0 0
    %1949 = vmatprep.subr.bf16.mxu0 0
    %1950 = vmatpush1.bf16.msra.mxu0 0
    %1951 = vmatprep.subr.bf16.mxu0 0
    %1952 = vmatpush1.bf16.msra.mxu0 0
    %1953 = vmatprep.subr.bf16.mxu0 0
    %1954 = vmatpush1.bf16.msra.mxu0 0
    %1955 = vmatprep.subr.bf16.mxu0 0
    %1956 = vmatpush1.bf16.msra.mxu0 0
    %1957 = vmatprep.subr.bf16.mxu0 0
    %1958 = vmatpush1.bf16.msra.mxu0 0
    %1959 = vmatprep.subr.bf16.mxu0 0
    %1960 = vmatpush1.bf16.msra.mxu0 0
    %1961 = vmatprep.subr.bf16.mxu0 0
    %1962 = vmatpush1.bf16.msra.mxu0 0
    %1963 = vmatprep.subr.bf16.mxu0 0
    %1964 = vmatpush1.bf16.msra.mxu0 0
    %1965 = vmatprep.subr.bf16.mxu0 0
    %1966 = vmatpush1.bf16.msra.mxu0 0
    %1967 = vmatprep.subr.bf16.mxu0 0
    %1968 = vmatpush1.bf16.msra.mxu0 0
    %1969 = vmatprep.subr.bf16.mxu0 0
    %1970 = vmatpush1.bf16.msra.mxu0 0
    %1971 = vmatprep.subr.bf16.mxu0 0
    %1972 = vmatpush1.bf16.msra.mxu0 0
    %1973 = vmatprep.subr.bf16.mxu0 0
    %1974 = vmatpush1.bf16.msra.mxu0 0
    %1975 = vmatprep.mubr.bf16.mxu0 0
    %1976 = vmatmul.mubr.bf16.gmra.mrb[0].mxu0 %v1941
    %v1977 = vpop.f32.mrb[0].mxu0
    %v1978 = vadd.f32 0.0, %v1977
    %v1979 = vpop.f32.mrb[0].mxu0
    %v1980 = vpop.f32.mrb[0].mxu0
    %v1981 = vpop.f32.mrb[0].mxu0
    %1982 = vdwg.mxu0
    %v1983 = vadd.f32 %v1921, %v1978
    %s1984 = scalar_lea.vmem %s3, 208
    %v1985 = vld [vmem:[%s1984] sm:$0xf]
    %v1986 = vld [vmem:[%s1984 + $0x4] sm:$0xf]
    %v1987 = vld [vmem:[%s1984 + $0x8] sm:$0xf]
    %v1988 = vld [vmem:[%s1984 + $0xc] sm:$0xf]
    %v1989 = vrot.slane %v1177, 5
    %v1994 = vunpack.c.l.b16 %v1985
    %v1995 = vunpack.c.l.b16 %v1986
    %v1996 = vunpack.c.l.b16 %v1987
    %v1997 = vunpack.c.l.b16 %v1988
    %v1998 = vpack.c.b16 %v1995, %v1994
    %v1999 = vpack.c.b16 %v1997, %v1996
    %v2003 = vsel %vm1203, %v1989, 0
    %2005 = vmatprep.subr.bf16.mxu0 0
    %2006 = vmatpush1.bf16.msra.mxu0 %v1998
    %2007 = vmatprep.subr.bf16.mxu0 0
    %2008 = vmatpush1.bf16.msra.mxu0 %v1999
    %2009 = vmatprep.subr.bf16.mxu0 0
    %2010 = vmatpush1.bf16.msra.mxu0 0
    %2011 = vmatprep.subr.bf16.mxu0 0
    %2012 = vmatpush1.bf16.msra.mxu0 0
    %2013 = vmatprep.subr.bf16.mxu0 0
    %2014 = vmatpush1.bf16.msra.mxu0 0
    %2015 = vmatprep.subr.bf16.mxu0 0
    %2016 = vmatpush1.bf16.msra.mxu0 0
    %2017 = vmatprep.subr.bf16.mxu0 0
    %2018 = vmatpush1.bf16.msra.mxu0 0
    %2019 = vmatprep.subr.bf16.mxu0 0
    %2020 = vmatpush1.bf16.msra.mxu0 0
    %2021 = vmatprep.subr.bf16.mxu0 0
    %2022 = vmatpush1.bf16.msra.mxu0 0
    %2023 = vmatprep.subr.bf16.mxu0 0
    %2024 = vmatpush1.bf16.msra.mxu0 0
    %2025 = vmatprep.subr.bf16.mxu0 0
    %2026 = vmatpush1.bf16.msra.mxu0 0
    %2027 = vmatprep.subr.bf16.mxu0 0
    %2028 = vmatpush1.bf16.msra.mxu0 0
    %2029 = vmatprep.subr.bf16.mxu0 0
    %2030 = vmatpush1.bf16.msra.mxu0 0
    %2031 = vmatprep.subr.bf16.mxu0 0
    %2032 = vmatpush1.bf16.msra.mxu0 0
    %2033 = vmatprep.subr.bf16.mxu0 0
    %2034 = vmatpush1.bf16.msra.mxu0 0
    %2035 = vmatprep.subr.bf16.mxu0 0
    %2036 = vmatpush1.bf16.msra.mxu0 0
    %2037 = vmatprep.mubr.bf16.mxu0 0
    %2038 = vmatmul.mubr.bf16.gmra.mrb[0].mxu0 %v2003
    %v2039 = vpop.f32.mrb[0].mxu0
    %v2040 = vadd.f32 0.0, %v2039
    %v2041 = vpop.f32.mrb[0].mxu0
    %v2042 = vpop.f32.mrb[0].mxu0
    %v2043 = vpop.f32.mrb[0].mxu0
    %2044 = vdwg.mxu0
    %v2045 = vadd.f32 %v1983, %v2040
    %s2046 = scalar_lea.vmem %s3, 224
    %v2047 = vld [vmem:[%s2046] sm:$0xf]
    %v2048 = vld [vmem:[%s2046 + $0x4] sm:$0xf]
    %v2049 = vld [vmem:[%s2046 + $0x8] sm:$0xf]
    %v2050 = vld [vmem:[%s2046 + $0xc] sm:$0xf]
    %v2051 = vrot.slane %v1177, 6
    %v2056 = vunpack.c.l.b16 %v2047
    %v2057 = vunpack.c.l.b16 %v2048
    %v2058 = vunpack.c.l.b16 %v2049
    %v2059 = vunpack.c.l.b16 %v2050
    %v2060 = vpack.c.b16 %v2057, %v2056
    %v2061 = vpack.c.b16 %v2059, %v2058
    %v2065 = vsel %vm1203, %v2051, 0
    %2067 = vmatprep.subr.bf16.mxu0 0
    %2068 = vmatpush1.bf16.msra.mxu0 %v2060
    %2069 = vmatprep.subr.bf16.mxu0 0
    %2070 = vmatpush1.bf16.msra.mxu0 %v2061
    %2071 = vmatprep.subr.bf16.mxu0 0
    %2072 = vmatpush1.bf16.msra.mxu0 0
    %2073 = vmatprep.subr.bf16.mxu0 0
    %2074 = vmatpush1.bf16.msra.mxu0 0
    %2075 = vmatprep.subr.bf16.mxu0 0
    %2076 = vmatpush1.bf16.msra.mxu0 0
    %2077 = vmatprep.subr.bf16.mxu0 0
    %2078 = vmatpush1.bf16.msra.mxu0 0
    %2079 = vmatprep.subr.bf16.mxu0 0
    %2080 = vmatpush1.bf16.msra.mxu0 0
    %2081 = vmatprep.subr.bf16.mxu0 0
    %2082 = vmatpush1.bf16.msra.mxu0 0
    %2083 = vmatprep.subr.bf16.mxu0 0
    %2084 = vmatpush1.bf16.msra.mxu0 0
    %2085 = vmatprep.subr.bf16.mxu0 0
    %2086 = vmatpush1.bf16.msra.mxu0 0
    %2087 = vmatprep.subr.bf16.mxu0 0
    %2088 = vmatpush1.bf16.msra.mxu0 0
    %2089 = vmatprep.subr.bf16.mxu0 0
    %2090 = vmatpush1.bf16.msra.mxu0 0
    %2091 = vmatprep.subr.bf16.mxu0 0
    %2092 = vmatpush1.bf16.msra.mxu0 0
    %2093 = vmatprep.subr.bf16.mxu0 0
    %2094 = vmatpush1.bf16.msra.mxu0 0
    %2095 = vmatprep.subr.bf16.mxu0 0
    %2096 = vmatpush1.bf16.msra.mxu0 0
    %2097 = vmatprep.subr.bf16.mxu0 0
    %2098 = vmatpush1.bf16.msra.mxu0 0
    %2099 = vmatprep.mubr.bf16.mxu0 0
    %2100 = vmatmul.mubr.bf16.gmra.mrb[0].mxu0 %v2065
    %v2101 = vpop.f32.mrb[0].mxu0
    %v2102 = vadd.f32 0.0, %v2101
    %v2103 = vpop.f32.mrb[0].mxu0
    %v2104 = vpop.f32.mrb[0].mxu0
    %v2105 = vpop.f32.mrb[0].mxu0
    %2106 = vdwg.mxu0
    %v2107 = vadd.f32 %v2045, %v2102
    %s2108 = scalar_lea.vmem %s3, 240
    %v2109 = vld [vmem:[%s2108] sm:$0xf]
    %v2110 = vld [vmem:[%s2108 + $0x4] sm:$0xf]
    %v2111 = vld [vmem:[%s2108 + $0x8] sm:$0xf]
    %v2112 = vld [vmem:[%s2108 + $0xc] sm:$0xf]
    %v2113 = vrot.slane %v1177, 7
    %v2118 = vunpack.c.l.b16 %v2109
    %v2119 = vunpack.c.l.b16 %v2110
    %v2120 = vunpack.c.l.b16 %v2111
    %v2121 = vunpack.c.l.b16 %v2112
    %v2122 = vpack.c.b16 %v2119, %v2118
    %v2123 = vpack.c.b16 %v2121, %v2120
    %v2127 = vsel %vm1203, %v2113, 0
    %2129 = vmatprep.subr.bf16.mxu0 0
    %2130 = vmatpush1.bf16.msra.mxu0 %v2122
    %2131 = vmatprep.subr.bf16.mxu0 0
    %2132 = vmatpush1.bf16.msra.mxu0 %v2123
    %2133 = vmatprep.subr.bf16.mxu0 0
    %2134 = vmatpush1.bf16.msra.mxu0 0
    %2135 = vmatprep.subr.bf16.mxu0 0
    %2136 = vmatpush1.bf16.msra.mxu0 0
    %2137 = vmatprep.subr.bf16.mxu0 0
    %2138 = vmatpush1.bf16.msra.mxu0 0
    %2139 = vmatprep.subr.bf16.mxu0 0
    %2140 = vmatpush1.bf16.msra.mxu0 0
    %2141 = vmatprep.subr.bf16.mxu0 0
    %2142 = vmatpush1.bf16.msra.mxu0 0
    %2143 = vmatprep.subr.bf16.mxu0 0
    %2144 = vmatpush1.bf16.msra.mxu0 0
    %2145 = vmatprep.subr.bf16.mxu0 0
    %2146 = vmatpush1.bf16.msra.mxu0 0
    %2147 = vmatprep.subr.bf16.mxu0 0
    %2148 = vmatpush1.bf16.msra.mxu0 0
    %2149 = vmatprep.subr.bf16.mxu0 0
    %2150 = vmatpush1.bf16.msra.mxu0 0
    %2151 = vmatprep.subr.bf16.mxu0 0
    %2152 = vmatpush1.bf16.msra.mxu0 0
    %2153 = vmatprep.subr.bf16.mxu0 0
    %2154 = vmatpush1.bf16.msra.mxu0 0
    %2155 = vmatprep.subr.bf16.mxu0 0
    %2156 = vmatpush1.bf16.msra.mxu0 0
    %2157 = vmatprep.subr.bf16.mxu0 0
    %2158 = vmatpush1.bf16.msra.mxu0 0
    %2159 = vmatprep.subr.bf16.mxu0 0
    %2160 = vmatpush1.bf16.msra.mxu0 0
    %2161 = vmatprep.mubr.bf16.mxu0 0
    %2162 = vmatmul.mubr.bf16.gmra.mrb[0].mxu0 %v2127
    %v2163 = vpop.f32.mrb[0].mxu0
    %v2164 = vadd.f32 0.0, %v2163
    %v2165 = vpop.f32.mrb[0].mxu0
    %v2166 = vpop.f32.mrb[0].mxu0
    %v2167 = vpop.f32.mrb[0].mxu0
    %2168 = vdwg.mxu0
    %v2169 = vadd.f32 %v2107, %v2164
    %s2170 = scalar_lea.vmem %s3, 256
    %v2171 = vld [vmem:[%s2170] sm:$0xf]
    %v2172 = vld [vmem:[%s2170 + $0x4] sm:$0xf]
    %v2173 = vld [vmem:[%s2170 + $0x8] sm:$0xf]
    %v2174 = vld [vmem:[%s2170 + $0xc] sm:$0xf]
    %v2179 = vunpack.c.l.b16 %v2171
    %v2180 = vunpack.c.l.b16 %v2172
    %v2181 = vunpack.c.l.b16 %v2173
    %v2182 = vunpack.c.l.b16 %v2174
    %v2183 = vpack.c.b16 %v2180, %v2179
    %v2184 = vpack.c.b16 %v2182, %v2181
    %v2188 = vsel %vm1203, %v1178, 0
    %2190 = vmatprep.subr.bf16.mxu0 0
    %2191 = vmatpush1.bf16.msra.mxu0 %v2183
    %2192 = vmatprep.subr.bf16.mxu0 0
    %2193 = vmatpush1.bf16.msra.mxu0 %v2184
    %2194 = vmatprep.subr.bf16.mxu0 0
    %2195 = vmatpush1.bf16.msra.mxu0 0
    %2196 = vmatprep.subr.bf16.mxu0 0
    %2197 = vmatpush1.bf16.msra.mxu0 0
    %2198 = vmatprep.subr.bf16.mxu0 0
    %2199 = vmatpush1.bf16.msra.mxu0 0
    %2200 = vmatprep.subr.bf16.mxu0 0
    %2201 = vmatpush1.bf16.msra.mxu0 0
    %2202 = vmatprep.subr.bf16.mxu0 0
    %2203 = vmatpush1.bf16.msra.mxu0 0
    %2204 = vmatprep.subr.bf16.mxu0 0
    %2205 = vmatpush1.bf16.msra.mxu0 0
    %2206 = vmatprep.subr.bf16.mxu0 0
    %2207 = vmatpush1.bf16.msra.mxu0 0
    %2208 = vmatprep.subr.bf16.mxu0 0
    %2209 = vmatpush1.bf16.msra.mxu0 0
    %2210 = vmatprep.subr.bf16.mxu0 0
    %2211 = vmatpush1.bf16.msra.mxu0 0
    %2212 = vmatprep.subr.bf16.mxu0 0
    %2213 = vmatpush1.bf16.msra.mxu0 0
    %2214 = vmatprep.subr.bf16.mxu0 0
    %2215 = vmatpush1.bf16.msra.mxu0 0
    %2216 = vmatprep.subr.bf16.mxu0 0
    %2217 = vmatpush1.bf16.msra.mxu0 0
    %2218 = vmatprep.subr.bf16.mxu0 0
    %2219 = vmatpush1.bf16.msra.mxu0 0
    %2220 = vmatprep.subr.bf16.mxu0 0
    %2221 = vmatpush1.bf16.msra.mxu0 0
    %2222 = vmatprep.mubr.bf16.mxu0 0
    %2223 = vmatmul.mubr.bf16.gmra.mrb[0].mxu0 %v2188
    %v2224 = vpop.f32.mrb[0].mxu0
    %v2225 = vadd.f32 0.0, %v2224
    %v2226 = vpop.f32.mrb[0].mxu0
    %v2227 = vpop.f32.mrb[0].mxu0
    %v2228 = vpop.f32.mrb[0].mxu0
    %2229 = vdwg.mxu0
    %v2230 = vadd.f32 %v2169, %v2225
    %s2231 = scalar_lea.vmem %s3, 272
    %v2232 = vld [vmem:[%s2231] sm:$0xf]
    %v2233 = vld [vmem:[%s2231 + $0x4] sm:$0xf]
    %v2234 = vld [vmem:[%s2231 + $0x8] sm:$0xf]
    %v2235 = vld [vmem:[%s2231 + $0xc] sm:$0xf]
    %v2237 = vrot.slane %v1178, 1
    %v2242 = vunpack.c.l.b16 %v2232
    %v2243 = vunpack.c.l.b16 %v2233
    %v2244 = vunpack.c.l.b16 %v2234
    %v2245 = vunpack.c.l.b16 %v2235
    %v2246 = vpack.c.b16 %v2243, %v2242
    %v2247 = vpack.c.b16 %v2245, %v2244
    %v2251 = vsel %vm1203, %v2237, 0
    %2253 = vmatprep.subr.bf16.mxu0 0
    %2254 = vmatpush1.bf16.msra.mxu0 %v2246
    %2255 = vmatprep.subr.bf16.mxu0 0
    %2256 = vmatpush1.bf16.msra.mxu0 %v2247
    %2257 = vmatprep.subr.bf16.mxu0 0
    %2258 = vmatpush1.bf16.msra.mxu0 0
    %2259 = vmatprep.subr.bf16.mxu0 0
    %2260 = vmatpush1.bf16.msra.mxu0 0
    %2261 = vmatprep.subr.bf16.mxu0 0
    %2262 = vmatpush1.bf16.msra.mxu0 0
    %2263 = vmatprep.subr.bf16.mxu0 0
    %2264 = vmatpush1.bf16.msra.mxu0 0
    %2265 = vmatprep.subr.bf16.mxu0 0
    %2266 = vmatpush1.bf16.msra.mxu0 0
    %2267 = vmatprep.subr.bf16.mxu0 0
    %2268 = vmatpush1.bf16.msra.mxu0 0
    %2269 = vmatprep.subr.bf16.mxu0 0
    %2270 = vmatpush1.bf16.msra.mxu0 0
    %2271 = vmatprep.subr.bf16.mxu0 0
    %2272 = vmatpush1.bf16.msra.mxu0 0
    %2273 = vmatprep.subr.bf16.mxu0 0
    %2274 = vmatpush1.bf16.msra.mxu0 0
    %2275 = vmatprep.subr.bf16.mxu0 0
    %2276 = vmatpush1.bf16.msra.mxu0 0
    %2277 = vmatprep.subr.bf16.mxu0 0
    %2278 = vmatpush1.bf16.msra.mxu0 0
    %2279 = vmatprep.subr.bf16.mxu0 0
    %2280 = vmatpush1.bf16.msra.mxu0 0
    %2281 = vmatprep.subr.bf16.mxu0 0
    %2282 = vmatpush1.bf16.msra.mxu0 0
    %2283 = vmatprep.subr.bf16.mxu0 0
    %2284 = vmatpush1.bf16.msra.mxu0 0
    %2285 = vmatprep.mubr.bf16.mxu0 0
    %2286 = vmatmul.mubr.bf16.gmra.mrb[0].mxu0 %v2251
    %v2287 = vpop.f32.mrb[0].mxu0
    %v2288 = vadd.f32 0.0, %v2287
    %v2289 = vpop.f32.mrb[0].mxu0
    %v2290 = vpop.f32.mrb[0].mxu0
    %v2291 = vpop.f32.mrb[0].mxu0
    %2292 = vdwg.mxu0
    %v2293 = vadd.f32 %v2230, %v2288
    %s2294 = scalar_lea.vmem %s3, 288
    %v2295 = vld [vmem:[%s2294] sm:$0xf]
    %v2296 = vld [vmem:[%s2294 + $0x4] sm:$0xf]
    %v2297 = vld [vmem:[%s2294 + $0x8] sm:$0xf]
    %v2298 = vld [vmem:[%s2294 + $0xc] sm:$0xf]
    %v2299 = vrot.slane %v1178, 2
    %v2304 = vunpack.c.l.b16 %v2295
    %v2305 = vunpack.c.l.b16 %v2296
    %v2306 = vunpack.c.l.b16 %v2297
    %v2307 = vunpack.c.l.b16 %v2298
    %v2308 = vpack.c.b16 %v2305, %v2304
    %v2309 = vpack.c.b16 %v2307, %v2306
    %v2313 = vsel %vm1203, %v2299, 0
    %2315 = vmatprep.subr.bf16.mxu0 0
    %2316 = vmatpush1.bf16.msra.mxu0 %v2308
    %2317 = vmatprep.subr.bf16.mxu0 0
    %2318 = vmatpush1.bf16.msra.mxu0 %v2309
    %2319 = vmatprep.subr.bf16.mxu0 0
    %2320 = vmatpush1.bf16.msra.mxu0 0
    %2321 = vmatprep.subr.bf16.mxu0 0
    %2322 = vmatpush1.bf16.msra.mxu0 0
    %2323 = vmatprep.subr.bf16.mxu0 0
    %2324 = vmatpush1.bf16.msra.mxu0 0
    %2325 = vmatprep.subr.bf16.mxu0 0
    %2326 = vmatpush1.bf16.msra.mxu0 0
    %2327 = vmatprep.subr.bf16.mxu0 0
    %2328 = vmatpush1.bf16.msra.mxu0 0
    %2329 = vmatprep.subr.bf16.mxu0 0
    %2330 = vmatpush1.bf16.msra.mxu0 0
    %2331 = vmatprep.subr.bf16.mxu0 0
    %2332 = vmatpush1.bf16.msra.mxu0 0
    %2333 = vmatprep.subr.bf16.mxu0 0
    %2334 = vmatpush1.bf16.msra.mxu0 0
    %2335 = vmatprep.subr.bf16.mxu0 0
    %2336 = vmatpush1.bf16.msra.mxu0 0
    %2337 = vmatprep.subr.bf16.mxu0 0
    %2338 = vmatpush1.bf16.msra.mxu0 0
    %2339 = vmatprep.subr.bf16.mxu0 0
    %2340 = vmatpush1.bf16.msra.mxu0 0
    %2341 = vmatprep.subr.bf16.mxu0 0
    %2342 = vmatpush1.bf16.msra.mxu0 0
    %2343 = vmatprep.subr.bf16.mxu0 0
    %2344 = vmatpush1.bf16.msra.mxu0 0
    %2345 = vmatprep.subr.bf16.mxu0 0
    %2346 = vmatpush1.bf16.msra.mxu0 0
    %2347 = vmatprep.mubr.bf16.mxu0 0
    %2348 = vmatmul.mubr.bf16.gmra.mrb[0].mxu0 %v2313
    %v2349 = vpop.f32.mrb[0].mxu0
    %v2350 = vadd.f32 0.0, %v2349
    %v2351 = vpop.f32.mrb[0].mxu0
    %v2352 = vpop.f32.mrb[0].mxu0
    %v2353 = vpop.f32.mrb[0].mxu0
    %2354 = vdwg.mxu0
    %v2355 = vadd.f32 %v2293, %v2350
    %s2356 = scalar_lea.vmem %s3, 304
    %v2357 = vld [vmem:[%s2356] sm:$0xf]
    %v2358 = vld [vmem:[%s2356 + $0x4] sm:$0xf]
    %v2359 = vld [vmem:[%s2356 + $0x8] sm:$0xf]
    %v2360 = vld [vmem:[%s2356 + $0xc] sm:$0xf]
    %v2361 = vrot.slane %v1178, 3
    %v2366 = vunpack.c.l.b16 %v2357
    %v2367 = vunpack.c.l.b16 %v2358
    %v2368 = vunpack.c.l.b16 %v2359
    %v2369 = vunpack.c.l.b16 %v2360
    %v2370 = vpack.c.b16 %v2367, %v2366
    %v2371 = vpack.c.b16 %v2369, %v2368
    %v2375 = vsel %vm1203, %v2361, 0
    %2377 = vmatprep.subr.bf16.mxu0 0
    %2378 = vmatpush1.bf16.msra.mxu0 %v2370
    %2379 = vmatprep.subr.bf16.mxu0 0
    %2380 = vmatpush1.bf16.msra.mxu0 %v2371
    %2381 = vmatprep.subr.bf16.mxu0 0
    %2382 = vmatpush1.bf16.msra.mxu0 0
    %2383 = vmatprep.subr.bf16.mxu0 0
    %2384 = vmatpush1.bf16.msra.mxu0 0
    %2385 = vmatprep.subr.bf16.mxu0 0
    %2386 = vmatpush1.bf16.msra.mxu0 0
    %2387 = vmatprep.subr.bf16.mxu0 0
    %2388 = vmatpush1.bf16.msra.mxu0 0
    %2389 = vmatprep.subr.bf16.mxu0 0
    %2390 = vmatpush1.bf16.msra.mxu0 0
    %2391 = vmatprep.subr.bf16.mxu0 0
    %2392 = vmatpush1.bf16.msra.mxu0 0
    %2393 = vmatprep.subr.bf16.mxu0 0
    %2394 = vmatpush1.bf16.msra.mxu0 0
    %2395 = vmatprep.subr.bf16.mxu0 0
    %2396 = vmatpush1.bf16.msra.mxu0 0
    %2397 = vmatprep.subr.bf16.mxu0 0
    %2398 = vmatpush1.bf16.msra.mxu0 0
    %2399 = vmatprep.subr.bf16.mxu0 0
    %2400 = vmatpush1.bf16.msra.mxu0 0
    %2401 = vmatprep.subr.bf16.mxu0 0
    %2402 = vmatpush1.bf16.msra.mxu0 0
    %2403 = vmatprep.subr.bf16.mxu0 0
    %2404 = vmatpush1.bf16.msra.mxu0 0
    %2405 = vmatprep.subr.bf16.mxu0 0
    %2406 = vmatpush1.bf16.msra.mxu0 0
    %2407 = vmatprep.subr.bf16.mxu0 0
    %2408 = vmatpush1.bf16.msra.mxu0 0
    %2409 = vmatprep.mubr.bf16.mxu0 0
    %2410 = vmatmul.mubr.bf16.gmra.mrb[0].mxu0 %v2375
    %v2411 = vpop.f32.mrb[0].mxu0
    %v2412 = vadd.f32 0.0, %v2411
    %v2413 = vpop.f32.mrb[0].mxu0
    %v2414 = vpop.f32.mrb[0].mxu0
    %v2415 = vpop.f32.mrb[0].mxu0
    %2416 = vdwg.mxu0
    %v2417 = vadd.f32 %v2355, %v2412
    %s2418 = scalar_lea.vmem %s3, 320
    %v2419 = vld [vmem:[%s2418] sm:$0xf]
    %v2420 = vld [vmem:[%s2418 + $0x4] sm:$0xf]
    %v2421 = vld [vmem:[%s2418 + $0x8] sm:$0xf]
    %v2422 = vld [vmem:[%s2418 + $0xc] sm:$0xf]
    %v2423 = vrot.slane %v1178, 4
    %v2428 = vunpack.c.l.b16 %v2419
    %v2429 = vunpack.c.l.b16 %v2420
    %v2430 = vunpack.c.l.b16 %v2421
    %v2431 = vunpack.c.l.b16 %v2422
    %v2432 = vpack.c.b16 %v2429, %v2428
    %v2433 = vpack.c.b16 %v2431, %v2430
    %v2437 = vsel %vm1203, %v2423, 0
    %2439 = vmatprep.subr.bf16.mxu0 0
    %2440 = vmatpush1.bf16.msra.mxu0 %v2432
    %2441 = vmatprep.subr.bf16.mxu0 0
    %2442 = vmatpush1.bf16.msra.mxu0 %v2433
    %2443 = vmatprep.subr.bf16.mxu0 0
    %2444 = vmatpush1.bf16.msra.mxu0 0
    %2445 = vmatprep.subr.bf16.mxu0 0
    %2446 = vmatpush1.bf16.msra.mxu0 0
    %2447 = vmatprep.subr.bf16.mxu0 0
    %2448 = vmatpush1.bf16.msra.mxu0 0
    %2449 = vmatprep.subr.bf16.mxu0 0
    %2450 = vmatpush1.bf16.msra.mxu0 0
    %2451 = vmatprep.subr.bf16.mxu0 0
    %2452 = vmatpush1.bf16.msra.mxu0 0
    %2453 = vmatprep.subr.bf16.mxu0 0
    %2454 = vmatpush1.bf16.msra.mxu0 0
    %2455 = vmatprep.subr.bf16.mxu0 0
    %2456 = vmatpush1.bf16.msra.mxu0 0
    %2457 = vmatprep.subr.bf16.mxu0 0
    %2458 = vmatpush1.bf16.msra.mxu0 0
    %2459 = vmatprep.subr.bf16.mxu0 0
    %2460 = vmatpush1.bf16.msra.mxu0 0
    %2461 = vmatprep.subr.bf16.mxu0 0
    %2462 = vmatpush1.bf16.msra.mxu0 0
    %2463 = vmatprep.subr.bf16.mxu0 0
    %2464 = vmatpush1.bf16.msra.mxu0 0
    %2465 = vmatprep.subr.bf16.mxu0 0
    %2466 = vmatpush1.bf16.msra.mxu0 0
    %2467 = vmatprep.subr.bf16.mxu0 0
    %2468 = vmatpush1.bf16.msra.mxu0 0
    %2469 = vmatprep.subr.bf16.mxu0 0
    %2470 = vmatpush1.bf16.msra.mxu0 0
    %2471 = vmatprep.mubr.bf16.mxu0 0
    %2472 = vmatmul.mubr.bf16.gmra.mrb[0].mxu0 %v2437
    %v2473 = vpop.f32.mrb[0].mxu0
    %v2474 = vadd.f32 0.0, %v2473
    %v2475 = vpop.f32.mrb[0].mxu0
    %v2476 = vpop.f32.mrb[0].mxu0
    %v2477 = vpop.f32.mrb[0].mxu0
    %2478 = vdwg.mxu0
    %v2479 = vadd.f32 %v2417, %v2474
    %s2480 = scalar_lea.vmem %s3, 336
    %v2481 = vld [vmem:[%s2480] sm:$0xf]
    %v2482 = vld [vmem:[%s2480 + $0x4] sm:$0xf]
    %v2483 = vld [vmem:[%s2480 + $0x8] sm:$0xf]
    %v2484 = vld [vmem:[%s2480 + $0xc] sm:$0xf]
    %v2485 = vrot.slane %v1178, 5
    %v2490 = vunpack.c.l.b16 %v2481
    %v2491 = vunpack.c.l.b16 %v2482
    %v2492 = vunpack.c.l.b16 %v2483
    %v2493 = vunpack.c.l.b16 %v2484
    %v2494 = vpack.c.b16 %v2491, %v2490
    %v2495 = vpack.c.b16 %v2493, %v2492
    %v2499 = vsel %vm1203, %v2485, 0
    %2501 = vmatprep.subr.bf16.mxu0 0
    %2502 = vmatpush1.bf16.msra.mxu0 %v2494
    %2503 = vmatprep.subr.bf16.mxu0 0
    %2504 = vmatpush1.bf16.msra.mxu0 %v2495
    %2505 = vmatprep.subr.bf16.mxu0 0
    %2506 = vmatpush1.bf16.msra.mxu0 0
    %2507 = vmatprep.subr.bf16.mxu0 0
    %2508 = vmatpush1.bf16.msra.mxu0 0
    %2509 = vmatprep.subr.bf16.mxu0 0
    %2510 = vmatpush1.bf16.msra.mxu0 0
    %2511 = vmatprep.subr.bf16.mxu0 0
    %2512 = vmatpush1.bf16.msra.mxu0 0
    %2513 = vmatprep.subr.bf16.mxu0 0
    %2514 = vmatpush1.bf16.msra.mxu0 0
    %2515 = vmatprep.subr.bf16.mxu0 0
    %2516 = vmatpush1.bf16.msra.mxu0 0
    %2517 = vmatprep.subr.bf16.mxu0 0
    %2518 = vmatpush1.bf16.msra.mxu0 0
    %2519 = vmatprep.subr.bf16.mxu0 0
    %2520 = vmatpush1.bf16.msra.mxu0 0
    %2521 = vmatprep.subr.bf16.mxu0 0
    %2522 = vmatpush1.bf16.msra.mxu0 0
    %2523 = vmatprep.subr.bf16.mxu0 0
    %2524 = vmatpush1.bf16.msra.mxu0 0
    %2525 = vmatprep.subr.bf16.mxu0 0
    %2526 = vmatpush1.bf16.msra.mxu0 0
    %2527 = vmatprep.subr.bf16.mxu0 0
    %2528 = vmatpush1.bf16.msra.mxu0 0
    %2529 = vmatprep.subr.bf16.mxu0 0
    %2530 = vmatpush1.bf16.msra.mxu0 0
    %2531 = vmatprep.subr.bf16.mxu0 0
    %2532 = vmatpush1.bf16.msra.mxu0 0
    %2533 = vmatprep.mubr.bf16.mxu0 0
    %2534 = vmatmul.mubr.bf16.gmra.mrb[0].mxu0 %v2499
    %v2535 = vpop.f32.mrb[0].mxu0
    %v2536 = vadd.f32 0.0, %v2535
    %v2537 = vpop.f32.mrb[0].mxu0
    %v2538 = vpop.f32.mrb[0].mxu0
    %v2539 = vpop.f32.mrb[0].mxu0
    %2540 = vdwg.mxu0
    %v2541 = vadd.f32 %v2479, %v2536
    %s2542 = scalar_lea.vmem %s3, 352
    %v2543 = vld [vmem:[%s2542] sm:$0xf]
    %v2544 = vld [vmem:[%s2542 + $0x4] sm:$0xf]
    %v2545 = vld [vmem:[%s2542 + $0x8] sm:$0xf]
    %v2546 = vld [vmem:[%s2542 + $0xc] sm:$0xf]
    %v2547 = vrot.slane %v1178, 6
    %v2552 = vunpack.c.l.b16 %v2543
    %v2553 = vunpack.c.l.b16 %v2544
    %v2554 = vunpack.c.l.b16 %v2545
    %v2555 = vunpack.c.l.b16 %v2546
    %v2556 = vpack.c.b16 %v2553, %v2552
    %v2557 = vpack.c.b16 %v2555, %v2554
    %v2561 = vsel %vm1203, %v2547, 0
    %2563 = vmatprep.subr.bf16.mxu0 0
    %2564 = vmatpush1.bf16.msra.mxu0 %v2556
    %2565 = vmatprep.subr.bf16.mxu0 0
    %2566 = vmatpush1.bf16.msra.mxu0 %v2557
    %2567 = vmatprep.subr.bf16.mxu0 0
    %2568 = vmatpush1.bf16.msra.mxu0 0
    %2569 = vmatprep.subr.bf16.mxu0 0
    %2570 = vmatpush1.bf16.msra.mxu0 0
    %2571 = vmatprep.subr.bf16.mxu0 0
    %2572 = vmatpush1.bf16.msra.mxu0 0
    %2573 = vmatprep.subr.bf16.mxu0 0
    %2574 = vmatpush1.bf16.msra.mxu0 0
    %2575 = vmatprep.subr.bf16.mxu0 0
    %2576 = vmatpush1.bf16.msra.mxu0 0
    %2577 = vmatprep.subr.bf16.mxu0 0
    %2578 = vmatpush1.bf16.msra.mxu0 0
    %2579 = vmatprep.subr.bf16.mxu0 0
    %2580 = vmatpush1.bf16.msra.mxu0 0
    %2581 = vmatprep.subr.bf16.mxu0 0
    %2582 = vmatpush1.bf16.msra.mxu0 0
    %2583 = vmatprep.subr.bf16.mxu0 0
    %2584 = vmatpush1.bf16.msra.mxu0 0
    %2585 = vmatprep.subr.bf16.mxu0 0
    %2586 = vmatpush1.bf16.msra.mxu0 0
    %2587 = vmatprep.subr.bf16.mxu0 0
    %2588 = vmatpush1.bf16.msra.mxu0 0
    %2589 = vmatprep.subr.bf16.mxu0 0
    %2590 = vmatpush1.bf16.msra.mxu0 0
    %2591 = vmatprep.subr.bf16.mxu0 0
    %2592 = vmatpush1.bf16.msra.mxu0 0
    %2593 = vmatprep.subr.bf16.mxu0 0
    %2594 = vmatpush1.bf16.msra.mxu0 0
    %2595 = vmatprep.mubr.bf16.mxu0 0
    %2596 = vmatmul.mubr.bf16.gmra.mrb[0].mxu0 %v2561
    %v2597 = vpop.f32.mrb[0].mxu0
    %v2598 = vadd.f32 0.0, %v2597
    %v2599 = vpop.f32.mrb[0].mxu0
    %v2600 = vpop.f32.mrb[0].mxu0
    %v2601 = vpop.f32.mrb[0].mxu0
    %2602 = vdwg.mxu0
    %v2603 = vadd.f32 %v2541, %v2598
    %s2604 = scalar_lea.vmem %s3, 368
    %v2605 = vld [vmem:[%s2604] sm:$0xf]
    %v2606 = vld [vmem:[%s2604 + $0x4] sm:$0xf]
    %v2607 = vld [vmem:[%s2604 + $0x8] sm:$0xf]
    %v2608 = vld [vmem:[%s2604 + $0xc] sm:$0xf]
    %v2609 = vrot.slane %v1178, 7
    %v2614 = vunpack.c.l.b16 %v2605
    %v2615 = vunpack.c.l.b16 %v2606
    %v2616 = vunpack.c.l.b16 %v2607
    %v2617 = vunpack.c.l.b16 %v2608
    %v2618 = vpack.c.b16 %v2615, %v2614
    %v2619 = vpack.c.b16 %v2617, %v2616
    %v2623 = vsel %vm1203, %v2609, 0
    %2625 = vmatprep.subr.bf16.mxu0 0
    %2626 = vmatpush1.bf16.msra.mxu0 %v2618
    %2627 = vmatprep.subr.bf16.mxu0 0
    %2628 = vmatpush1.bf16.msra.mxu0 %v2619
    %2629 = vmatprep.subr.bf16.mxu0 0
    %2630 = vmatpush1.bf16.msra.mxu0 0
    %2631 = vmatprep.subr.bf16.mxu0 0
    %2632 = vmatpush1.bf16.msra.mxu0 0
    %2633 = vmatprep.subr.bf16.mxu0 0
    %2634 = vmatpush1.bf16.msra.mxu0 0
    %2635 = vmatprep.subr.bf16.mxu0 0
    %2636 = vmatpush1.bf16.msra.mxu0 0
    %2637 = vmatprep.subr.bf16.mxu0 0
    %2638 = vmatpush1.bf16.msra.mxu0 0
    %2639 = vmatprep.subr.bf16.mxu0 0
    %2640 = vmatpush1.bf16.msra.mxu0 0
    %2641 = vmatprep.subr.bf16.mxu0 0
    %2642 = vmatpush1.bf16.msra.mxu0 0
    %2643 = vmatprep.subr.bf16.mxu0 0
    %2644 = vmatpush1.bf16.msra.mxu0 0
    %2645 = vmatprep.subr.bf16.mxu0 0
    %2646 = vmatpush1.bf16.msra.mxu0 0
    %2647 = vmatprep.subr.bf16.mxu0 0
    %2648 = vmatpush1.bf16.msra.mxu0 0
    %2649 = vmatprep.subr.bf16.mxu0 0
    %2650 = vmatpush1.bf16.msra.mxu0 0
    %2651 = vmatprep.subr.bf16.mxu0 0
    %2652 = vmatpush1.bf16.msra.mxu0 0
    %2653 = vmatprep.subr.bf16.mxu0 0
    %2654 = vmatpush1.bf16.msra.mxu0 0
    %2655 = vmatprep.subr.bf16.mxu0 0
    %2656 = vmatpush1.bf16.msra.mxu0 0
    %2657 = vmatprep.mubr.bf16.mxu0 0
    %2658 = vmatmul.mubr.bf16.gmra.mrb[0].mxu0 %v2623
    %v2659 = vpop.f32.mrb[0].mxu0
    %v2660 = vadd.f32 0.0, %v2659
    %v2661 = vpop.f32.mrb[0].mxu0
    %v2662 = vpop.f32.mrb[0].mxu0
    %v2663 = vpop.f32.mrb[0].mxu0
    %2664 = vdwg.mxu0
    %v2665 = vadd.f32 %v2603, %v2660
    %s2666 = scalar_lea.vmem %s3, 384
    %v2667 = vld [vmem:[%s2666] sm:$0xf]
    %v2668 = vld [vmem:[%s2666 + $0x4] sm:$0xf]
    %v2669 = vld [vmem:[%s2666 + $0x8] sm:$0xf]
    %v2670 = vld [vmem:[%s2666 + $0xc] sm:$0xf]
    %v2675 = vunpack.c.l.b16 %v2667
    %v2676 = vunpack.c.l.b16 %v2668
    %v2677 = vunpack.c.l.b16 %v2669
    %v2678 = vunpack.c.l.b16 %v2670
    %v2679 = vpack.c.b16 %v2676, %v2675
    %v2680 = vpack.c.b16 %v2678, %v2677
    %v2684 = vsel %vm1203, %v1179, 0
    %2686 = vmatprep.subr.bf16.mxu0 0
    %2687 = vmatpush1.bf16.msra.mxu0 %v2679
    %2688 = vmatprep.subr.bf16.mxu0 0
    %2689 = vmatpush1.bf16.msra.mxu0 %v2680
    %2690 = vmatprep.subr.bf16.mxu0 0
    %2691 = vmatpush1.bf16.msra.mxu0 0
    %2692 = vmatprep.subr.bf16.mxu0 0
    %2693 = vmatpush1.bf16.msra.mxu0 0
    %2694 = vmatprep.subr.bf16.mxu0 0
    %2695 = vmatpush1.bf16.msra.mxu0 0
    %2696 = vmatprep.subr.bf16.mxu0 0
    %2697 = vmatpush1.bf16.msra.mxu0 0
    %2698 = vmatprep.subr.bf16.mxu0 0
    %2699 = vmatpush1.bf16.msra.mxu0 0
    %2700 = vmatprep.subr.bf16.mxu0 0
    %2701 = vmatpush1.bf16.msra.mxu0 0
    %2702 = vmatprep.subr.bf16.mxu0 0
    %2703 = vmatpush1.bf16.msra.mxu0 0
    %2704 = vmatprep.subr.bf16.mxu0 0
    %2705 = vmatpush1.bf16.msra.mxu0 0
    %2706 = vmatprep.subr.bf16.mxu0 0
    %2707 = vmatpush1.bf16.msra.mxu0 0
    %2708 = vmatprep.subr.bf16.mxu0 0
    %2709 = vmatpush1.bf16.msra.mxu0 0
    %2710 = vmatprep.subr.bf16.mxu0 0
    %2711 = vmatpush1.bf16.msra.mxu0 0
    %2712 = vmatprep.subr.bf16.mxu0 0
    %2713 = vmatpush1.bf16.msra.mxu0 0
    %2714 = vmatprep.subr.bf16.mxu0 0
    %2715 = vmatpush1.bf16.msra.mxu0 0
    %2716 = vmatprep.subr.bf16.mxu0 0
    %2717 = vmatpush1.bf16.msra.mxu0 0
    %2718 = vmatprep.mubr.bf16.mxu0 0
    %2719 = vmatmul.mubr.bf16.gmra.mrb[0].mxu0 %v2684
    %v2720 = vpop.f32.mrb[0].mxu0
    %v2721 = vadd.f32 0.0, %v2720
    %v2722 = vpop.f32.mrb[0].mxu0
    %v2723 = vpop.f32.mrb[0].mxu0
    %v2724 = vpop.f32.mrb[0].mxu0
    %2725 = vdwg.mxu0
    %v2726 = vadd.f32 %v2665, %v2721
    %v2727 = vld [vmem:[%s4] sm:$0x1]
    %v2729 = vlaneseq
    %v2730 = vshrl.u32 %v2729, 7
    %v2731 = vsub.s32 0, %v2730
    %v2732 = vrot.slane %v2727, %v2731
    %v2734 = vadd.f32 %v2726, %v2732
    %v2735 = vmax.f32 %v2734, 0.0
    %v2736 = vpack.c.bf16 %v2735, %v2735
    %v2737 = vld [vmem:[%s5] sm:$0xf]
    %v2738 = vld [vmem:[%s5 + $0x4] sm:$0xf]
    %v2739 = vld [vmem:[%s5 + $0x8] sm:$0xf]
    %v2740 = vld [vmem:[%s5 + $0xc] sm:$0xf]
    %v2741 = vld [vmem:[%s5 + $0x10] sm:$0xf]
    %v2742 = vld [vmem:[%s5 + $0x14] sm:$0xf]
    %v2743 = vld [vmem:[%s5 + $0x18] sm:$0xf]
    %v2744 = vld [vmem:[%s5 + $0x1c] sm:$0xf]
    %v2745 = vld [vmem:[%s6] sm:$0x1]
    %v2747 = vlaneseq
    %v2748 = vshrl.u32 %v2747, 7
    %v2749 = vsub.s32 0, %v2748
    %v2750 = vrot.slane %v2745, %v2749
    %v2760 = vunpack.c.l.b16 %v2737
    %v2761 = vunpack.c.l.b16 %v2738
    %v2762 = vunpack.c.l.b16 %v2739
    %v2763 = vunpack.c.l.b16 %v2740
    %v2764 = vunpack.c.l.b16 %v2741
    %v2765 = vunpack.c.l.b16 %v2742
    %v2766 = vunpack.c.l.b16 %v2743
    %v2767 = vunpack.c.l.b16 %v2744
    %v2768 = vpack.c.b16 %v2761, %v2760
    %v2769 = vpack.c.b16 %v2763, %v2762
    %v2770 = vpack.c.b16 %v2765, %v2764
    %v2771 = vpack.c.b16 %v2767, %v2766
    %vm2776 = vcmask 523264
    %v2778 = vsel %vm2776, %v2736, 0
    %2780 = vmatprep.subr.bf16.mxu0 0
    %2781 = vmatpush1.bf16.msra.mxu0 %v2768
    %2782 = vmatprep.subr.bf16.mxu0 0
    %2783 = vmatpush1.bf16.msra.mxu0 %v2769
    %2784 = vmatprep.subr.bf16.mxu0 0
    %2785 = vmatpush1.bf16.msra.mxu0 %v2770
    %2786 = vmatprep.subr.bf16.mxu0 0
    %2787 = vmatpush1.bf16.msra.mxu0 %v2771
    %2788 = vmatprep.subr.bf16.mxu0 0
    %2789 = vmatpush1.bf16.msra.mxu0 0
    %2790 = vmatprep.subr.bf16.mxu0 0
    %2791 = vmatpush1.bf16.msra.mxu0 0
    %2792 = vmatprep.subr.bf16.mxu0 0
    %2793 = vmatpush1.bf16.msra.mxu0 0
    %2794 = vmatprep.subr.bf16.mxu0 0
    %2795 = vmatpush1.bf16.msra.mxu0 0
    %2796 = vmatprep.subr.bf16.mxu0 0
    %2797 = vmatpush1.bf16.msra.mxu0 0
    %2798 = vmatprep.subr.bf16.mxu0 0
    %2799 = vmatpush1.bf16.msra.mxu0 0
    %2800 = vmatprep.subr.bf16.mxu0 0
    %2801 = vmatpush1.bf16.msra.mxu0 0
    %2802 = vmatprep.subr.bf16.mxu0 0
    %2803 = vmatpush1.bf16.msra.mxu0 0
    %2804 = vmatprep.subr.bf16.mxu0 0
    %2805 = vmatpush1.bf16.msra.mxu0 0
    %2806 = vmatprep.subr.bf16.mxu0 0
    %2807 = vmatpush1.bf16.msra.mxu0 0
    %2808 = vmatprep.subr.bf16.mxu0 0
    %2809 = vmatpush1.bf16.msra.mxu0 0
    %2810 = vmatprep.subr.bf16.mxu0 0
    %2811 = vmatpush1.bf16.msra.mxu0 0
    %2812 = vmatprep.mubr.bf16.mxu0 0
    %2813 = vmatmul.mubr.bf16.gmra.mrb[0].mxu0 %v2778
    %v2814 = vpop.f32.mrb[0].mxu0
    %v2815 = vadd.f32 %v2750, %v2814
    %v2816 = vpop.f32.mrb[0].mxu0
    %v2817 = vpop.f32.mrb[0].mxu0
    %v2818 = vpop.f32.mrb[0].mxu0
    %2819 = vdwg.mxu0
    %v2820 = vmax.f32 %v2815, 0.0
    %v2821 = vpack.c.bf16 %v2820, %v2820
    %v2822 = vld [vmem:[%s7] sm:$0xf]
    %v2823 = vld [vmem:[%s7 + $0x4] sm:$0xf]
    %v2824 = vld [vmem:[%s7 + $0x8] sm:$0xf]
    %v2825 = vld [vmem:[%s7 + $0xc] sm:$0xf]
    %v2826 = vld [vmem:[%s7 + $0x10] sm:$0xf]
    %v2827 = vld [vmem:[%s7 + $0x14] sm:$0xf]
    %v2828 = vld [vmem:[%s7 + $0x18] sm:$0xf]
    %v2829 = vld [vmem:[%s7 + $0x1c] sm:$0xf]
    %v2830 = vld [vmem:[%s7 + $0x20] sm:$0xf]
    %v2831 = vld [vmem:[%s7 + $0x24] sm:$0xf]
    %v2832 = vld [vmem:[%s7 + $0x28] sm:$0xf]
    %v2833 = vld [vmem:[%s7 + $0x2c] sm:$0xf]
    %v2834 = vld [vmem:[%s7 + $0x30] sm:$0xf]
    %v2835 = vld [vmem:[%s7 + $0x34] sm:$0xf]
    %v2836 = vld [vmem:[%s7 + $0x38] sm:$0xf]
    %v2837 = vld [vmem:[%s7 + $0x3c] sm:$0xf]
    %v2838 = vld [vmem:[%s8] sm:$0x1]
    %v2840 = vlaneseq
    %v2841 = vshrl.u32 %v2840, 7
    %v2842 = vsub.s32 0, %v2841
    %v2843 = vrot.slane %v2838, %v2842
    %v2861 = vunpack.c.l.b16 %v2822
    %v2862 = vunpack.c.l.b16 %v2823
    %v2863 = vunpack.c.l.b16 %v2824
    %v2864 = vunpack.c.l.b16 %v2825
    %v2865 = vunpack.c.l.b16 %v2826
    %v2866 = vunpack.c.l.b16 %v2827
    %v2867 = vunpack.c.l.b16 %v2828
    %v2868 = vunpack.c.l.b16 %v2829
    %v2869 = vunpack.c.l.b16 %v2830
    %v2870 = vunpack.c.l.b16 %v2831
    %v2871 = vunpack.c.l.b16 %v2832
    %v2872 = vunpack.c.l.b16 %v2833
    %v2873 = vunpack.c.l.b16 %v2834
    %v2874 = vunpack.c.l.b16 %v2835
    %v2875 = vunpack.c.l.b16 %v2836
    %v2876 = vunpack.c.l.b16 %v2837
    %v2877 = vpack.c.b16 %v2862, %v2861
    %v2878 = vpack.c.b16 %v2864, %v2863
    %v2879 = vpack.c.b16 %v2866, %v2865
    %v2880 = vpack.c.b16 %v2868, %v2867
    %v2881 = vpack.c.b16 %v2870, %v2869
    %v2882 = vpack.c.b16 %v2872, %v2871
    %v2883 = vpack.c.b16 %v2874, %v2873
    %v2884 = vpack.c.b16 %v2876, %v2875
    %2893 = vmatprep.subr.bf16.mxu0 0
    %2894 = vmatpush1.bf16.msra.mxu0 %v2877
    %2895 = vmatprep.subr.bf16.mxu0 0
    %2896 = vmatpush1.bf16.msra.mxu0 %v2878
    %2897 = vmatprep.subr.bf16.mxu0 0
    %2898 = vmatpush1.bf16.msra.mxu0 %v2879
    %2899 = vmatprep.subr.bf16.mxu0 0
    %2900 = vmatpush1.bf16.msra.mxu0 %v2880
    %2901 = vmatprep.subr.bf16.mxu0 0
    %2902 = vmatpush1.bf16.msra.mxu0 %v2881
    %2903 = vmatprep.subr.bf16.mxu0 0
    %2904 = vmatpush1.bf16.msra.mxu0 %v2882
    %2905 = vmatprep.subr.bf16.mxu0 0
    %2906 = vmatpush1.bf16.msra.mxu0 %v2883
    %2907 = vmatprep.subr.bf16.mxu0 0
    %2908 = vmatpush1.bf16.msra.mxu0 %v2884
    %2909 = vmatprep.subr.bf16.mxu0 0
    %2910 = vmatpush1.bf16.msra.mxu0 0
    %2911 = vmatprep.subr.bf16.mxu0 0
    %2912 = vmatpush1.bf16.msra.mxu0 0
    %2913 = vmatprep.subr.bf16.mxu0 0
    %2914 = vmatpush1.bf16.msra.mxu0 0
    %2915 = vmatprep.subr.bf16.mxu0 0
    %2916 = vmatpush1.bf16.msra.mxu0 0
    %2917 = vmatprep.subr.bf16.mxu0 0
    %2918 = vmatpush1.bf16.msra.mxu0 0
    %2919 = vmatprep.subr.bf16.mxu0 0
    %2920 = vmatpush1.bf16.msra.mxu0 0
    %2921 = vmatprep.subr.bf16.mxu0 0
    %2922 = vmatpush1.bf16.msra.mxu0 0
    %2923 = vmatprep.subr.bf16.mxu0 0
    %2924 = vmatpush1.bf16.msra.mxu0 0
    %2925 = vmatprep.mubr.bf16.mxu0 0
    %2926 = vmatmul.mubr.bf16.gmra.mrb[0].mxu0 %v2821
    %v2927 = vpop.f32.mrb[0].mxu0
    %v2928 = vadd.f32 %v2843, %v2927
    %v2929 = vpop.f32.mrb[0].mxu0
    %v2930 = vpop.f32.mrb[0].mxu0
    %v2931 = vpop.f32.mrb[0].mxu0
    %2932 = vdwg.mxu0
    %2933 = vst [vmem:[#allocation2] sm:$0x3] %v2928
    // Predicated region
    $region38: #{net_forward.3} parent=1 // pred_check
      _
    $region39: #{net_forward.3} parent=1 // pred_check_branch
      %2935 = sbr.rel (0) target = $region41
    $region40: #{net_forward.3} parent=1 // pred_region
      %s2937 = ssub.s32 32, 32
      %2938 = vsyncadd [#allocation3], %s2937
      %s2940 = sshll.u32 [#allocation2], 4
      %s2941 = int_to_ptr.vmem [resolvable:$true] %s2940
      %2943 = dma.vmem_to_hbm [thread:$0]  %s2941, 32, %s9, [#allocation3]
    $region41: #{net_forward.3} parent=1 // pred_fallthru
      _
    // Predicated region
    $region42: #{net_forward.3} parent=1 // pred_check
      _
    $region43: #{net_forward.3} parent=1 // pred_check_branch
      %2945 = sbr.rel (0) target = $region45
    $region44: #{net_forward.3} parent=1 // pred_region
      %2946 = dma.done [#allocation3], 32
    $region45: #{net_forward.3} parent=1 // pred_fallthru
      _
    %2947 = vsyncpa [#allocation3], 1

</llo_original>
